<compile_context>
chip_gen: v7x
topology: tpu7x:2x2x1
jax: 0.10.0
libtpu: 0.0.40
codegen_flags: <defaults>
</compile_context>

<pallas_src>
import functools

import jax
import jax.numpy as jnp
from jax.experimental import pallas as pl
from jax.experimental.pallas import tpu as pltpu

# ----------------------------- small llama config -----------------------------
N_HEADS = 2          # config.num_attention_heads
HEAD = 128           # head_size (kept at 128 so head tiles are lane-aligned)
HIDDEN = N_HEADS * HEAD              # config.hidden_size = 256
INTER = 512          # config.intermediate_size
EPS = 1e-6           # config.rms_norm_eps
SEQ = 8              # total prefill tokens (single sequence)
NUM_SLOTS = 16       # flat kv-cache slots; cache rows are flat [n_heads*head]
DTYPE = jnp.float32


# -------------------------- fused layer kernel --------------------------------
def _layer_kernel(*refs, has_residual, n_heads, head_dim, scale, eps):
    if has_residual:
        (x_ref, res_in_ref, cos_ref, sin_ref, ln1_ref, wqkv_ref, wo_ref,
         ln2_ref, wgu_ref, wdown_ref, slots_ref, kc_in_ref, vc_in_ref,
         mlp_ref, res_out_ref, kc_ref, vc_ref,
         k_sc, v_sc, sem) = refs
    else:
        (x_ref, cos_ref, sin_ref, ln1_ref, wqkv_ref, wo_ref,
         ln2_ref, wgu_ref, wdown_ref, slots_ref, kc_in_ref, vc_in_ref,
         mlp_ref, res_out_ref, kc_ref, vc_ref,
         k_sc, v_sc, sem) = refs
        res_in_ref = None
    del kc_in_ref, vc_in_ref                     # aliased to kc_ref / vc_ref

    f32, bf16 = jnp.float32, jnp.bfloat16

    x = x_ref[...].astype(f32)
    if res_in_ref is not None:                   # no zeros buffer when residual is None
        x = x + res_in_ref[...].astype(f32)

    # ---- input RMSNorm (f32 VPU) ----
    var = jnp.mean(x * x, axis=-1, keepdims=True)
    normed = x * jax.lax.rsqrt(var + eps) * ln1_ref[...].astype(f32)

    # ---- fused QKV projection: bf16 MXU operands, f32 accumulation ----
    qkv = jnp.dot(normed.astype(bf16), wqkv_ref[...], preferred_element_type=f32)

    tokens, hid = x.shape
    half = head_dim // 2

    # ---- lane-dense rotate-half RoPE ----
    # cos_ref/sin_ref are [T, hid]: per-head tiled, both halves; sin has the
    # rotate-half sign (-sin | +sin) folded in, so
    #   rope(x) = x*cos + rolled(x)*sin  with  rolled(x)[j<half]=x[j+half],
    #                                          rolled(x)[j>=half]=x[j-half].
    cos = cos_ref[...]
    sin = sin_ref[...]
    lane = jax.lax.broadcasted_iota(jnp.int32, (tokens, hid), 1)
    first_half = (lane % head_dim) < half

    def rope(t):                                 # 2 XLU rolls + VPU mul/add
        rolled = jnp.where(first_half,
                           pltpu.roll(t, hid - half, 1),
                           pltpu.roll(t, half, 1))
        return t * cos + rolled * sin

    q = rope(qkv[:, :hid])                       # [T, hid], f32
    k = rope(qkv[:, hid:2 * hid])                # rotated keys (also cached)
    v = qkv[:, 2 * hid:]                         # raw values   (also cached)

    # stage cache rows in VMEM scratch for the DMA scatter below
    k_sc[...] = k.astype(k_sc.dtype)
    v_sc[...] = v.astype(v_sc.dtype)

    # ---- causal attention, all heads batched in one einsum ----
    # TODO(synk): at real T this becomes online-softmax flash over KV tiles
    # with a 'parallel' head / q-tile grid axis.
    q3 = jnp.stack([q[:, h * head_dim:(h + 1) * head_dim] for h in range(n_heads)], axis=0)
    k3 = jnp.stack([k[:, h * head_dim:(h + 1) * head_dim] for h in range(n_heads)], axis=0)
    v3 = jnp.stack([v[:, h * head_dim:(h + 1) * head_dim] for h in range(n_heads)], axis=0)

    s = jnp.einsum('htd,hsd->hts', q3.astype(bf16), k3.astype(bf16),
                   preferred_element_type=f32) * scale          # [NH, T, T] f32
    row = jax.lax.broadcasted_iota(jnp.int32, (tokens, tokens), 0)
    col = jax.lax.broadcasted_iota(jnp.int32, (tokens, tokens), 1)
    s = jnp.where((col <= row)[None], s, -1e30)                 # mask kept in f32

    m = jnp.max(s, axis=-1, keepdims=True)
    p = jnp.exp(s - m)
    l = jnp.sum(p, axis=-1, keepdims=True)
    o3 = jnp.einsum('hts,hsd->htd', p.astype(bf16), v3.astype(bf16),
                    preferred_element_type=f32)
    o3 = o3 * pl.reciprocal(l, approx=True)                     # EUP reciprocal

    attn = jnp.concatenate([o3[h] for h in range(n_heads)], axis=-1)   # [T, hid]

    # ---- output projection + residual ----
    attn_out = jnp.dot(attn.astype(bf16), wo_ref[...], preferred_element_type=f32)
    attn_res = attn_out + x

    # ---- post-attention RMSNorm ----
    var2 = jnp.mean(attn_res * attn_res, axis=-1, keepdims=True)
    normed2 = attn_res * jax.lax.rsqrt(var2 + eps) * ln2_ref[...].astype(f32)

    # ---- SwiGLU MLP (fused gate|up matmul) ----
    gu = jnp.dot(normed2.astype(bf16), wgu_ref[...], preferred_element_type=f32)
    inter = gu.shape[-1] // 2
    g, u = gu[:, :inter], gu[:, inter:]
    act = g * jax.nn.sigmoid(g) * u                             # SiLU(gate)*up, f32
    mlp = jnp.dot(act.astype(bf16), wdown_ref[...], preferred_element_type=f32)

    # lane-dense stores (hid is a multiple of 128)
    mlp_ref[...] = mlp.astype(mlp_ref.dtype)
    res_out_ref[...] = attn_res.astype(res_out_ref.dtype)

    # ---- in-place KV-cache scatter (vllm reshape_and_cache equivalent) ----
    # Start all 2*T row DMAs first, wait once at the end. Slots are unique for
    # prefill, so overlapping writes cannot race.
    copies = []
    for t in range(tokens):                       # static unroll; slot is runtime
        slot = slots_ref[t]
        ck = pltpu.make_async_copy(k_sc.at[t], kc_ref.at[slot], sem.at[0, t])
        cv = pltpu.make_async_copy(v_sc.at[t], vc_ref.at[slot], sem.at[1, t])
        ck.start()
        cv.start()
        copies += [ck, cv]
    for c in copies:
        c.wait()


# ------------------------------- layer forward ---------------------------------
def flash_llama_layer(hidden_states, residual, cos, sin, cu_seqlen_prefill,
                      kv_cache, block_tables, slots, input_lengths, max_s, params):
    """Prefill-path forward of one FlashLlamaLayer -> (mlp_out, attn_res, kv_cache)."""
    if cu_seqlen_prefill is None:
        # TODO(synk): decode path (single_query_cached_kv_attention over
        # block_tables / input_lengths) not implemented.
        raise NotImplementedError("decode path not implemented")
    # TODO(synk): multi-sequence varlen prefill via cu_seqlen_prefill is not
    # handled; a single causal sequence is assumed.
    del block_tables, input_lengths, max_s

    T, H = hidden_states.shape
    has_residual = residual is not None
    key_cache, value_cache = kv_cache

    # RoPE tables -> lane-dense [T, H]: both halves of cos, sign-folded sin,
    # tiled per head (layout prep only; done once per call outside the kernel).
    cos_flat = jnp.tile(jnp.concatenate([cos, cos], axis=-1), (1, N_HEADS)).astype(jnp.float32)
    sin_flat = jnp.tile(jnp.concatenate([-sin, sin], axis=-1), (1, N_HEADS)).astype(jnp.float32)

    def full_block(a):
        shp = a.shape
        return pl.BlockSpec(shp, lambda *_: (0,) * len(shp))

    ln1 = params["input_layernorm"].reshape(1, H)
    ln2 = params["post_attention_layernorm"].reshape(1, H)

    inputs = [hidden_states]
    in_specs = [full_block(hidden_states)]
    if has_residual:
        inputs.append(residual)
        in_specs.append(full_block(residual))
    vmem_inputs = [cos_flat, sin_flat, ln1, params["wqkv"], params["wo"],
                   ln2, params["w_gate_up"], params["w_down"]]
    inputs += vmem_inputs
    in_specs += [full_block(a) for a in vmem_inputs]
    inputs += [slots, key_cache, value_cache]
    in_specs += [pl.BlockSpec(memory_space=pltpu.MemorySpace.SMEM),   # slots
                 pl.BlockSpec(memory_space=pl.ANY),                   # key_cache   (aliased)
                 pl.BlockSpec(memory_space=pl.ANY)]                   # value_cache (aliased)
    kc_idx, vc_idx = len(inputs) - 2, len(inputs) - 1

    out_shape = (jax.ShapeDtypeStruct((T, H), hidden_states.dtype),   # mlp_out
                 jax.ShapeDtypeStruct((T, H), hidden_states.dtype),   # attn residual
                 jax.ShapeDtypeStruct(key_cache.shape, key_cache.dtype),
                 jax.ShapeDtypeStruct(value_cache.shape, value_cache.dtype))
    out_specs = (pl.BlockSpec((T, H), lambda *_: (0, 0)),
                 pl.BlockSpec((T, H), lambda *_: (0, 0)),
                 pl.BlockSpec(memory_space=pl.ANY),
                 pl.BlockSpec(memory_space=pl.ANY))

    mlp_out, attn_res, kc, vc = pl.pallas_call(
        functools.partial(_layer_kernel, has_residual=has_residual,
                          n_heads=N_HEADS, head_dim=HEAD,
                          scale=HEAD ** -0.5, eps=EPS),
        out_shape=out_shape,
        grid=(1,),
        in_specs=in_specs,
        out_specs=out_specs,
        scratch_shapes=[pltpu.VMEM((T, H), key_cache.dtype),      # rotated K rows
                        pltpu.VMEM((T, H), value_cache.dtype),    # raw V rows
                        pltpu.SemaphoreType.DMA((2, T))],
        input_output_aliases={kc_idx: 2, vc_idx: 3},
        compiler_params=pltpu.CompilerParams(
            dimension_semantics=("arbitrary",),
            has_side_effects=True),
    )(*inputs)

    return mlp_out, attn_res, (kc, vc)


# --------------------------- pure-JAX reference ---------------------------------
def _ref_layer(x, residual, cos, sin, params):
    f32, bf16 = jnp.float32, jnp.bfloat16

    def mm(a, w):                                # bf16 MXU operands, f32 accumulation
        return jnp.dot(a.astype(bf16), w.astype(bf16), preferred_element_type=f32)

    def rms(h, r, w):
        h = h + (r if r is not None else 0.0)
        var = jnp.mean(h * h, -1, keepdims=True)
        return w * h * jax.lax.rsqrt(var + EPS), h

    normed, res = rms(x, residual, params["input_layernorm"])
    T = x.shape[0]
    qkv = mm(normed, params["wqkv"]).reshape(T, 3, N_HEADS, HEAD)

    def rope(t):
        half = HEAD // 2
        t1, t2 = t[..., :half], t[..., half:]
        c, s = cos[:, None, :], sin[:, None, :]
        return jnp.concatenate([t1 * c - t2 * s, t2 * c + t1 * s], -1)

    q, k, v = rope(qkv[:, 0]), rope(qkv[:, 1]), qkv[:, 2]
    s_ = jnp.einsum("qhd,khd->hqk", q.astype(bf16), k.astype(bf16),
                    preferred_element_type=f32) * (HEAD ** -0.5)
    mask = jnp.tril(jnp.ones((T, T), bool))
    s_ = jnp.where(mask[None], s_, -1e30)
    p = jax.nn.softmax(s_, axis=-1)
    o = jnp.einsum("hqk,khd->qhd", p.astype(bf16), v.astype(bf16),
                   preferred_element_type=f32).reshape(T, -1)
    attn_out = mm(o, params["wo"])
    normed2, attn_res = rms(attn_out, res, params["post_attention_layernorm"])
    gu = mm(normed2, params["w_gate_up"])
    g, u = gu[:, :INTER], gu[:, INTER:]
    return mm(jax.nn.silu(g) * u, params["w_down"]), attn_res, k, v


# ------------------------------------ main ---------------------------------------
if __name__ == "__main__":
    key = jax.random.PRNGKey(0)
    ks = jax.random.split(key, 12)

    params = {
        "input_layernorm": 1.0 + 0.1 * jax.random.normal(ks[0], (HIDDEN,), jnp.float32),
        "post_attention_layernorm": 1.0 + 0.1 * jax.random.normal(ks[1], (HIDDEN,), jnp.float32),
        # matmul weights stored [in, out] (torch Linear weight.T), bf16 MXU operands
        "wqkv": (0.05 * jax.random.normal(ks[2], (HIDDEN, 3 * HIDDEN), jnp.float32)).astype(jnp.bfloat16),
        "wo": (0.05 * jax.random.normal(ks[3], (HIDDEN, HIDDEN), jnp.float32)).astype(jnp.bfloat16),
        "w_gate_up": (0.05 * jax.random.normal(ks[4], (HIDDEN, 2 * INTER), jnp.float32)).astype(jnp.bfloat16),
        "w_down": (0.05 * jax.random.normal(ks[5], (INTER, HIDDEN), jnp.float32)).astype(jnp.bfloat16),
    }

    hidden_states = jax.random.normal(ks[6], (SEQ, HIDDEN), DTYPE)

    # rotary cos/sin for positions 0..SEQ-1 (module-facing shape [T, HEAD//2])
    inv_freq = 1.0 / (10000.0 ** (jnp.arange(0, HEAD, 2, dtype=jnp.float32) / HEAD))
    pos = jnp.arange(SEQ, dtype=jnp.float32)
    freqs = pos[:, None] * inv_freq[None, :]
    cos, sin = jnp.cos(freqs), jnp.sin(freqs)

    # flat kv caches: row s == (key/value of all heads for slot s), [n_heads*head]
    key_cache = 0.1 * jax.random.normal(ks[7], (NUM_SLOTS, HIDDEN), DTYPE)
    value_cache = 0.1 * jax.random.normal(ks[8], (NUM_SLOTS, HIDDEN), DTYPE)
    slots = jnp.arange(SEQ, dtype=jnp.int32) + 4          # non-identity slot mapping
    cu_seqlen_prefill = jnp.array([0, SEQ], dtype=jnp.int32)
    block_tables = jnp.zeros((1, 1), dtype=jnp.int32)
    input_lengths = jnp.array([SEQ], dtype=jnp.int32)
    max_s = SEQ

    # jit + donated cache buffers -> the Pallas aliasing is a true in-place update.
    layer = jax.jit(flash_llama_layer, donate_argnums=(5,))

    mlp_out, attn_res, (kc, vc) = layer(
        hidden_states, None, cos, sin, cu_seqlen_prefill,
        (key_cache, value_cache), block_tables, slots, input_lengths, max_s, params)
    jax.block_until_ready((mlp_out, attn_res, kc, vc))

    ref_mlp, ref_res, ref_k, ref_v = _ref_layer(hidden_states, None, cos, sin, params)
    assert jnp.allclose(mlp_out, ref_mlp, atol=1e-2, rtol=1e-2)
    assert jnp.allclose(attn_res, ref_res, atol=1e-2, rtol=1e-2)

    # KV cache: scattered rows hold (rotated K, raw V); untouched rows preserved.
    kc_init = 0.1 * jax.random.normal(ks[7], (NUM_SLOTS, HIDDEN), DTYPE)
    vc_init = 0.1 * jax.random.normal(ks[8], (NUM_SLOTS, HIDDEN), DTYPE)
    assert jnp.allclose(kc, kc_init.at[slots].set(ref_k.reshape(SEQ, HIDDEN)), atol=2e-3, rtol=2e-3)
    assert jnp.allclose(vc, vc_init.at[slots].set(ref_v.reshape(SEQ, HIDDEN)), atol=2e-3, rtol=2e-3)

    # Second call exercises the residual-present branch (layer 2 of a stack).
    slots2 = jnp.arange(SEQ, dtype=jnp.int32)
    mlp_out2, attn_res2, (kc2, vc2) = layer(
        ref_mlp, ref_res, cos, sin, cu_seqlen_prefill,
        (kc, vc), block_tables, slots2, input_lengths, max_s, params)
    jax.block_until_ready((mlp_out2, attn_res2, kc2, vc2))
    ref_mlp2, ref_res2, _, _ = _ref_layer(ref_mlp, ref_res, cos, sin, params)
    assert jnp.allclose(mlp_out2, ref_mlp2, atol=1e-2, rtol=1e-2)
    assert jnp.allclose(attn_res2, ref_res2, atol=1e-2, rtol=1e-2)

    print("KERNEL_OK")
</pallas_src>

<mosaic_0001>
module attributes {stable_mosaic.version = 11 : i64} {
  func.func @_layer_kernel(%arg0: i32, %arg1: memref<8x256xf32, #tpu.memory_space<vmem>>, %arg2: memref<8x256xf32, #tpu.memory_space<vmem>>, %arg3: memref<8x256xf32, #tpu.memory_space<vmem>>, %arg4: memref<1x256xf32, #tpu.memory_space<vmem>>, %arg5: memref<256x768xbf16, #tpu.memory_space<vmem>>, %arg6: memref<256x256xbf16, #tpu.memory_space<vmem>>, %arg7: memref<1x256xf32, #tpu.memory_space<vmem>>, %arg8: memref<256x1024xbf16, #tpu.memory_space<vmem>>, %arg9: memref<512x256xbf16, #tpu.memory_space<vmem>>, %arg10: memref<8xi32, #tpu.memory_space<smem>>, %arg11: memref<16x256xf32, #tpu.memory_space<any>>, %arg12: memref<16x256xf32, #tpu.memory_space<any>>, %arg13: memref<8x256xf32, #tpu.memory_space<vmem>>, %arg14: memref<8x256xf32, #tpu.memory_space<vmem>>, %arg15: memref<16x256xf32, #tpu.memory_space<any>>, %arg16: memref<16x256xf32, #tpu.memory_space<any>>, %arg17: memref<8x256xf32, #tpu.memory_space<vmem>>, %arg18: memref<8x256xf32, #tpu.memory_space<vmem>>, %arg19: memref<2x8x!tpu.dma_semaphore, #tpu.memory_space<semaphore_mem>>) attributes {dimension_semantics = [#tpu.dimension_semantics<arbitrary>], iteration_bounds = array<i64: 1>, scalar_prefetch = 0 : i64, scratch_operands = 3 : i64, tpu.core_type = #tpu.core_type<tc>, window_params = [{pipeline_mode = #tpu.pipeline_mode<synchronous>, transform_indices = @transform_0, window_bounds = array<i64: 8, 256>}, {pipeline_mode = #tpu.pipeline_mode<synchronous>, transform_indices = @transform_1, window_bounds = array<i64: 8, 256>}, {pipeline_mode = #tpu.pipeline_mode<synchronous>, transform_indices = @transform_2, window_bounds = array<i64: 8, 256>}, {pipeline_mode = #tpu.pipeline_mode<synchronous>, transform_indices = @transform_3, window_bounds = array<i64: 1, 256>}, {pipeline_mode = #tpu.pipeline_mode<synchronous>, transform_indices = @transform_4, window_bounds = array<i64: 256, 768>}, {pipeline_mode = #tpu.pipeline_mode<synchronous>, transform_indices = @transform_5, window_bounds = array<i64: 256, 256>}, {pipeline_mode = #tpu.pipeline_mode<synchronous>, transform_indices = @transform_6, window_bounds = array<i64: 1, 256>}, {pipeline_mode = #tpu.pipeline_mode<synchronous>, transform_indices = @transform_7, window_bounds = array<i64: 256, 1024>}, {pipeline_mode = #tpu.pipeline_mode<synchronous>, transform_indices = @transform_8, window_bounds = array<i64: 512, 256>}, {transform_indices = @transform_9, window_bounds = array<i64: 8>}, {}, {}, {pipeline_mode = #tpu.pipeline_mode<synchronous>, transform_indices = @transform_12, window_bounds = array<i64: 8, 256>}, {pipeline_mode = #tpu.pipeline_mode<synchronous>, transform_indices = @transform_13, window_bounds = array<i64: 8, 256>}, {}, {}]} {
    %c0 = arith.constant 0 : index
    %c0_0 = arith.constant 0 : index
    %0 = vector.load %arg1[%c0, %c0_0] : memref<8x256xf32, #tpu.memory_space<vmem>>, vector<8x256xf32>
    %1 = arith.mulf %0, %0 : vector<8x256xf32>
    %cst = arith.constant dense<0.000000e+00> : vector<8xf32>
    %2 = vector.multi_reduction <add>, %1, %cst [1] : vector<8x256xf32> to vector<8xf32>
    %3 = vector.shape_cast %2 : vector<8xf32> to vector<8x1xf32>
    %cst_1 = arith.constant 2.560000e+02 : f32
    %4 = vector.broadcast %cst_1 : f32 to vector<8x1xf32>
    %5 = arith.divf %3, %4 : vector<8x1xf32>
    %cst_2 = arith.constant 9.99999997E-7 : f32
    %6 = vector.broadcast %cst_2 : f32 to vector<8x1xf32>
    %7 = arith.addf %5, %6 : vector<8x1xf32>
    %8 = math.rsqrt %7 : vector<8x1xf32>
    %9 = vector.broadcast %8 : vector<8x1xf32> to vector<8x256xf32>
    %10 = arith.mulf %0, %9 : vector<8x256xf32>
    %c0_3 = arith.constant 0 : index
    %c0_4 = arith.constant 0 : index
    %11 = vector.load %arg4[%c0_3, %c0_4] : memref<1x256xf32, #tpu.memory_space<vmem>>, vector<1x256xf32>
    %12 = vector.broadcast %11 : vector<1x256xf32> to vector<8x256xf32>
    %13 = arith.mulf %10, %12 : vector<8x256xf32>
    %14 = arith.truncf %13 : vector<8x256xf32> to vector<8x256xbf16>
    %c0_5 = arith.constant 0 : index
    %c0_6 = arith.constant 0 : index
    %15 = vector.load %arg5[%c0_5, %c0_6] : memref<256x768xbf16, #tpu.memory_space<vmem>>, vector<256x768xbf16>
    %cst_7 = arith.constant dense<0.000000e+00> : vector<8x768xf32>
    %16 = tpu.matmul %14, %15, %cst_7 {dimension_numbers = #tpu.dot_dimension_numbers<[1], [0], [0], [1], [0, 0, 1, 1], [], []>} : vector<8x256xbf16>, vector<256x768xbf16>, vector<8x768xf32> -> vector<8x768xf32>
    %c0_8 = arith.constant 0 : index
    %c0_9 = arith.constant 0 : index
    %17 = vector.load %arg2[%c0_8, %c0_9] : memref<8x256xf32, #tpu.memory_space<vmem>>, vector<8x256xf32>
    %c0_10 = arith.constant 0 : index
    %c0_11 = arith.constant 0 : index
    %18 = vector.load %arg3[%c0_10, %c0_11] : memref<8x256xf32, #tpu.memory_space<vmem>>, vector<8x256xf32>
    %19 = tpu.iota {dimensions = array<i32: 1>} : vector<8x256xi32>
    %c128_i32 = arith.constant 128 : i32
    %c0_i32 = arith.constant 0 : i32
    %20 = arith.cmpi eq, %c128_i32, %c0_i32 : i32
    %c1_i32 = arith.constant 1 : i32
    %21 = arith.select %20, %c1_i32, %c128_i32 : i32
    %22 = vector.broadcast %21 : i32 to vector<8x256xi32>
    %23 = arith.remsi %19, %22 : vector<8x256xi32>
    %c0_i32_12 = arith.constant 0 : i32
    %24 = vector.broadcast %c0_i32_12 : i32 to vector<8x256xi32>
    %25 = arith.cmpi ne, %23, %24 : vector<8x256xi32>
    %c0_i32_13 = arith.constant 0 : i32
    %26 = vector.broadcast %c0_i32_13 : i32 to vector<8x256xi32>
    %27 = arith.cmpi slt, %23, %26 : vector<8x256xi32>
    %c0_i32_14 = arith.constant 0 : i32
    %28 = arith.cmpi slt, %21, %c0_i32_14 : i32
    %29 = vector.broadcast %28 : i1 to vector<8x256xi1>
    %30 = vector.broadcast %29 : vector<8x256xi1> to vector<8x256xi1>
    %31 = arith.xori %27, %30 : vector<8x256xi1>
    %32 = arith.andi %31, %25 : vector<8x256xi1>
    %33 = vector.broadcast %21 : i32 to vector<8x256xi32>
    %34 = arith.addi %23, %33 : vector<8x256xi32>
    %35 = arith.select %32, %34, %23 : vector<8x256xi1>, vector<8x256xi32>
    %c64_i32 = arith.constant 64 : i32
    %36 = vector.broadcast %c64_i32 : i32 to vector<8x256xi32>
    %37 = arith.cmpi slt, %35, %36 : vector<8x256xi32>
    %38 = vector.extract_strided_slice %16 {offsets = [0, 0], sizes = [8, 256], strides = [1, 1]} : vector<8x768xf32> to vector<8x256xf32>
    %c192_i32 = arith.constant 192 : i32
    %39 = tpu.dynamic_rotate %38 by %c192_i32 dim 1 : vector<8x256xf32>, i32 -> vector<8x256xf32>
    %c64_i32_15 = arith.constant 64 : i32
    %40 = tpu.dynamic_rotate %38 by %c64_i32_15 dim 1 : vector<8x256xf32>, i32 -> vector<8x256xf32>
    %41 = arith.select %37, %39, %40 : vector<8x256xi1>, vector<8x256xf32>
    %42 = arith.mulf %38, %17 : vector<8x256xf32>
    %43 = arith.mulf %41, %18 : vector<8x256xf32>
    %44 = arith.addf %42, %43 : vector<8x256xf32>
    %45 = vector.extract_strided_slice %16 {offsets = [0, 256], sizes = [8, 256], strides = [1, 1]} : vector<8x768xf32> to vector<8x256xf32>
    %c192_i32_16 = arith.constant 192 : i32
    %46 = tpu.dynamic_rotate %45 by %c192_i32_16 dim 1 : vector<8x256xf32>, i32 -> vector<8x256xf32>
    %c64_i32_17 = arith.constant 64 : i32
    %47 = tpu.dynamic_rotate %45 by %c64_i32_17 dim 1 : vector<8x256xf32>, i32 -> vector<8x256xf32>
    %48 = arith.select %37, %46, %47 : vector<8x256xi1>, vector<8x256xf32>
    %49 = arith.mulf %45, %17 : vector<8x256xf32>
    %50 = arith.mulf %48, %18 : vector<8x256xf32>
    %51 = arith.addf %49, %50 : vector<8x256xf32>
    %52 = vector.extract_strided_slice %16 {offsets = [0, 512], sizes = [8, 256], strides = [1, 1]} : vector<8x768xf32> to vector<8x256xf32>
    %c0_18 = arith.constant 0 : index
    %c0_19 = arith.constant 0 : index
    %53 = vector.load %arg17[%c0_18, %c0_19] : memref<8x256xf32, #tpu.memory_space<vmem>>, vector<8x256xf32>
    tpu.vector_store %arg17[%c0_18, %c0_19], %51 {strides = array<i32>} : memref<8x256xf32, #tpu.memory_space<vmem>>, vector<8x256xf32>,
    %c0_20 = arith.constant 0 : index
    %c0_21 = arith.constant 0 : index
    %54 = vector.load %arg18[%c0_20, %c0_21] : memref<8x256xf32, #tpu.memory_space<vmem>>, vector<8x256xf32>
    tpu.vector_store %arg18[%c0_20, %c0_21], %52 {strides = array<i32>} : memref<8x256xf32, #tpu.memory_space<vmem>>, vector<8x256xf32>,
    %55 = vector.extract_strided_slice %44 {offsets = [0, 0], sizes = [8, 128], strides = [1, 1]} : vector<8x256xf32> to vector<8x128xf32>
    %56 = vector.extract_strided_slice %44 {offsets = [0, 128], sizes = [8, 128], strides = [1, 1]} : vector<8x256xf32> to vector<8x128xf32>
    %57 = vector.shape_cast %55 : vector<8x128xf32> to vector<1x8x128xf32>
    %58 = vector.shape_cast %56 : vector<8x128xf32> to vector<1x8x128xf32>
    %59 = tpu.concatenate %57, %58 in 0 : vector<1x8x128xf32>, vector<1x8x128xf32> -> vector<2x8x128xf32>
    %60 = vector.extract_strided_slice %51 {offsets = [0, 0], sizes = [8, 128], strides = [1, 1]} : vector<8x256xf32> to vector<8x128xf32>
    %61 = vector.extract_strided_slice %51 {offsets = [0, 128], sizes = [8, 128], strides = [1, 1]} : vector<8x256xf32> to vector<8x128xf32>
    %62 = vector.shape_cast %60 : vector<8x128xf32> to vector<1x8x128xf32>
    %63 = vector.shape_cast %61 : vector<8x128xf32> to vector<1x8x128xf32>
    %64 = tpu.concatenate %62, %63 in 0 : vector<1x8x128xf32>, vector<1x8x128xf32> -> vector<2x8x128xf32>
    %65 = vector.extract_strided_slice %52 {offsets = [0, 0], sizes = [8, 128], strides = [1, 1]} : vector<8x256xf32> to vector<8x128xf32>
    %66 = vector.extract_strided_slice %52 {offsets = [0, 128], sizes = [8, 128], strides = [1, 1]} : vector<8x256xf32> to vector<8x128xf32>
    %67 = vector.shape_cast %65 : vector<8x128xf32> to vector<1x8x128xf32>
    %68 = vector.shape_cast %66 : vector<8x128xf32> to vector<1x8x128xf32>
    %69 = tpu.concatenate %67, %68 in 0 : vector<1x8x128xf32>, vector<1x8x128xf32> -> vector<2x8x128xf32>
    %70 = arith.truncf %59 : vector<2x8x128xf32> to vector<2x8x128xbf16>
    %71 = arith.truncf %64 : vector<2x8x128xf32> to vector<2x8x128xbf16>
    "tpu.trace_start"() <{level = 10 : i32, message = "htd,hsd->hts"}> : () -> ()
    %cst_22 = arith.constant dense<0.000000e+00> : vector<2x8x8xf32>
    %72 = tpu.matmul %70, %71, %cst_22 {dimension_numbers = #tpu.dot_dimension_numbers<[2], [2], [1], [1], [0, 0, 0, 1, 1, 1], [0], [0]>} : vector<2x8x128xbf16>, vector<2x8x128xbf16>, vector<2x8x8xf32> -> vector<2x8x8xf32>
    "tpu.trace_stop"() : () -> ()
    %cst_23 = arith.constant 0.0883883461 : f32
    %73 = vector.broadcast %cst_23 : f32 to vector<2x8x8xf32>
    %74 = arith.mulf %72, %73 : vector<2x8x8xf32>
    %75 = tpu.iota {dimensions = array<i32: 0>} : vector<8x8xi32>
    %76 = tpu.iota {dimensions = array<i32: 1>} : vector<8x8xi32>
    %77 = arith.cmpi sle, %76, %75 : vector<8x8xi32>
    %78 = vector.shape_cast %77 : vector<8x8xi1> to vector<1x8x8xi1>
    %cst_24 = arith.constant -1.000000e+30 : f32
    %79 = vector.shape_cast %78 : vector<1x8x8xi1> to vector<1x8x8xi1>
    %80 = vector.broadcast %79 : vector<1x8x8xi1> to vector<2x8x8xi1>
    %81 = vector.broadcast %cst_24 : f32 to vector<2x8x8xf32>
    %82 = arith.select %80, %74, %81 : vector<2x8x8xi1>, vector<2x8x8xf32>
    %cst_25 = arith.constant dense<0xFF800000> : vector<2x8xf32>
    %83 = vector.multi_reduction <maximumf>, %82, %cst_25 [2] : vector<2x8x8xf32> to vector<2x8xf32>
    %84 = vector.shape_cast %83 : vector<2x8xf32> to vector<2x8x1xf32>
    %85 = vector.broadcast %84 : vector<2x8x1xf32> to vector<2x8x8xf32>
    %86 = arith.subf %82, %85 : vector<2x8x8xf32>
    %87 = math.exp %86 : vector<2x8x8xf32>
    %cst_26 = arith.constant dense<0.000000e+00> : vector<2x8xf32>
    %88 = vector.multi_reduction <add>, %87, %cst_26 [2] : vector<2x8x8xf32> to vector<2x8xf32>
    %89 = vector.shape_cast %88 : vector<2x8xf32> to vector<2x8x1xf32>
    %90 = arith.truncf %87 : vector<2x8x8xf32> to vector<2x8x8xbf16>
    %91 = arith.truncf %69 : vector<2x8x128xf32> to vector<2x8x128xbf16>
    "tpu.trace_start"() <{level = 10 : i32, message = "hts,hsd->htd"}> : () -> ()
    %cst_27 = arith.constant dense<0.000000e+00> : vector<2x8x128xf32>
    %92 = tpu.matmul %90, %91, %cst_27 {dimension_numbers = #tpu.dot_dimension_numbers<[2], [1], [1], [2], [0, 0, 0, 1, 1, 2], [0], [0]>} : vector<2x8x8xbf16>, vector<2x8x128xbf16>, vector<2x8x128xf32> -> vector<2x8x128xf32>
    "tpu.trace_stop"() : () -> ()
    %93 = tpu.reciprocal %89 {approx = true} : vector<2x8x1xf32> -> vector<2x8x1xf32>
    %94 = vector.broadcast %93 : vector<2x8x1xf32> to vector<2x8x128xf32>
    %95 = arith.mulf %92, %94 : vector<2x8x128xf32>
    %96 = vector.extract_strided_slice %95 {offsets = [0, 0, 0], sizes = [1, 8, 128], strides = [1, 1, 1]} : vector<2x8x128xf32> to vector<1x8x128xf32>
    %97 = vector.shape_cast %96 : vector<1x8x128xf32> to vector<8x128xf32>
    %98 = vector.extract_strided_slice %95 {offsets = [1, 0, 0], sizes = [1, 8, 128], strides = [1, 1, 1]} : vector<2x8x128xf32> to vector<1x8x128xf32>
    %99 = vector.shape_cast %98 : vector<1x8x128xf32> to vector<8x128xf32>
    %100 = tpu.concatenate %97, %99 in 1 : vector<8x128xf32>, vector<8x128xf32> -> vector<8x256xf32>
    %101 = arith.truncf %100 : vector<8x256xf32> to vector<8x256xbf16>
    %c0_28 = arith.constant 0 : index
    %c0_29 = arith.constant 0 : index
    %102 = vector.load %arg6[%c0_28, %c0_29] : memref<256x256xbf16, #tpu.memory_space<vmem>>, vector<256x256xbf16>
    %cst_30 = arith.constant dense<0.000000e+00> : vector<8x256xf32>
    %103 = tpu.matmul %101, %102, %cst_30 {dimension_numbers = #tpu.dot_dimension_numbers<[1], [0], [0], [1], [0, 0, 1, 1], [], []>} : vector<8x256xbf16>, vector<256x256xbf16>, vector<8x256xf32> -> vector<8x256xf32>
    %104 = arith.addf %103, %0 : vector<8x256xf32>
    %105 = arith.mulf %104, %104 : vector<8x256xf32>
    %cst_31 = arith.constant dense<0.000000e+00> : vector<8xf32>
    %106 = vector.multi_reduction <add>, %105, %cst_31 [1] : vector<8x256xf32> to vector<8xf32>
    %107 = vector.shape_cast %106 : vector<8xf32> to vector<8x1xf32>
    %cst_32 = arith.constant 2.560000e+02 : f32
    %108 = vector.broadcast %cst_32 : f32 to vector<8x1xf32>
    %109 = arith.divf %107, %108 : vector<8x1xf32>
    %cst_33 = arith.constant 9.99999997E-7 : f32
    %110 = vector.broadcast %cst_33 : f32 to vector<8x1xf32>
    %111 = arith.addf %109, %110 : vector<8x1xf32>
    %112 = math.rsqrt %111 : vector<8x1xf32>
    %113 = vector.broadcast %112 : vector<8x1xf32> to vector<8x256xf32>
    %114 = arith.mulf %104, %113 : vector<8x256xf32>
    %c0_34 = arith.constant 0 : index
    %c0_35 = arith.constant 0 : index
    %115 = vector.load %arg7[%c0_34, %c0_35] : memref<1x256xf32, #tpu.memory_space<vmem>>, vector<1x256xf32>
    %116 = vector.broadcast %115 : vector<1x256xf32> to vector<8x256xf32>
    %117 = arith.mulf %114, %116 : vector<8x256xf32>
    %118 = arith.truncf %117 : vector<8x256xf32> to vector<8x256xbf16>
    %c0_36 = arith.constant 0 : index
    %c0_37 = arith.constant 0 : index
    %119 = vector.load %arg8[%c0_36, %c0_37] : memref<256x1024xbf16, #tpu.memory_space<vmem>>, vector<256x1024xbf16>
    %cst_38 = arith.constant dense<0.000000e+00> : vector<8x1024xf32>
    %120 = tpu.matmul %118, %119, %cst_38 {dimension_numbers = #tpu.dot_dimension_numbers<[1], [0], [0], [1], [0, 0, 1, 1], [], []>} : vector<8x256xbf16>, vector<256x1024xbf16>, vector<8x1024xf32> -> vector<8x1024xf32>
    %121 = vector.extract_strided_slice %120 {offsets = [0, 0], sizes = [8, 512], strides = [1, 1]} : vector<8x1024xf32> to vector<8x512xf32>
    %122 = vector.extract_strided_slice %120 {offsets = [0, 512], sizes = [8, 512], strides = [1, 1]} : vector<8x1024xf32> to vector<8x512xf32>
    %123 = arith.negf %121 : vector<8x512xf32>
    %124 = math.exp %123 : vector<8x512xf32>
    %cst_39 = arith.constant 1.000000e+00 : f32
    %125 = vector.broadcast %cst_39 : f32 to vector<8x512xf32>
    %126 = arith.addf %125, %124 : vector<8x512xf32>
    %127 = arith.divf %125, %126 : vector<8x512xf32>
    %128 = arith.mulf %121, %127 : vector<8x512xf32>
    %129 = arith.mulf %128, %122 : vector<8x512xf32>
    %130 = arith.truncf %129 : vector<8x512xf32> to vector<8x512xbf16>
    %c0_40 = arith.constant 0 : index
    %c0_41 = arith.constant 0 : index
    %131 = vector.load %arg9[%c0_40, %c0_41] : memref<512x256xbf16, #tpu.memory_space<vmem>>, vector<512x256xbf16>
    %cst_42 = arith.constant dense<0.000000e+00> : vector<8x256xf32>
    %132 = tpu.matmul %130, %131, %cst_42 {dimension_numbers = #tpu.dot_dimension_numbers<[1], [0], [0], [1], [0, 0, 1, 1], [], []>} : vector<8x512xbf16>, vector<512x256xbf16>, vector<8x256xf32> -> vector<8x256xf32>
    %c0_43 = arith.constant 0 : index
    %c0_44 = arith.constant 0 : index
    %133 = vector.load %arg13[%c0_43, %c0_44] : memref<8x256xf32, #tpu.memory_space<vmem>>, vector<8x256xf32>
    tpu.vector_store %arg13[%c0_43, %c0_44], %132 {strides = array<i32>} : memref<8x256xf32, #tpu.memory_space<vmem>>, vector<8x256xf32>,
    %c0_45 = arith.constant 0 : index
    %c0_46 = arith.constant 0 : index
    %134 = vector.load %arg14[%c0_45, %c0_46] : memref<8x256xf32, #tpu.memory_space<vmem>>, vector<8x256xf32>
    tpu.vector_store %arg14[%c0_45, %c0_46], %104 {strides = array<i32>} : memref<8x256xf32, #tpu.memory_space<vmem>>, vector<8x256xf32>,
    %c0_47 = arith.constant 0 : index
    %135 = memref.load %arg10[%c0_47] : memref<8xi32, #tpu.memory_space<smem>>
    %c0_i32_48 = arith.constant 0 : i32
    %c0_i32_49 = arith.constant 0 : i32
    %c0_i32_50 = arith.constant 0 : i32
    %c0_i32_51 = arith.constant 0 : i32
    %136 = tpu.memref_slice %arg17[%c0_i32_48, %c0_i32_51] : memref<8x256xf32, #tpu.memory_space<vmem>> -> memref<1x256xf32, #tpu.memory_space<vmem>>
    %137 = tpu.memref_squeeze %136 : memref<1x256xf32, #tpu.memory_space<vmem>> -> memref<256xf32, #tpu.memory_space<vmem>>
    %c0_i32_52 = arith.constant 0 : i32
    %138 = tpu.memref_slice %arg15[%135, %c0_i32_52] : memref<16x256xf32, #tpu.memory_space<any>> -> memref<1x256xf32, #tpu.memory_space<any>>
    %139 = tpu.memref_squeeze %138 : memref<1x256xf32, #tpu.memory_space<any>> -> memref<256xf32, #tpu.memory_space<any>>
    %140 = tpu.memref_slice %arg19[%c0_i32_49, %c0_i32_50] : memref<2x8x!tpu.dma_semaphore, #tpu.memory_space<semaphore_mem>> -> memref<1x1x!tpu.dma_semaphore, #tpu.memory_space<semaphore_mem>>
    %141 = tpu.memref_squeeze %140 : memref<1x1x!tpu.dma_semaphore, #tpu.memory_space<semaphore_mem>> -> memref<!tpu.dma_semaphore, #tpu.memory_space<semaphore_mem>>
    tpu.enqueue_dma source(%137 : memref<256xf32, #tpu.memory_space<vmem>>) target(%139 : memref<256xf32, #tpu.memory_space<any>>) target_semaphore(%141 : memref<!tpu.dma_semaphore, #tpu.memory_space<semaphore_mem>>)
    %c0_i32_53 = arith.constant 0 : i32
    %c1_i32_54 = arith.constant 1 : i32
    %c0_i32_55 = arith.constant 0 : i32
    %c0_i32_56 = arith.constant 0 : i32
    %142 = tpu.memref_slice %arg18[%c0_i32_53, %c0_i32_56] : memref<8x256xf32, #tpu.memory_space<vmem>> -> memref<1x256xf32, #tpu.memory_space<vmem>>
    %143 = tpu.memref_squeeze %142 : memref<1x256xf32, #tpu.memory_space<vmem>> -> memref<256xf32, #tpu.memory_space<vmem>>
    %c0_i32_57 = arith.constant 0 : i32
    %144 = tpu.memref_slice %arg16[%135, %c0_i32_57] : memref<16x256xf32, #tpu.memory_space<any>> -> memref<1x256xf32, #tpu.memory_space<any>>
    %145 = tpu.memref_squeeze %144 : memref<1x256xf32, #tpu.memory_space<any>> -> memref<256xf32, #tpu.memory_space<any>>
    %146 = tpu.memref_slice %arg19[%c1_i32_54, %c0_i32_55] : memref<2x8x!tpu.dma_semaphore, #tpu.memory_space<semaphore_mem>> -> memref<1x1x!tpu.dma_semaphore, #tpu.memory_space<semaphore_mem>>
    %147 = tpu.memref_squeeze %146 : memref<1x1x!tpu.dma_semaphore, #tpu.memory_space<semaphore_mem>> -> memref<!tpu.dma_semaphore, #tpu.memory_space<semaphore_mem>>
    tpu.enqueue_dma source(%143 : memref<256xf32, #tpu.memory_space<vmem>>) target(%145 : memref<256xf32, #tpu.memory_space<any>>) target_semaphore(%147 : memref<!tpu.dma_semaphore, #tpu.memory_space<semaphore_mem>>)
    %c1 = arith.constant 1 : index
    %148 = memref.load %arg10[%c1] : memref<8xi32, #tpu.memory_space<smem>>
    %c1_i32_58 = arith.constant 1 : i32
    %c0_i32_59 = arith.constant 0 : i32
    %c1_i32_60 = arith.constant 1 : i32
    %c0_i32_61 = arith.constant 0 : i32
    %149 = tpu.memref_slice %arg17[%c1_i32_58, %c0_i32_61] : memref<8x256xf32, #tpu.memory_space<vmem>> -> memref<1x256xf32, #tpu.memory_space<vmem>>
    %150 = tpu.memref_squeeze %149 : memref<1x256xf32, #tpu.memory_space<vmem>> -> memref<256xf32, #tpu.memory_space<vmem>>
    %c0_i32_62 = arith.constant 0 : i32
    %151 = tpu.memref_slice %arg15[%148, %c0_i32_62] : memref<16x256xf32, #tpu.memory_space<any>> -> memref<1x256xf32, #tpu.memory_space<any>>
    %152 = tpu.memref_squeeze %151 : memref<1x256xf32, #tpu.memory_space<any>> -> memref<256xf32, #tpu.memory_space<any>>
    %153 = tpu.memref_slice %arg19[%c0_i32_59, %c1_i32_60] : memref<2x8x!tpu.dma_semaphore, #tpu.memory_space<semaphore_mem>> -> memref<1x1x!tpu.dma_semaphore, #tpu.memory_space<semaphore_mem>>
    %154 = tpu.memref_squeeze %153 : memref<1x1x!tpu.dma_semaphore, #tpu.memory_space<semaphore_mem>> -> memref<!tpu.dma_semaphore, #tpu.memory_space<semaphore_mem>>
    tpu.enqueue_dma source(%150 : memref<256xf32, #tpu.memory_space<vmem>>) target(%152 : memref<256xf32, #tpu.memory_space<any>>) target_semaphore(%154 : memref<!tpu.dma_semaphore, #tpu.memory_space<semaphore_mem>>)
    %c1_i32_63 = arith.constant 1 : i32
    %c1_i32_64 = arith.constant 1 : i32
    %c1_i32_65 = arith.constant 1 : i32
    %c0_i32_66 = arith.constant 0 : i32
    %155 = tpu.memref_slice %arg18[%c1_i32_63, %c0_i32_66] : memref<8x256xf32, #tpu.memory_space<vmem>> -> memref<1x256xf32, #tpu.memory_space<vmem>>
    %156 = tpu.memref_squeeze %155 : memref<1x256xf32, #tpu.memory_space<vmem>> -> memref<256xf32, #tpu.memory_space<vmem>>
    %c0_i32_67 = arith.constant 0 : i32
    %157 = tpu.memref_slice %arg16[%148, %c0_i32_67] : memref<16x256xf32, #tpu.memory_space<any>> -> memref<1x256xf32, #tpu.memory_space<any>>
    %158 = tpu.memref_squeeze %157 : memref<1x256xf32, #tpu.memory_space<any>> -> memref<256xf32, #tpu.memory_space<any>>
    %159 = tpu.memref_slice %arg19[%c1_i32_64, %c1_i32_65] : memref<2x8x!tpu.dma_semaphore, #tpu.memory_space<semaphore_mem>> -> memref<1x1x!tpu.dma_semaphore, #tpu.memory_space<semaphore_mem>>
    %160 = tpu.memref_squeeze %159 : memref<1x1x!tpu.dma_semaphore, #tpu.memory_space<semaphore_mem>> -> memref<!tpu.dma_semaphore, #tpu.memory_space<semaphore_mem>>
    tpu.enqueue_dma source(%156 : memref<256xf32, #tpu.memory_space<vmem>>) target(%158 : memref<256xf32, #tpu.memory_space<any>>) target_semaphore(%160 : memref<!tpu.dma_semaphore, #tpu.memory_space<semaphore_mem>>)
    %c2 = arith.constant 2 : index
    %161 = memref.load %arg10[%c2] : memref<8xi32, #tpu.memory_space<smem>>
    %c2_i32 = arith.constant 2 : i32
    %c0_i32_68 = arith.constant 0 : i32
    %c2_i32_69 = arith.constant 2 : i32
    %c0_i32_70 = arith.constant 0 : i32
    %162 = tpu.memref_slice %arg17[%c2_i32, %c0_i32_70] : memref<8x256xf32, #tpu.memory_space<vmem>> -> memref<1x256xf32, #tpu.memory_space<vmem>>
    %163 = tpu.memref_squeeze %162 : memref<1x256xf32, #tpu.memory_space<vmem>> -> memref<256xf32, #tpu.memory_space<vmem>>
    %c0_i32_71 = arith.constant 0 : i32
    %164 = tpu.memref_slice %arg15[%161, %c0_i32_71] : memref<16x256xf32, #tpu.memory_space<any>> -> memref<1x256xf32, #tpu.memory_space<any>>
    %165 = tpu.memref_squeeze %164 : memref<1x256xf32, #tpu.memory_space<any>> -> memref<256xf32, #tpu.memory_space<any>>
    %166 = tpu.memref_slice %arg19[%c0_i32_68, %c2_i32_69] : memref<2x8x!tpu.dma_semaphore, #tpu.memory_space<semaphore_mem>> -> memref<1x1x!tpu.dma_semaphore, #tpu.memory_space<semaphore_mem>>
    %167 = tpu.memref_squeeze %166 : memref<1x1x!tpu.dma_semaphore, #tpu.memory_space<semaphore_mem>> -> memref<!tpu.dma_semaphore, #tpu.memory_space<semaphore_mem>>
    tpu.enqueue_dma source(%163 : memref<256xf32, #tpu.memory_space<vmem>>) target(%165 : memref<256xf32, #tpu.memory_space<any>>) target_semaphore(%167 : memref<!tpu.dma_semaphore, #tpu.memory_space<semaphore_mem>>)
    %c2_i32_72 = arith.constant 2 : i32
    %c1_i32_73 = arith.constant 1 : i32
    %c2_i32_74 = arith.constant 2 : i32
    %c0_i32_75 = arith.constant 0 : i32
    %168 = tpu.memref_slice %arg18[%c2_i32_72, %c0_i32_75] : memref<8x256xf32, #tpu.memory_space<vmem>> -> memref<1x256xf32, #tpu.memory_space<vmem>>
    %169 = tpu.memref_squeeze %168 : memref<1x256xf32, #tpu.memory_space<vmem>> -> memref<256xf32, #tpu.memory_space<vmem>>
    %c0_i32_76 = arith.constant 0 : i32
    %170 = tpu.memref_slice %arg16[%161, %c0_i32_76] : memref<16x256xf32, #tpu.memory_space<any>> -> memref<1x256xf32, #tpu.memory_space<any>>
    %171 = tpu.memref_squeeze %170 : memref<1x256xf32, #tpu.memory_space<any>> -> memref<256xf32, #tpu.memory_space<any>>
    %172 = tpu.memref_slice %arg19[%c1_i32_73, %c2_i32_74] : memref<2x8x!tpu.dma_semaphore, #tpu.memory_space<semaphore_mem>> -> memref<1x1x!tpu.dma_semaphore, #tpu.memory_space<semaphore_mem>>
    %173 = tpu.memref_squeeze %172 : memref<1x1x!tpu.dma_semaphore, #tpu.memory_space<semaphore_mem>> -> memref<!tpu.dma_semaphore, #tpu.memory_space<semaphore_mem>>
    tpu.enqueue_dma source(%169 : memref<256xf32, #tpu.memory_space<vmem>>) target(%171 : memref<256xf32, #tpu.memory_space<any>>) target_semaphore(%173 : memref<!tpu.dma_semaphore, #tpu.memory_space<semaphore_mem>>)
    %c3 = arith.constant 3 : index
    %174 = memref.load %arg10[%c3] : memref<8xi32, #tpu.memory_space<smem>>
    %c3_i32 = arith.constant 3 : i32
    %c0_i32_77 = arith.constant 0 : i32
    %c3_i32_78 = arith.constant 3 : i32
    %c0_i32_79 = arith.constant 0 : i32
    %175 = tpu.memref_slice %arg17[%c3_i32, %c0_i32_79] : memref<8x256xf32, #tpu.memory_space<vmem>> -> memref<1x256xf32, #tpu.memory_space<vmem>>
    %176 = tpu.memref_squeeze %175 : memref<1x256xf32, #tpu.memory_space<vmem>> -> memref<256xf32, #tpu.memory_space<vmem>>
    %c0_i32_80 = arith.constant 0 : i32
    %177 = tpu.memref_slice %arg15[%174, %c0_i32_80] : memref<16x256xf32, #tpu.memory_space<any>> -> memref<1x256xf32, #tpu.memory_space<any>>
    %178 = tpu.memref_squeeze %177 : memref<1x256xf32, #tpu.memory_space<any>> -> memref<256xf32, #tpu.memory_space<any>>
    %179 = tpu.memref_slice %arg19[%c0_i32_77, %c3_i32_78] : memref<2x8x!tpu.dma_semaphore, #tpu.memory_space<semaphore_mem>> -> memref<1x1x!tpu.dma_semaphore, #tpu.memory_space<semaphore_mem>>
    %180 = tpu.memref_squeeze %179 : memref<1x1x!tpu.dma_semaphore, #tpu.memory_space<semaphore_mem>> -> memref<!tpu.dma_semaphore, #tpu.memory_space<semaphore_mem>>
    tpu.enqueue_dma source(%176 : memref<256xf32, #tpu.memory_space<vmem>>) target(%178 : memref<256xf32, #tpu.memory_space<any>>) target_semaphore(%180 : memref<!tpu.dma_semaphore, #tpu.memory_space<semaphore_mem>>)
    %c3_i32_81 = arith.constant 3 : i32
    %c1_i32_82 = arith.constant 1 : i32
    %c3_i32_83 = arith.constant 3 : i32
    %c0_i32_84 = arith.constant 0 : i32
    %181 = tpu.memref_slice %arg18[%c3_i32_81, %c0_i32_84] : memref<8x256xf32, #tpu.memory_space<vmem>> -> memref<1x256xf32, #tpu.memory_space<vmem>>
    %182 = tpu.memref_squeeze %181 : memref<1x256xf32, #tpu.memory_space<vmem>> -> memref<256xf32, #tpu.memory_space<vmem>>
    %c0_i32_85 = arith.constant 0 : i32
    %183 = tpu.memref_slice %arg16[%174, %c0_i32_85] : memref<16x256xf32, #tpu.memory_space<any>> -> memref<1x256xf32, #tpu.memory_space<any>>
    %184 = tpu.memref_squeeze %183 : memref<1x256xf32, #tpu.memory_space<any>> -> memref<256xf32, #tpu.memory_space<any>>
    %185 = tpu.memref_slice %arg19[%c1_i32_82, %c3_i32_83] : memref<2x8x!tpu.dma_semaphore, #tpu.memory_space<semaphore_mem>> -> memref<1x1x!tpu.dma_semaphore, #tpu.memory_space<semaphore_mem>>
    %186 = tpu.memref_squeeze %185 : memref<1x1x!tpu.dma_semaphore, #tpu.memory_space<semaphore_mem>> -> memref<!tpu.dma_semaphore, #tpu.memory_space<semaphore_mem>>
    tpu.enqueue_dma source(%182 : memref<256xf32, #tpu.memory_space<vmem>>) target(%184 : memref<256xf32, #tpu.memory_space<any>>) target_semaphore(%186 : memref<!tpu.dma_semaphore, #tpu.memory_space<semaphore_mem>>)
    %c4 = arith.constant 4 : index
    %187 = memref.load %arg10[%c4] : memref<8xi32, #tpu.memory_space<smem>>
    %c4_i32 = arith.constant 4 : i32
    %c0_i32_86 = arith.constant 0 : i32
    %c4_i32_87 = arith.constant 4 : i32
    %c0_i32_88 = arith.constant 0 : i32
    %188 = tpu.memref_slice %arg17[%c4_i32, %c0_i32_88] : memref<8x256xf32, #tpu.memory_space<vmem>> -> memref<1x256xf32, #tpu.memory_space<vmem>>
    %189 = tpu.memref_squeeze %188 : memref<1x256xf32, #tpu.memory_space<vmem>> -> memref<256xf32, #tpu.memory_space<vmem>>
    %c0_i32_89 = arith.constant 0 : i32
    %190 = tpu.memref_slice %arg15[%187, %c0_i32_89] : memref<16x256xf32, #tpu.memory_space<any>> -> memref<1x256xf32, #tpu.memory_space<any>>
    %191 = tpu.memref_squeeze %190 : memref<1x256xf32, #tpu.memory_space<any>> -> memref<256xf32, #tpu.memory_space<any>>
    %192 = tpu.memref_slice %arg19[%c0_i32_86, %c4_i32_87] : memref<2x8x!tpu.dma_semaphore, #tpu.memory_space<semaphore_mem>> -> memref<1x1x!tpu.dma_semaphore, #tpu.memory_space<semaphore_mem>>
    %193 = tpu.memref_squeeze %192 : memref<1x1x!tpu.dma_semaphore, #tpu.memory_space<semaphore_mem>> -> memref<!tpu.dma_semaphore, #tpu.memory_space<semaphore_mem>>
    tpu.enqueue_dma source(%189 : memref<256xf32, #tpu.memory_space<vmem>>) target(%191 : memref<256xf32, #tpu.memory_space<any>>) target_semaphore(%193 : memref<!tpu.dma_semaphore, #tpu.memory_space<semaphore_mem>>)
    %c4_i32_90 = arith.constant 4 : i32
    %c1_i32_91 = arith.constant 1 : i32
    %c4_i32_92 = arith.constant 4 : i32
    %c0_i32_93 = arith.constant 0 : i32
    %194 = tpu.memref_slice %arg18[%c4_i32_90, %c0_i32_93] : memref<8x256xf32, #tpu.memory_space<vmem>> -> memref<1x256xf32, #tpu.memory_space<vmem>>
    %195 = tpu.memref_squeeze %194 : memref<1x256xf32, #tpu.memory_space<vmem>> -> memref<256xf32, #tpu.memory_space<vmem>>
    %c0_i32_94 = arith.constant 0 : i32
    %196 = tpu.memref_slice %arg16[%187, %c0_i32_94] : memref<16x256xf32, #tpu.memory_space<any>> -> memref<1x256xf32, #tpu.memory_space<any>>
    %197 = tpu.memref_squeeze %196 : memref<1x256xf32, #tpu.memory_space<any>> -> memref<256xf32, #tpu.memory_space<any>>
    %198 = tpu.memref_slice %arg19[%c1_i32_91, %c4_i32_92] : memref<2x8x!tpu.dma_semaphore, #tpu.memory_space<semaphore_mem>> -> memref<1x1x!tpu.dma_semaphore, #tpu.memory_space<semaphore_mem>>
    %199 = tpu.memref_squeeze %198 : memref<1x1x!tpu.dma_semaphore, #tpu.memory_space<semaphore_mem>> -> memref<!tpu.dma_semaphore, #tpu.memory_space<semaphore_mem>>
    tpu.enqueue_dma source(%195 : memref<256xf32, #tpu.memory_space<vmem>>) target(%197 : memref<256xf32, #tpu.memory_space<any>>) target_semaphore(%199 : memref<!tpu.dma_semaphore, #tpu.memory_space<semaphore_mem>>)
    %c5 = arith.constant 5 : index
    %200 = memref.load %arg10[%c5] : memref<8xi32, #tpu.memory_space<smem>>
    %c5_i32 = arith.constant 5 : i32
    %c0_i32_95 = arith.constant 0 : i32
    %c5_i32_96 = arith.constant 5 : i32
    %c0_i32_97 = arith.constant 0 : i32
    %201 = tpu.memref_slice %arg17[%c5_i32, %c0_i32_97] : memref<8x256xf32, #tpu.memory_space<vmem>> -> memref<1x256xf32, #tpu.memory_space<vmem>>
    %202 = tpu.memref_squeeze %201 : memref<1x256xf32, #tpu.memory_space<vmem>> -> memref<256xf32, #tpu.memory_space<vmem>>
    %c0_i32_98 = arith.constant 0 : i32
    %203 = tpu.memref_slice %arg15[%200, %c0_i32_98] : memref<16x256xf32, #tpu.memory_space<any>> -> memref<1x256xf32, #tpu.memory_space<any>>
    %204 = tpu.memref_squeeze %203 : memref<1x256xf32, #tpu.memory_space<any>> -> memref<256xf32, #tpu.memory_space<any>>
    %205 = tpu.memref_slice %arg19[%c0_i32_95, %c5_i32_96] : memref<2x8x!tpu.dma_semaphore, #tpu.memory_space<semaphore_mem>> -> memref<1x1x!tpu.dma_semaphore, #tpu.memory_space<semaphore_mem>>
    %206 = tpu.memref_squeeze %205 : memref<1x1x!tpu.dma_semaphore, #tpu.memory_space<semaphore_mem>> -> memref<!tpu.dma_semaphore, #tpu.memory_space<semaphore_mem>>
    tpu.enqueue_dma source(%202 : memref<256xf32, #tpu.memory_space<vmem>>) target(%204 : memref<256xf32, #tpu.memory_space<any>>) target_semaphore(%206 : memref<!tpu.dma_semaphore, #tpu.memory_space<semaphore_mem>>)
    %c5_i32_99 = arith.constant 5 : i32
    %c1_i32_100 = arith.constant 1 : i32
    %c5_i32_101 = arith.constant 5 : i32
    %c0_i32_102 = arith.constant 0 : i32
    %207 = tpu.memref_slice %arg18[%c5_i32_99, %c0_i32_102] : memref<8x256xf32, #tpu.memory_space<vmem>> -> memref<1x256xf32, #tpu.memory_space<vmem>>
    %208 = tpu.memref_squeeze %207 : memref<1x256xf32, #tpu.memory_space<vmem>> -> memref<256xf32, #tpu.memory_space<vmem>>
    %c0_i32_103 = arith.constant 0 : i32
    %209 = tpu.memref_slice %arg16[%200, %c0_i32_103] : memref<16x256xf32, #tpu.memory_space<any>> -> memref<1x256xf32, #tpu.memory_space<any>>
    %210 = tpu.memref_squeeze %209 : memref<1x256xf32, #tpu.memory_space<any>> -> memref<256xf32, #tpu.memory_space<any>>
    %211 = tpu.memref_slice %arg19[%c1_i32_100, %c5_i32_101] : memref<2x8x!tpu.dma_semaphore, #tpu.memory_space<semaphore_mem>> -> memref<1x1x!tpu.dma_semaphore, #tpu.memory_space<semaphore_mem>>
    %212 = tpu.memref_squeeze %211 : memref<1x1x!tpu.dma_semaphore, #tpu.memory_space<semaphore_mem>> -> memref<!tpu.dma_semaphore, #tpu.memory_space<semaphore_mem>>
    tpu.enqueue_dma source(%208 : memref<256xf32, #tpu.memory_space<vmem>>) target(%210 : memref<256xf32, #tpu.memory_space<any>>) target_semaphore(%212 : memref<!tpu.dma_semaphore, #tpu.memory_space<semaphore_mem>>)
    %c6 = arith.constant 6 : index
    %213 = memref.load %arg10[%c6] : memref<8xi32, #tpu.memory_space<smem>>
    %c6_i32 = arith.constant 6 : i32
    %c0_i32_104 = arith.constant 0 : i32
    %c6_i32_105 = arith.constant 6 : i32
    %c0_i32_106 = arith.constant 0 : i32
    %214 = tpu.memref_slice %arg17[%c6_i32, %c0_i32_106] : memref<8x256xf32, #tpu.memory_space<vmem>> -> memref<1x256xf32, #tpu.memory_space<vmem>>
    %215 = tpu.memref_squeeze %214 : memref<1x256xf32, #tpu.memory_space<vmem>> -> memref<256xf32, #tpu.memory_space<vmem>>
    %c0_i32_107 = arith.constant 0 : i32
    %216 = tpu.memref_slice %arg15[%213, %c0_i32_107] : memref<16x256xf32, #tpu.memory_space<any>> -> memref<1x256xf32, #tpu.memory_space<any>>
    %217 = tpu.memref_squeeze %216 : memref<1x256xf32, #tpu.memory_space<any>> -> memref<256xf32, #tpu.memory_space<any>>
    %218 = tpu.memref_slice %arg19[%c0_i32_104, %c6_i32_105] : memref<2x8x!tpu.dma_semaphore, #tpu.memory_space<semaphore_mem>> -> memref<1x1x!tpu.dma_semaphore, #tpu.memory_space<semaphore_mem>>
    %219 = tpu.memref_squeeze %218 : memref<1x1x!tpu.dma_semaphore, #tpu.memory_space<semaphore_mem>> -> memref<!tpu.dma_semaphore, #tpu.memory_space<semaphore_mem>>
    tpu.enqueue_dma source(%215 : memref<256xf32, #tpu.memory_space<vmem>>) target(%217 : memref<256xf32, #tpu.memory_space<any>>) target_semaphore(%219 : memref<!tpu.dma_semaphore, #tpu.memory_space<semaphore_mem>>)
    %c6_i32_108 = arith.constant 6 : i32
    %c1_i32_109 = arith.constant 1 : i32
    %c6_i32_110 = arith.constant 6 : i32
    %c0_i32_111 = arith.constant 0 : i32
    %220 = tpu.memref_slice %arg18[%c6_i32_108, %c0_i32_111] : memref<8x256xf32, #tpu.memory_space<vmem>> -> memref<1x256xf32, #tpu.memory_space<vmem>>
    %221 = tpu.memref_squeeze %220 : memref<1x256xf32, #tpu.memory_space<vmem>> -> memref<256xf32, #tpu.memory_space<vmem>>
    %c0_i32_112 = arith.constant 0 : i32
    %222 = tpu.memref_slice %arg16[%213, %c0_i32_112] : memref<16x256xf32, #tpu.memory_space<any>> -> memref<1x256xf32, #tpu.memory_space<any>>
    %223 = tpu.memref_squeeze %222 : memref<1x256xf32, #tpu.memory_space<any>> -> memref<256xf32, #tpu.memory_space<any>>
    %224 = tpu.memref_slice %arg19[%c1_i32_109, %c6_i32_110] : memref<2x8x!tpu.dma_semaphore, #tpu.memory_space<semaphore_mem>> -> memref<1x1x!tpu.dma_semaphore, #tpu.memory_space<semaphore_mem>>
    %225 = tpu.memref_squeeze %224 : memref<1x1x!tpu.dma_semaphore, #tpu.memory_space<semaphore_mem>> -> memref<!tpu.dma_semaphore, #tpu.memory_space<semaphore_mem>>
    tpu.enqueue_dma source(%221 : memref<256xf32, #tpu.memory_space<vmem>>) target(%223 : memref<256xf32, #tpu.memory_space<any>>) target_semaphore(%225 : memref<!tpu.dma_semaphore, #tpu.memory_space<semaphore_mem>>)
    %c7 = arith.constant 7 : index
    %226 = memref.load %arg10[%c7] : memref<8xi32, #tpu.memory_space<smem>>
    %c7_i32 = arith.constant 7 : i32
    %c0_i32_113 = arith.constant 0 : i32
    %c7_i32_114 = arith.constant 7 : i32
    %c0_i32_115 = arith.constant 0 : i32
    %227 = tpu.memref_slice %arg17[%c7_i32, %c0_i32_115] : memref<8x256xf32, #tpu.memory_space<vmem>> -> memref<1x256xf32, #tpu.memory_space<vmem>>
    %228 = tpu.memref_squeeze %227 : memref<1x256xf32, #tpu.memory_space<vmem>> -> memref<256xf32, #tpu.memory_space<vmem>>
    %c0_i32_116 = arith.constant 0 : i32
    %229 = tpu.memref_slice %arg15[%226, %c0_i32_116] : memref<16x256xf32, #tpu.memory_space<any>> -> memref<1x256xf32, #tpu.memory_space<any>>
    %230 = tpu.memref_squeeze %229 : memref<1x256xf32, #tpu.memory_space<any>> -> memref<256xf32, #tpu.memory_space<any>>
    %231 = tpu.memref_slice %arg19[%c0_i32_113, %c7_i32_114] : memref<2x8x!tpu.dma_semaphore, #tpu.memory_space<semaphore_mem>> -> memref<1x1x!tpu.dma_semaphore, #tpu.memory_space<semaphore_mem>>
    %232 = tpu.memref_squeeze %231 : memref<1x1x!tpu.dma_semaphore, #tpu.memory_space<semaphore_mem>> -> memref<!tpu.dma_semaphore, #tpu.memory_space<semaphore_mem>>
    tpu.enqueue_dma source(%228 : memref<256xf32, #tpu.memory_space<vmem>>) target(%230 : memref<256xf32, #tpu.memory_space<any>>) target_semaphore(%232 : memref<!tpu.dma_semaphore, #tpu.memory_space<semaphore_mem>>)
    %c7_i32_117 = arith.constant 7 : i32
    %c1_i32_118 = arith.constant 1 : i32
    %c7_i32_119 = arith.constant 7 : i32
    %c0_i32_120 = arith.constant 0 : i32
    %233 = tpu.memref_slice %arg18[%c7_i32_117, %c0_i32_120] : memref<8x256xf32, #tpu.memory_space<vmem>> -> memref<1x256xf32, #tpu.memory_space<vmem>>
    %234 = tpu.memref_squeeze %233 : memref<1x256xf32, #tpu.memory_space<vmem>> -> memref<256xf32, #tpu.memory_space<vmem>>
    %c0_i32_121 = arith.constant 0 : i32
    %235 = tpu.memref_slice %arg16[%226, %c0_i32_121] : memref<16x256xf32, #tpu.memory_space<any>> -> memref<1x256xf32, #tpu.memory_space<any>>
    %236 = tpu.memref_squeeze %235 : memref<1x256xf32, #tpu.memory_space<any>> -> memref<256xf32, #tpu.memory_space<any>>
    %237 = tpu.memref_slice %arg19[%c1_i32_118, %c7_i32_119] : memref<2x8x!tpu.dma_semaphore, #tpu.memory_space<semaphore_mem>> -> memref<1x1x!tpu.dma_semaphore, #tpu.memory_space<semaphore_mem>>
    %238 = tpu.memref_squeeze %237 : memref<1x1x!tpu.dma_semaphore, #tpu.memory_space<semaphore_mem>> -> memref<!tpu.dma_semaphore, #tpu.memory_space<semaphore_mem>>
    tpu.enqueue_dma source(%234 : memref<256xf32, #tpu.memory_space<vmem>>) target(%236 : memref<256xf32, #tpu.memory_space<any>>) target_semaphore(%238 : memref<!tpu.dma_semaphore, #tpu.memory_space<semaphore_mem>>)
    %c0_i32_122 = arith.constant 0 : i32
    %c0_i32_123 = arith.constant 0 : i32
    %c0_i32_124 = arith.constant 0 : i32
    %c0_i32_125 = arith.constant 0 : i32
    %239 = tpu.memref_slice %arg17[%c0_i32_122, %c0_i32_125] : memref<8x256xf32, #tpu.memory_space<vmem>> -> memref<1x256xf32, #tpu.memory_space<vmem>>
    %240 = tpu.memref_squeeze %239 : memref<1x256xf32, #tpu.memory_space<vmem>> -> memref<256xf32, #tpu.memory_space<vmem>>
    %c0_i32_126 = arith.constant 0 : i32
    %241 = tpu.memref_slice %arg15[%135, %c0_i32_126] : memref<16x256xf32, #tpu.memory_space<any>> -> memref<1x256xf32, #tpu.memory_space<any>>
    %242 = tpu.memref_squeeze %241 : memref<1x256xf32, #tpu.memory_space<any>> -> memref<256xf32, #tpu.memory_space<any>>
    %243 = tpu.memref_slice %arg19[%c0_i32_123, %c0_i32_124] : memref<2x8x!tpu.dma_semaphore, #tpu.memory_space<semaphore_mem>> -> memref<1x1x!tpu.dma_semaphore, #tpu.memory_space<semaphore_mem>>
    %244 = tpu.memref_squeeze %243 : memref<1x1x!tpu.dma_semaphore, #tpu.memory_space<semaphore_mem>> -> memref<!tpu.dma_semaphore, #tpu.memory_space<semaphore_mem>>
    tpu.wait_dma2 semaphore(%244 : memref<!tpu.dma_semaphore, #tpu.memory_space<semaphore_mem>>) src(%240 : memref<256xf32, #tpu.memory_space<vmem>>) dst(%242 : memref<256xf32, #tpu.memory_space<any>>)
    %c0_i32_127 = arith.constant 0 : i32
    %c1_i32_128 = arith.constant 1 : i32
    %c0_i32_129 = arith.constant 0 : i32
    %c0_i32_130 = arith.constant 0 : i32
    %245 = tpu.memref_slice %arg18[%c0_i32_127, %c0_i32_130] : memref<8x256xf32, #tpu.memory_space<vmem>> -> memref<1x256xf32, #tpu.memory_space<vmem>>
    %246 = tpu.memref_squeeze %245 : memref<1x256xf32, #tpu.memory_space<vmem>> -> memref<256xf32, #tpu.memory_space<vmem>>
    %c0_i32_131 = arith.constant 0 : i32
    %247 = tpu.memref_slice %arg16[%135, %c0_i32_131] : memref<16x256xf32, #tpu.memory_space<any>> -> memref<1x256xf32, #tpu.memory_space<any>>
    %248 = tpu.memref_squeeze %247 : memref<1x256xf32, #tpu.memory_space<any>> -> memref<256xf32, #tpu.memory_space<any>>
    %249 = tpu.memref_slice %arg19[%c1_i32_128, %c0_i32_129] : memref<2x8x!tpu.dma_semaphore, #tpu.memory_space<semaphore_mem>> -> memref<1x1x!tpu.dma_semaphore, #tpu.memory_space<semaphore_mem>>
    %250 = tpu.memref_squeeze %249 : memref<1x1x!tpu.dma_semaphore, #tpu.memory_space<semaphore_mem>> -> memref<!tpu.dma_semaphore, #tpu.memory_space<semaphore_mem>>
    tpu.wait_dma2 semaphore(%250 : memref<!tpu.dma_semaphore, #tpu.memory_space<semaphore_mem>>) src(%246 : memref<256xf32, #tpu.memory_space<vmem>>) dst(%248 : memref<256xf32, #tpu.memory_space<any>>)
    %c1_i32_132 = arith.constant 1 : i32
    %c0_i32_133 = arith.constant 0 : i32
    %c1_i32_134 = arith.constant 1 : i32
    %c0_i32_135 = arith.constant 0 : i32
    %251 = tpu.memref_slice %arg17[%c1_i32_132, %c0_i32_135] : memref<8x256xf32, #tpu.memory_space<vmem>> -> memref<1x256xf32, #tpu.memory_space<vmem>>
    %252 = tpu.memref_squeeze %251 : memref<1x256xf32, #tpu.memory_space<vmem>> -> memref<256xf32, #tpu.memory_space<vmem>>
    %c0_i32_136 = arith.constant 0 : i32
    %253 = tpu.memref_slice %arg15[%148, %c0_i32_136] : memref<16x256xf32, #tpu.memory_space<any>> -> memref<1x256xf32, #tpu.memory_space<any>>
    %254 = tpu.memref_squeeze %253 : memref<1x256xf32, #tpu.memory_space<any>> -> memref<256xf32, #tpu.memory_space<any>>
    %255 = tpu.memref_slice %arg19[%c0_i32_133, %c1_i32_134] : memref<2x8x!tpu.dma_semaphore, #tpu.memory_space<semaphore_mem>> -> memref<1x1x!tpu.dma_semaphore, #tpu.memory_space<semaphore_mem>>
    %256 = tpu.memref_squeeze %255 : memref<1x1x!tpu.dma_semaphore, #tpu.memory_space<semaphore_mem>> -> memref<!tpu.dma_semaphore, #tpu.memory_space<semaphore_mem>>
    tpu.wait_dma2 semaphore(%256 : memref<!tpu.dma_semaphore, #tpu.memory_space<semaphore_mem>>) src(%252 : memref<256xf32, #tpu.memory_space<vmem>>) dst(%254 : memref<256xf32, #tpu.memory_space<any>>)
    %c1_i32_137 = arith.constant 1 : i32
    %c1_i32_138 = arith.constant 1 : i32
    %c1_i32_139 = arith.constant 1 : i32
    %c0_i32_140 = arith.constant 0 : i32
    %257 = tpu.memref_slice %arg18[%c1_i32_137, %c0_i32_140] : memref<8x256xf32, #tpu.memory_space<vmem>> -> memref<1x256xf32, #tpu.memory_space<vmem>>
    %258 = tpu.memref_squeeze %257 : memref<1x256xf32, #tpu.memory_space<vmem>> -> memref<256xf32, #tpu.memory_space<vmem>>
    %c0_i32_141 = arith.constant 0 : i32
    %259 = tpu.memref_slice %arg16[%148, %c0_i32_141] : memref<16x256xf32, #tpu.memory_space<any>> -> memref<1x256xf32, #tpu.memory_space<any>>
    %260 = tpu.memref_squeeze %259 : memref<1x256xf32, #tpu.memory_space<any>> -> memref<256xf32, #tpu.memory_space<any>>
    %261 = tpu.memref_slice %arg19[%c1_i32_138, %c1_i32_139] : memref<2x8x!tpu.dma_semaphore, #tpu.memory_space<semaphore_mem>> -> memref<1x1x!tpu.dma_semaphore, #tpu.memory_space<semaphore_mem>>
    %262 = tpu.memref_squeeze %261 : memref<1x1x!tpu.dma_semaphore, #tpu.memory_space<semaphore_mem>> -> memref<!tpu.dma_semaphore, #tpu.memory_space<semaphore_mem>>
    tpu.wait_dma2 semaphore(%262 : memref<!tpu.dma_semaphore, #tpu.memory_space<semaphore_mem>>) src(%258 : memref<256xf32, #tpu.memory_space<vmem>>) dst(%260 : memref<256xf32, #tpu.memory_space<any>>)
    %c2_i32_142 = arith.constant 2 : i32
    %c0_i32_143 = arith.constant 0 : i32
    %c2_i32_144 = arith.constant 2 : i32
    %c0_i32_145 = arith.constant 0 : i32
    %263 = tpu.memref_slice %arg17[%c2_i32_142, %c0_i32_145] : memref<8x256xf32, #tpu.memory_space<vmem>> -> memref<1x256xf32, #tpu.memory_space<vmem>>
    %264 = tpu.memref_squeeze %263 : memref<1x256xf32, #tpu.memory_space<vmem>> -> memref<256xf32, #tpu.memory_space<vmem>>
    %c0_i32_146 = arith.constant 0 : i32
    %265 = tpu.memref_slice %arg15[%161, %c0_i32_146] : memref<16x256xf32, #tpu.memory_space<any>> -> memref<1x256xf32, #tpu.memory_space<any>>
    %266 = tpu.memref_squeeze %265 : memref<1x256xf32, #tpu.memory_space<any>> -> memref<256xf32, #tpu.memory_space<any>>
    %267 = tpu.memref_slice %arg19[%c0_i32_143, %c2_i32_144] : memref<2x8x!tpu.dma_semaphore, #tpu.memory_space<semaphore_mem>> -> memref<1x1x!tpu.dma_semaphore, #tpu.memory_space<semaphore_mem>>
    %268 = tpu.memref_squeeze %267 : memref<1x1x!tpu.dma_semaphore, #tpu.memory_space<semaphore_mem>> -> memref<!tpu.dma_semaphore, #tpu.memory_space<semaphore_mem>>
    tpu.wait_dma2 semaphore(%268 : memref<!tpu.dma_semaphore, #tpu.memory_space<semaphore_mem>>) src(%264 : memref<256xf32, #tpu.memory_space<vmem>>) dst(%266 : memref<256xf32, #tpu.memory_space<any>>)
    %c2_i32_147 = arith.constant 2 : i32
    %c1_i32_148 = arith.constant 1 : i32
    %c2_i32_149 = arith.constant 2 : i32
    %c0_i32_150 = arith.constant 0 : i32
    %269 = tpu.memref_slice %arg18[%c2_i32_147, %c0_i32_150] : memref<8x256xf32, #tpu.memory_space<vmem>> -> memref<1x256xf32, #tpu.memory_space<vmem>>
    %270 = tpu.memref_squeeze %269 : memref<1x256xf32, #tpu.memory_space<vmem>> -> memref<256xf32, #tpu.memory_space<vmem>>
    %c0_i32_151 = arith.constant 0 : i32
    %271 = tpu.memref_slice %arg16[%161, %c0_i32_151] : memref<16x256xf32, #tpu.memory_space<any>> -> memref<1x256xf32, #tpu.memory_space<any>>
    %272 = tpu.memref_squeeze %271 : memref<1x256xf32, #tpu.memory_space<any>> -> memref<256xf32, #tpu.memory_space<any>>
    %273 = tpu.memref_slice %arg19[%c1_i32_148, %c2_i32_149] : memref<2x8x!tpu.dma_semaphore, #tpu.memory_space<semaphore_mem>> -> memref<1x1x!tpu.dma_semaphore, #tpu.memory_space<semaphore_mem>>
    %274 = tpu.memref_squeeze %273 : memref<1x1x!tpu.dma_semaphore, #tpu.memory_space<semaphore_mem>> -> memref<!tpu.dma_semaphore, #tpu.memory_space<semaphore_mem>>
    tpu.wait_dma2 semaphore(%274 : memref<!tpu.dma_semaphore, #tpu.memory_space<semaphore_mem>>) src(%270 : memref<256xf32, #tpu.memory_space<vmem>>) dst(%272 : memref<256xf32, #tpu.memory_space<any>>)
    %c3_i32_152 = arith.constant 3 : i32
    %c0_i32_153 = arith.constant 0 : i32
    %c3_i32_154 = arith.constant 3 : i32
    %c0_i32_155 = arith.constant 0 : i32
    %275 = tpu.memref_slice %arg17[%c3_i32_152, %c0_i32_155] : memref<8x256xf32, #tpu.memory_space<vmem>> -> memref<1x256xf32, #tpu.memory_space<vmem>>
    %276 = tpu.memref_squeeze %275 : memref<1x256xf32, #tpu.memory_space<vmem>> -> memref<256xf32, #tpu.memory_space<vmem>>
    %c0_i32_156 = arith.constant 0 : i32
    %277 = tpu.memref_slice %arg15[%174, %c0_i32_156] : memref<16x256xf32, #tpu.memory_space<any>> -> memref<1x256xf32, #tpu.memory_space<any>>
    %278 = tpu.memref_squeeze %277 : memref<1x256xf32, #tpu.memory_space<any>> -> memref<256xf32, #tpu.memory_space<any>>
    %279 = tpu.memref_slice %arg19[%c0_i32_153, %c3_i32_154] : memref<2x8x!tpu.dma_semaphore, #tpu.memory_space<semaphore_mem>> -> memref<1x1x!tpu.dma_semaphore, #tpu.memory_space<semaphore_mem>>
    %280 = tpu.memref_squeeze %279 : memref<1x1x!tpu.dma_semaphore, #tpu.memory_space<semaphore_mem>> -> memref<!tpu.dma_semaphore, #tpu.memory_space<semaphore_mem>>
    tpu.wait_dma2 semaphore(%280 : memref<!tpu.dma_semaphore, #tpu.memory_space<semaphore_mem>>) src(%276 : memref<256xf32, #tpu.memory_space<vmem>>) dst(%278 : memref<256xf32, #tpu.memory_space<any>>)
    %c3_i32_157 = arith.constant 3 : i32
    %c1_i32_158 = arith.constant 1 : i32
    %c3_i32_159 = arith.constant 3 : i32
    %c0_i32_160 = arith.constant 0 : i32
    %281 = tpu.memref_slice %arg18[%c3_i32_157, %c0_i32_160] : memref<8x256xf32, #tpu.memory_space<vmem>> -> memref<1x256xf32, #tpu.memory_space<vmem>>
    %282 = tpu.memref_squeeze %281 : memref<1x256xf32, #tpu.memory_space<vmem>> -> memref<256xf32, #tpu.memory_space<vmem>>
    %c0_i32_161 = arith.constant 0 : i32
    %283 = tpu.memref_slice %arg16[%174, %c0_i32_161] : memref<16x256xf32, #tpu.memory_space<any>> -> memref<1x256xf32, #tpu.memory_space<any>>
    %284 = tpu.memref_squeeze %283 : memref<1x256xf32, #tpu.memory_space<any>> -> memref<256xf32, #tpu.memory_space<any>>
    %285 = tpu.memref_slice %arg19[%c1_i32_158, %c3_i32_159] : memref<2x8x!tpu.dma_semaphore, #tpu.memory_space<semaphore_mem>> -> memref<1x1x!tpu.dma_semaphore, #tpu.memory_space<semaphore_mem>>
    %286 = tpu.memref_squeeze %285 : memref<1x1x!tpu.dma_semaphore, #tpu.memory_space<semaphore_mem>> -> memref<!tpu.dma_semaphore, #tpu.memory_space<semaphore_mem>>
    tpu.wait_dma2 semaphore(%286 : memref<!tpu.dma_semaphore, #tpu.memory_space<semaphore_mem>>) src(%282 : memref<256xf32, #tpu.memory_space<vmem>>) dst(%284 : memref<256xf32, #tpu.memory_space<any>>)
    %c4_i32_162 = arith.constant 4 : i32
    %c0_i32_163 = arith.constant 0 : i32
    %c4_i32_164 = arith.constant 4 : i32
    %c0_i32_165 = arith.constant 0 : i32
    %287 = tpu.memref_slice %arg17[%c4_i32_162, %c0_i32_165] : memref<8x256xf32, #tpu.memory_space<vmem>> -> memref<1x256xf32, #tpu.memory_space<vmem>>
    %288 = tpu.memref_squeeze %287 : memref<1x256xf32, #tpu.memory_space<vmem>> -> memref<256xf32, #tpu.memory_space<vmem>>
    %c0_i32_166 = arith.constant 0 : i32
    %289 = tpu.memref_slice %arg15[%187, %c0_i32_166] : memref<16x256xf32, #tpu.memory_space<any>> -> memref<1x256xf32, #tpu.memory_space<any>>
    %290 = tpu.memref_squeeze %289 : memref<1x256xf32, #tpu.memory_space<any>> -> memref<256xf32, #tpu.memory_space<any>>
    %291 = tpu.memref_slice %arg19[%c0_i32_163, %c4_i32_164] : memref<2x8x!tpu.dma_semaphore, #tpu.memory_space<semaphore_mem>> -> memref<1x1x!tpu.dma_semaphore, #tpu.memory_space<semaphore_mem>>
    %292 = tpu.memref_squeeze %291 : memref<1x1x!tpu.dma_semaphore, #tpu.memory_space<semaphore_mem>> -> memref<!tpu.dma_semaphore, #tpu.memory_space<semaphore_mem>>
    tpu.wait_dma2 semaphore(%292 : memref<!tpu.dma_semaphore, #tpu.memory_space<semaphore_mem>>) src(%288 : memref<256xf32, #tpu.memory_space<vmem>>) dst(%290 : memref<256xf32, #tpu.memory_space<any>>)
    %c4_i32_167 = arith.constant 4 : i32
    %c1_i32_168 = arith.constant 1 : i32
    %c4_i32_169 = arith.constant 4 : i32
    %c0_i32_170 = arith.constant 0 : i32
    %293 = tpu.memref_slice %arg18[%c4_i32_167, %c0_i32_170] : memref<8x256xf32, #tpu.memory_space<vmem>> -> memref<1x256xf32, #tpu.memory_space<vmem>>
    %294 = tpu.memref_squeeze %293 : memref<1x256xf32, #tpu.memory_space<vmem>> -> memref<256xf32, #tpu.memory_space<vmem>>
    %c0_i32_171 = arith.constant 0 : i32
    %295 = tpu.memref_slice %arg16[%187, %c0_i32_171] : memref<16x256xf32, #tpu.memory_space<any>> -> memref<1x256xf32, #tpu.memory_space<any>>
    %296 = tpu.memref_squeeze %295 : memref<1x256xf32, #tpu.memory_space<any>> -> memref<256xf32, #tpu.memory_space<any>>
    %297 = tpu.memref_slice %arg19[%c1_i32_168, %c4_i32_169] : memref<2x8x!tpu.dma_semaphore, #tpu.memory_space<semaphore_mem>> -> memref<1x1x!tpu.dma_semaphore, #tpu.memory_space<semaphore_mem>>
    %298 = tpu.memref_squeeze %297 : memref<1x1x!tpu.dma_semaphore, #tpu.memory_space<semaphore_mem>> -> memref<!tpu.dma_semaphore, #tpu.memory_space<semaphore_mem>>
    tpu.wait_dma2 semaphore(%298 : memref<!tpu.dma_semaphore, #tpu.memory_space<semaphore_mem>>) src(%294 : memref<256xf32, #tpu.memory_space<vmem>>) dst(%296 : memref<256xf32, #tpu.memory_space<any>>)
    %c5_i32_172 = arith.constant 5 : i32
    %c0_i32_173 = arith.constant 0 : i32
    %c5_i32_174 = arith.constant 5 : i32
    %c0_i32_175 = arith.constant 0 : i32
    %299 = tpu.memref_slice %arg17[%c5_i32_172, %c0_i32_175] : memref<8x256xf32, #tpu.memory_space<vmem>> -> memref<1x256xf32, #tpu.memory_space<vmem>>
    %300 = tpu.memref_squeeze %299 : memref<1x256xf32, #tpu.memory_space<vmem>> -> memref<256xf32, #tpu.memory_space<vmem>>
    %c0_i32_176 = arith.constant 0 : i32
    %301 = tpu.memref_slice %arg15[%200, %c0_i32_176] : memref<16x256xf32, #tpu.memory_space<any>> -> memref<1x256xf32, #tpu.memory_space<any>>
    %302 = tpu.memref_squeeze %301 : memref<1x256xf32, #tpu.memory_space<any>> -> memref<256xf32, #tpu.memory_space<any>>
    %303 = tpu.memref_slice %arg19[%c0_i32_173, %c5_i32_174] : memref<2x8x!tpu.dma_semaphore, #tpu.memory_space<semaphore_mem>> -> memref<1x1x!tpu.dma_semaphore, #tpu.memory_space<semaphore_mem>>
    %304 = tpu.memref_squeeze %303 : memref<1x1x!tpu.dma_semaphore, #tpu.memory_space<semaphore_mem>> -> memref<!tpu.dma_semaphore, #tpu.memory_space<semaphore_mem>>
    tpu.wait_dma2 semaphore(%304 : memref<!tpu.dma_semaphore, #tpu.memory_space<semaphore_mem>>) src(%300 : memref<256xf32, #tpu.memory_space<vmem>>) dst(%302 : memref<256xf32, #tpu.memory_space<any>>)
    %c5_i32_177 = arith.constant 5 : i32
    %c1_i32_178 = arith.constant 1 : i32
    %c5_i32_179 = arith.constant 5 : i32
    %c0_i32_180 = arith.constant 0 : i32
    %305 = tpu.memref_slice %arg18[%c5_i32_177, %c0_i32_180] : memref<8x256xf32, #tpu.memory_space<vmem>> -> memref<1x256xf32, #tpu.memory_space<vmem>>
    %306 = tpu.memref_squeeze %305 : memref<1x256xf32, #tpu.memory_space<vmem>> -> memref<256xf32, #tpu.memory_space<vmem>>
    %c0_i32_181 = arith.constant 0 : i32
    %307 = tpu.memref_slice %arg16[%200, %c0_i32_181] : memref<16x256xf32, #tpu.memory_space<any>> -> memref<1x256xf32, #tpu.memory_space<any>>
    %308 = tpu.memref_squeeze %307 : memref<1x256xf32, #tpu.memory_space<any>> -> memref<256xf32, #tpu.memory_space<any>>
    %309 = tpu.memref_slice %arg19[%c1_i32_178, %c5_i32_179] : memref<2x8x!tpu.dma_semaphore, #tpu.memory_space<semaphore_mem>> -> memref<1x1x!tpu.dma_semaphore, #tpu.memory_space<semaphore_mem>>
    %310 = tpu.memref_squeeze %309 : memref<1x1x!tpu.dma_semaphore, #tpu.memory_space<semaphore_mem>> -> memref<!tpu.dma_semaphore, #tpu.memory_space<semaphore_mem>>
    tpu.wait_dma2 semaphore(%310 : memref<!tpu.dma_semaphore, #tpu.memory_space<semaphore_mem>>) src(%306 : memref<256xf32, #tpu.memory_space<vmem>>) dst(%308 : memref<256xf32, #tpu.memory_space<any>>)
    %c6_i32_182 = arith.constant 6 : i32
    %c0_i32_183 = arith.constant 0 : i32
    %c6_i32_184 = arith.constant 6 : i32
    %c0_i32_185 = arith.constant 0 : i32
    %311 = tpu.memref_slice %arg17[%c6_i32_182, %c0_i32_185] : memref<8x256xf32, #tpu.memory_space<vmem>> -> memref<1x256xf32, #tpu.memory_space<vmem>>
    %312 = tpu.memref_squeeze %311 : memref<1x256xf32, #tpu.memory_space<vmem>> -> memref<256xf32, #tpu.memory_space<vmem>>
    %c0_i32_186 = arith.constant 0 : i32
    %313 = tpu.memref_slice %arg15[%213, %c0_i32_186] : memref<16x256xf32, #tpu.memory_space<any>> -> memref<1x256xf32, #tpu.memory_space<any>>
    %314 = tpu.memref_squeeze %313 : memref<1x256xf32, #tpu.memory_space<any>> -> memref<256xf32, #tpu.memory_space<any>>
    %315 = tpu.memref_slice %arg19[%c0_i32_183, %c6_i32_184] : memref<2x8x!tpu.dma_semaphore, #tpu.memory_space<semaphore_mem>> -> memref<1x1x!tpu.dma_semaphore, #tpu.memory_space<semaphore_mem>>
    %316 = tpu.memref_squeeze %315 : memref<1x1x!tpu.dma_semaphore, #tpu.memory_space<semaphore_mem>> -> memref<!tpu.dma_semaphore, #tpu.memory_space<semaphore_mem>>
    tpu.wait_dma2 semaphore(%316 : memref<!tpu.dma_semaphore, #tpu.memory_space<semaphore_mem>>) src(%312 : memref<256xf32, #tpu.memory_space<vmem>>) dst(%314 : memref<256xf32, #tpu.memory_space<any>>)
    %c6_i32_187 = arith.constant 6 : i32
    %c1_i32_188 = arith.constant 1 : i32
    %c6_i32_189 = arith.constant 6 : i32
    %c0_i32_190 = arith.constant 0 : i32
    %317 = tpu.memref_slice %arg18[%c6_i32_187, %c0_i32_190] : memref<8x256xf32, #tpu.memory_space<vmem>> -> memref<1x256xf32, #tpu.memory_space<vmem>>
    %318 = tpu.memref_squeeze %317 : memref<1x256xf32, #tpu.memory_space<vmem>> -> memref<256xf32, #tpu.memory_space<vmem>>
    %c0_i32_191 = arith.constant 0 : i32
    %319 = tpu.memref_slice %arg16[%213, %c0_i32_191] : memref<16x256xf32, #tpu.memory_space<any>> -> memref<1x256xf32, #tpu.memory_space<any>>
    %320 = tpu.memref_squeeze %319 : memref<1x256xf32, #tpu.memory_space<any>> -> memref<256xf32, #tpu.memory_space<any>>
    %321 = tpu.memref_slice %arg19[%c1_i32_188, %c6_i32_189] : memref<2x8x!tpu.dma_semaphore, #tpu.memory_space<semaphore_mem>> -> memref<1x1x!tpu.dma_semaphore, #tpu.memory_space<semaphore_mem>>
    %322 = tpu.memref_squeeze %321 : memref<1x1x!tpu.dma_semaphore, #tpu.memory_space<semaphore_mem>> -> memref<!tpu.dma_semaphore, #tpu.memory_space<semaphore_mem>>
    tpu.wait_dma2 semaphore(%322 : memref<!tpu.dma_semaphore, #tpu.memory_space<semaphore_mem>>) src(%318 : memref<256xf32, #tpu.memory_space<vmem>>) dst(%320 : memref<256xf32, #tpu.memory_space<any>>)
    %c7_i32_192 = arith.constant 7 : i32
    %c0_i32_193 = arith.constant 0 : i32
    %c7_i32_194 = arith.constant 7 : i32
    %c0_i32_195 = arith.constant 0 : i32
    %323 = tpu.memref_slice %arg17[%c7_i32_192, %c0_i32_195] : memref<8x256xf32, #tpu.memory_space<vmem>> -> memref<1x256xf32, #tpu.memory_space<vmem>>
    %324 = tpu.memref_squeeze %323 : memref<1x256xf32, #tpu.memory_space<vmem>> -> memref<256xf32, #tpu.memory_space<vmem>>
    %c0_i32_196 = arith.constant 0 : i32
    %325 = tpu.memref_slice %arg15[%226, %c0_i32_196] : memref<16x256xf32, #tpu.memory_space<any>> -> memref<1x256xf32, #tpu.memory_space<any>>
    %326 = tpu.memref_squeeze %325 : memref<1x256xf32, #tpu.memory_space<any>> -> memref<256xf32, #tpu.memory_space<any>>
    %327 = tpu.memref_slice %arg19[%c0_i32_193, %c7_i32_194] : memref<2x8x!tpu.dma_semaphore, #tpu.memory_space<semaphore_mem>> -> memref<1x1x!tpu.dma_semaphore, #tpu.memory_space<semaphore_mem>>
    %328 = tpu.memref_squeeze %327 : memref<1x1x!tpu.dma_semaphore, #tpu.memory_space<semaphore_mem>> -> memref<!tpu.dma_semaphore, #tpu.memory_space<semaphore_mem>>
    tpu.wait_dma2 semaphore(%328 : memref<!tpu.dma_semaphore, #tpu.memory_space<semaphore_mem>>) src(%324 : memref<256xf32, #tpu.memory_space<vmem>>) dst(%326 : memref<256xf32, #tpu.memory_space<any>>)
    %c7_i32_197 = arith.constant 7 : i32
    %c1_i32_198 = arith.constant 1 : i32
    %c7_i32_199 = arith.constant 7 : i32
    %c0_i32_200 = arith.constant 0 : i32
    %329 = tpu.memref_slice %arg18[%c7_i32_197, %c0_i32_200] : memref<8x256xf32, #tpu.memory_space<vmem>> -> memref<1x256xf32, #tpu.memory_space<vmem>>
    %330 = tpu.memref_squeeze %329 : memref<1x256xf32, #tpu.memory_space<vmem>> -> memref<256xf32, #tpu.memory_space<vmem>>
    %c0_i32_201 = arith.constant 0 : i32
    %331 = tpu.memref_slice %arg16[%226, %c0_i32_201] : memref<16x256xf32, #tpu.memory_space<any>> -> memref<1x256xf32, #tpu.memory_space<any>>
    %332 = tpu.memref_squeeze %331 : memref<1x256xf32, #tpu.memory_space<any>> -> memref<256xf32, #tpu.memory_space<any>>
    %333 = tpu.memref_slice %arg19[%c1_i32_198, %c7_i32_199] : memref<2x8x!tpu.dma_semaphore, #tpu.memory_space<semaphore_mem>> -> memref<1x1x!tpu.dma_semaphore, #tpu.memory_space<semaphore_mem>>
    %334 = tpu.memref_squeeze %333 : memref<1x1x!tpu.dma_semaphore, #tpu.memory_space<semaphore_mem>> -> memref<!tpu.dma_semaphore, #tpu.memory_space<semaphore_mem>>
    tpu.wait_dma2 semaphore(%334 : memref<!tpu.dma_semaphore, #tpu.memory_space<semaphore_mem>>) src(%330 : memref<256xf32, #tpu.memory_space<vmem>>) dst(%332 : memref<256xf32, #tpu.memory_space<any>>)
    return
  }
  func.func @transform_0(%arg0: i32) -> (i32, i32) {
    %c0_i32 = arith.constant 0 : i32
    %c0_i32_0 = arith.constant 0 : i32
    %c0_i32_1 = arith.constant 0 : i32
    return %c0_i32, %c0_i32_0 : i32, i32
  }
  func.func @transform_1(%arg0: i32) -> (i32, i32) {
    %c0_i32 = arith.constant 0 : i32
    %c0_i32_0 = arith.constant 0 : i32
    %c0_i32_1 = arith.constant 0 : i32
    return %c0_i32, %c0_i32_0 : i32, i32
  }
  func.func @transform_2(%arg0: i32) -> (i32, i32) {
    %c0_i32 = arith.constant 0 : i32
    %c0_i32_0 = arith.constant 0 : i32
    %c0_i32_1 = arith.constant 0 : i32
    return %c0_i32, %c0_i32_0 : i32, i32
  }
  func.func @transform_3(%arg0: i32) -> (i32, i32) {
    %c0_i32 = arith.constant 0 : i32
    %c0_i32_0 = arith.constant 0 : i32
    %c0_i32_1 = arith.constant 0 : i32
    return %c0_i32, %c0_i32_0 : i32, i32
  }
  func.func @transform_4(%arg0: i32) -> (i32, i32) {
    %c0_i32 = arith.constant 0 : i32
    %c0_i32_0 = arith.constant 0 : i32
    %c0_i32_1 = arith.constant 0 : i32
    return %c0_i32, %c0_i32_0 : i32, i32
  }
  func.func @transform_5(%arg0: i32) -> (i32, i32) {
    %c0_i32 = arith.constant 0 : i32
    %c0_i32_0 = arith.constant 0 : i32
    %c0_i32_1 = arith.constant 0 : i32
    return %c0_i32, %c0_i32_0 : i32, i32
  }
  func.func @transform_6(%arg0: i32) -> (i32, i32) {
    %c0_i32 = arith.constant 0 : i32
    %c0_i32_0 = arith.constant 0 : i32
    %c0_i32_1 = arith.constant 0 : i32
    return %c0_i32, %c0_i32_0 : i32, i32
  }
  func.func @transform_7(%arg0: i32) -> (i32, i32) {
    %c0_i32 = arith.constant 0 : i32
    %c0_i32_0 = arith.constant 0 : i32
    %c0_i32_1 = arith.constant 0 : i32
    return %c0_i32, %c0_i32_0 : i32, i32
  }
  func.func @transform_8(%arg0: i32) -> (i32, i32) {
    %c0_i32 = arith.constant 0 : i32
    %c0_i32_0 = arith.constant 0 : i32
    %c0_i32_1 = arith.constant 0 : i32
    return %c0_i32, %c0_i32_0 : i32, i32
  }
  func.func @transform_9(%arg0: i32) -> i32 {
    %c0_i32 = arith.constant 0 : i32
    %c0_i32_0 = arith.constant 0 : i32
    return %c0_i32 : i32
  }
  func.func @transform_12(%arg0: i32) -> (i32, i32) {
    %c0_i32 = arith.constant 0 : i32
    %c0_i32_0 = arith.constant 0 : i32
    %c0_i32_1 = arith.constant 0 : i32
    return %c0_i32, %c0_i32_0 : i32, i32
  }
  func.func @transform_13(%arg0: i32) -> (i32, i32) {
    %c0_i32 = arith.constant 0 : i32
    %c0_i32_0 = arith.constant 0 : i32
    %c0_i32_1 = arith.constant 0 : i32
    return %c0_i32, %c0_i32_0 : i32, i32
  }
}

</mosaic_0001>

<llo_original>
// kernel: neg.1
$region0: #{neg.1}
  #allocation0 [shape = 's32[1]{0}', space=sflag, size = 0x4, scoped, tag = 'scoped memory for neg.1']
  %s0 = inlined_call_operand.vmem [shape: f32[8,64], index: 0, kind: input, shape index: {}]
  %s1 = inlined_call_operand.vmem [shape: f32[8,64], index: 1, kind: output, shape index: {}]
  %v2 = vld [vmem:[%s0] sm:$0xff]
  %3 = xla_tuple %v2
  %4 = xla_tuple %3
  %v5 = vxor.u32 %v2, 2147483648
  %6 = xla_tuple %v5
  %7 = vst [vmem:[%s1] sm:$0xff] %v5

// kernel: flash_llama_layer.1
$region0: #{flash_llama_layer.1}
  #allocation0 [shape = 'u32[]', space=smem, size = 0x4, offset = 0x4, fixed_abs, tag = 'smem constant byte address 0x4 - core index']
  #allocation1 [shape = 'u32[144,128]{1,0:T(1,128)}', space=vmem, size = 0x12000, scoped, tag = 'internal scratch']
  #allocation2 [shape = 'f32[8,256]{1,0:T(8,128)}', space=vmem, size = 0x2000, scoped, tag = 'scratch operand']
  #allocation3 [shape = 'f32[8,256]{1,0:T(8,128)}', space=vmem, size = 0x2000, scoped, tag = 'scratch operand']
  #allocation4 [shape = 's32[16]{0}', space=sflag, size = 0x40, scoped, tag = 'scratch operand']
  #allocation18 [shape = 's32[]', space=sflag, size = 0x4, offset = 0, fixed_abs, tag = 'sflag constant byte address 0x0 - dummy sync flag']
  #allocation19 [shape = 's32[]', space=sflag, size = 0x4, offset = 0, fixed_abs, tag = 'sflag constant byte address 0x0 - dummy sync flag']
  #allocation20 [shape = 's32[]', space=sflag, size = 0x4, offset = 0, fixed_abs, tag = 'sflag constant byte address 0x0 - dummy sync flag']
  #allocation21 [shape = 's32[]', space=sflag, size = 0x4, offset = 0, fixed_abs, tag = 'sflag constant byte address 0x0 - dummy sync flag']
  #allocation22 [shape = 's32[]', space=sflag, size = 0x4, offset = 0, fixed_abs, tag = 'sflag constant byte address 0x0 - dummy sync flag']
  #allocation23 [shape = 's32[]', space=sflag, size = 0x4, offset = 0, fixed_abs, tag = 'sflag constant byte address 0x0 - dummy sync flag']
  #allocation24 [shape = 's32[]', space=sflag, size = 0x4, offset = 0, fixed_abs, tag = 'sflag constant byte address 0x0 - dummy sync flag']
  #allocation25 [shape = 's32[]', space=sflag, size = 0x4, offset = 0, fixed_abs, tag = 'sflag constant byte address 0x0 - dummy sync flag']
  #allocation26 [shape = 's32[]', space=sflag, size = 0x4, offset = 0, fixed_abs, tag = 'sflag constant byte address 0x0 - dummy sync flag']
  #allocation27 [shape = 's32[]', space=sflag, size = 0x4, offset = 0, fixed_abs, tag = 'sflag constant byte address 0x0 - dummy sync flag']
  #allocation28 [shape = 's32[]', space=sflag, size = 0x4, offset = 0, fixed_abs, tag = 'sflag constant byte address 0x0 - dummy sync flag']
  #allocation29 [shape = 's32[]', space=sflag, size = 0x4, offset = 0, fixed_abs, tag = 'sflag constant byte address 0x0 - dummy sync flag']
  #allocation30 [shape = 's32[]', space=sflag, size = 0x4, offset = 0, fixed_abs, tag = 'sflag constant byte address 0x0 - dummy sync flag']
  #allocation31 [shape = 's32[]', space=sflag, size = 0x4, offset = 0, fixed_abs, tag = 'sflag constant byte address 0x0 - dummy sync flag']
  #allocation32 [shape = 's32[]', space=sflag, size = 0x4, offset = 0, fixed_abs, tag = 'sflag constant byte address 0x0 - dummy sync flag']
  #allocation33 [shape = 's32[]', space=sflag, size = 0x4, offset = 0, fixed_abs, tag = 'sflag constant byte address 0x0 - dummy sync flag']
  %s0 = inlined_call_operand.vmem [shape: f32[8,256], index: 0, kind: input, shape index: {}]
  %s1 = inlined_call_operand.vmem [shape: f32[8,256], index: 1, kind: input, shape index: {}]
  %s2 = inlined_call_operand.vmem [shape: f32[8,256], index: 2, kind: input, shape index: {}]
  %s3 = inlined_call_operand.vmem [shape: f32[1,256], index: 3, kind: input, shape index: {}]
  %s4 = inlined_call_operand.hbm [shape: bf16[256,768], index: 4, kind: input, shape index: {}]
  %s5 = inlined_call_operand.hbm [shape: bf16[256,256], index: 5, kind: input, shape index: {}]
  %s6 = inlined_call_operand.vmem [shape: f32[1,256], index: 6, kind: input, shape index: {}]
  %s7 = inlined_call_operand.hbm [shape: bf16[256,1024], index: 7, kind: input, shape index: {}]
  %s8 = inlined_call_operand.hbm [shape: bf16[512,256], index: 8, kind: input, shape index: {}]
  %s9 = inlined_call_operand.vmem [shape: s32[8], index: 9, kind: input, shape index: {}]
  %s10 = inlined_call_operand.hbm [shape: f32[16,256], index: 10, kind: input, shape index: {}, may-alias: {10,14}]
  %s11 = inlined_call_operand.hbm [shape: f32[16,256], index: 11, kind: input, shape index: {}, may-alias: {11,15}]
  %s12 = inlined_call_operand.hbm [shape: f32[8,256], index: 12, kind: output, shape index: {0}]
  %s13 = inlined_call_operand.hbm [shape: f32[8,256], index: 13, kind: output, shape index: {1}]
  %s14 = inlined_call_operand.hbm [shape: f32[16,256], index: 14, kind: output, shape index: {2}, may-alias: {10,14}]
  %s15 = inlined_call_operand.hbm [shape: f32[16,256], index: 15, kind: output, shape index: {3}, may-alias: {11,15}]
  %16 = xla_tuple %s12, %s13, %s14, %s15
  %s17 = sld [smem:[#allocation0]]
  $region78: #{flash_llama_layer.1} parent=0
    _
  %s19 = ssub.s32 1, %s17
  %s20 = scalar_select 0, %s19, %s17
  $region1: #{flash_llama_layer.1} parent=0
    #allocation5 [shape = 'u8[393216]{0}', space=vmem, size = 0x60000, scoped, tag = 'input window, operand 4, single buffered']
    #allocation6 [shape = 's32[1]{0}', space=sflag, size = 0x4, scoped, tag = 'scoped memory for flash_llama_layer.1']
    #allocation7 [shape = 's32[1]{0}', space=sflag, size = 0x4, scoped, tag = 'scoped memory for flash_llama_layer.1']
    #allocation8 [shape = 's32[1]{0}', space=sflag, size = 0x4, scoped, tag = 'scoped memory for flash_llama_layer.1']
    #allocation9 [shape = 'u8[131072]{0}', space=vmem, size = 0x20000, scoped, tag = 'input window, operand 5, single buffered']
    #allocation10 [shape = 's32[1]{0}', space=sflag, size = 0x4, scoped, tag = 'scoped memory for flash_llama_layer.1']
    #allocation11 [shape = 'u8[524288]{0}', space=vmem, size = 0x80000, scoped, tag = 'input window, operand 7, single buffered']
    #allocation12 [shape = 'u8[262144]{0}', space=vmem, size = 0x40000, scoped, tag = 'input window, operand 8, single buffered']
    #allocation13 [shape = 's32[1]{0}', space=sflag, size = 0x4, scoped, tag = 'scoped memory for flash_llama_layer.1']
    #allocation14 [shape = 'u8[512]{0}', space=smem, size = 0x200, scoped, tag = 'input window, operand 9, single buffered']
    #allocation15 [shape = 'u8[8192]{0}', space=vmem, size = 0x2000, scoped, tag = 'output window, operand 0, single buffered']
    #allocation16 [shape = 'u8[8192]{0}', space=vmem, size = 0x2000, scoped, tag = 'output window, operand 1, single buffered']
    #allocation17 [shape = 's32[1]{0}', space=sflag, size = 0x4, scoped, tag = 'scoped memory for flash_llama_layer.1']
    %21 = vsyncpa [#allocation6], 0
    %22 = vsyncpa [#allocation10], 0
    %23 = vsyncpa [#allocation13], 0
    %24 = vsyncpa [#allocation8], 0
    %25 = vsyncpa [#allocation7], 0
    %26 = vsyncpa [#allocation17], 0
    // Predicated region
    $region2: #{flash_llama_layer.1} parent=1 // pred_check
      _
    $region3: #{flash_llama_layer.1} parent=1 // pred_check_branch
      %28 = sbr.rel (0) target = $region5
    $region4: #{flash_llama_layer.1} parent=1 // pred_region
      _
    $region5: #{flash_llama_layer.1} parent=1 // pred_fallthru
      _
    // Predicated region
    $region6: #{flash_llama_layer.1} parent=1 // pred_check
      _
    $region7: #{flash_llama_layer.1} parent=1 // pred_check_branch
      %30 = sbr.rel (0) target = $region9
    $region8: #{flash_llama_layer.1} parent=1 // pred_region
      _
    $region9: #{flash_llama_layer.1} parent=1 // pred_fallthru
      _
    // Predicated region
    $region10: #{flash_llama_layer.1} parent=1 // pred_check
      _
    $region11: #{flash_llama_layer.1} parent=1 // pred_check_branch
      %32 = sbr.rel (0) target = $region13
    $region12: #{flash_llama_layer.1} parent=1 // pred_region
      _
    $region13: #{flash_llama_layer.1} parent=1 // pred_fallthru
      _
    // Predicated region
    $region14: #{flash_llama_layer.1} parent=1 // pred_check
      _
    $region15: #{flash_llama_layer.1} parent=1 // pred_check_branch
      %34 = sbr.rel (0) target = $region17
    $region16: #{flash_llama_layer.1} parent=1 // pred_region
      _
    $region17: #{flash_llama_layer.1} parent=1 // pred_fallthru
      _
    // Predicated region
    $region18: #{flash_llama_layer.1} parent=1 // pred_check
      _
    $region19: #{flash_llama_layer.1} parent=1 // pred_check_branch
      %36 = sbr.rel (0) target = $region21
    $region20: #{flash_llama_layer.1} parent=1 // pred_region
      %s38 = ssub.s32 12288, 12288
      %39 = vsyncadd [#allocation6], %s38
      %s40 = sshll.u32 [#allocation5], 4
      %s41 = int_to_ptr.vmem [resolvable:$true] %s40
      %46 = dma.hbm_to_vmem [thread:$0]  %s4, 12288, %s41, [#allocation6], 384, 384, 24
    $region21: #{flash_llama_layer.1} parent=1 // pred_fallthru
      _
    // Predicated region
    $region22: #{flash_llama_layer.1} parent=1 // pred_check
      _
    $region23: #{flash_llama_layer.1} parent=1 // pred_check_branch
      %48 = sbr.rel (0) target = $region25
    $region24: #{flash_llama_layer.1} parent=1 // pred_region
      %s50 = ssub.s32 4096, 4096
      %51 = vsyncadd [#allocation10], %s50
      %s52 = sshll.u32 [#allocation9], 4
      %s53 = int_to_ptr.vmem [resolvable:$true] %s52
      %58 = dma.hbm_to_vmem [thread:$0]  %s5, 4096, %s53, [#allocation10], 128, 128, 8
    $region25: #{flash_llama_layer.1} parent=1 // pred_fallthru
      _
    // Predicated region
    $region26: #{flash_llama_layer.1} parent=1 // pred_check
      _
    $region27: #{flash_llama_layer.1} parent=1 // pred_check_branch
      %60 = sbr.rel (0) target = $region29
    $region28: #{flash_llama_layer.1} parent=1 // pred_region
      _
    $region29: #{flash_llama_layer.1} parent=1 // pred_fallthru
      _
    // Predicated region
    $region30: #{flash_llama_layer.1} parent=1 // pred_check
      _
    $region31: #{flash_llama_layer.1} parent=1 // pred_check_branch
      %62 = sbr.rel (0) target = $region33
    $region32: #{flash_llama_layer.1} parent=1 // pred_region
      %s64 = ssub.s32 16384, 16384
      %65 = vsyncadd [#allocation10], %s64
      %s66 = sshll.u32 [#allocation11], 4
      %s67 = int_to_ptr.vmem [resolvable:$true] %s66
      %72 = dma.hbm_to_vmem [thread:$0]  %s7, 16384, %s67, [#allocation10], 512, 512, 32
    $region33: #{flash_llama_layer.1} parent=1 // pred_fallthru
      _
    // Predicated region
    $region34: #{flash_llama_layer.1} parent=1 // pred_check
      _
    $region35: #{flash_llama_layer.1} parent=1 // pred_check_branch
      %74 = sbr.rel (0) target = $region37
    $region36: #{flash_llama_layer.1} parent=1 // pred_region
      %s76 = ssub.s32 8192, 8192
      %77 = vsyncadd [#allocation13], %s76
      %s78 = sshll.u32 [#allocation12], 4
      %s79 = int_to_ptr.vmem [resolvable:$true] %s78
      %84 = dma.hbm_to_vmem [thread:$0]  %s8, 8192, %s79, [#allocation13], 128, 128, 8
    $region37: #{flash_llama_layer.1} parent=1 // pred_fallthru
      _
    // Predicated region
    $region38: #{flash_llama_layer.1} parent=1 // pred_check
      _
    $region39: #{flash_llama_layer.1} parent=1 // pred_check_branch
      %86 = sbr.rel (0) target = $region41
    $region40: #{flash_llama_layer.1} parent=1 // pred_region
      %s88 = ssub.s32 16, 16
      %89 = vsyncadd [#allocation8], %s88
      %s91 = sshll.u32 %s9, 4
      %s92 = int_to_ptr.vmem [resolvable:$true] %s91
      %94 = dma.vmem_to_smem %s92, 16, [#allocation14], [#allocation8]
    $region41: #{flash_llama_layer.1} parent=1 // pred_fallthru
      _
    // Predicated region
    $region42: #{flash_llama_layer.1} parent=1 // pred_check
      _
    $region43: #{flash_llama_layer.1} parent=1 // pred_check_branch
      %96 = sbr.rel (0) target = $region45
    $region44: #{flash_llama_layer.1} parent=1 // pred_region
      %97 = dma.done [#allocation6], 12288
    $region45: #{flash_llama_layer.1} parent=1 // pred_fallthru
      _
    // Predicated region
    $region46: #{flash_llama_layer.1} parent=1 // pred_check
      _
    $region47: #{flash_llama_layer.1} parent=1 // pred_check_branch
      %99 = sbr.rel (0) target = $region49
    $region48: #{flash_llama_layer.1} parent=1 // pred_region
      %100 = dma.done [#allocation10], 4096
    $region49: #{flash_llama_layer.1} parent=1 // pred_fallthru
      _
    // Predicated region
    $region50: #{flash_llama_layer.1} parent=1 // pred_check
      _
    $region51: #{flash_llama_layer.1} parent=1 // pred_check_branch
      %102 = sbr.rel (0) target = $region53
    $region52: #{flash_llama_layer.1} parent=1 // pred_region
      %103 = dma.done [#allocation10], 16384
    $region53: #{flash_llama_layer.1} parent=1 // pred_fallthru
      _
    // Predicated region
    $region54: #{flash_llama_layer.1} parent=1 // pred_check
      _
    $region55: #{flash_llama_layer.1} parent=1 // pred_check_branch
      %105 = sbr.rel (0) target = $region57
    $region56: #{flash_llama_layer.1} parent=1 // pred_region
      %106 = dma.done [#allocation13], 8192
    $region57: #{flash_llama_layer.1} parent=1 // pred_fallthru
      _
    // Predicated region
    $region58: #{flash_llama_layer.1} parent=1 // pred_check
      _
    $region59: #{flash_llama_layer.1} parent=1 // pred_check_branch
      %108 = sbr.rel (0) target = $region61
    $region60: #{flash_llama_layer.1} parent=1 // pred_region
      %109 = dma.done [#allocation8], 16
    $region61: #{flash_llama_layer.1} parent=1 // pred_fallthru
      _
    %110 = sfence
    %v112 = vld [vmem:[%s0] sm:$0xff]
    %v113 = vld [vmem:[%s0 + $0x8] sm:$0xff]
    %v114 = vmul.f32 %v112, %v112
    %v115 = vmul.f32 %v113, %v113
    %v116 = vadd.f32 %v114, %v115
    %117 = vadd.xlane.f32.xlu0 %v116
    %v118 = vpop.xlane.xlu0 %117
    %v119 = vrcp.pop 256.0
    %v120 = vmul.f32 %v118, %v119
    %v121 = vadd.f32 %v120, 1e-06
    %v122 = vrsqrt.pop %v121
    %v123 = vmul.f32 %v112, %v122
    %v124 = vmul.f32 %v113, %v122
    %v125 = vld [vmem:[%s3] sm:$0x3]
    %v127 = vlaneseq
    %v128 = vshrl.u32 %v127, 7
    %v129 = vsub.s32 0, %v128
    %v130 = vrot.slane %v125, %v129
    %v131 = vlaneseq
    %v132 = vshrl.u32 %v131, 7
    %v133 = vsub.s32 1, %v132
    %v134 = vrot.slane %v125, %v133
    %v137 = vmul.f32 %v123, %v130
    %v138 = vmul.f32 %v124, %v134
    %v139 = vpack.c.bf16 %v137, %v137
    %v140 = vpack.c.bf16 %v138, %v138
    %v141 = vld [vmem:[#allocation5] sm:$0xff]
    %v142 = vld [vmem:[#allocation5 + $0x8] sm:$0xff]
    %v143 = vld [vmem:[#allocation5 + $0x10] sm:$0xff]
    %v144 = vld [vmem:[#allocation5 + $0x18] sm:$0xff]
    %v145 = vld [vmem:[#allocation5 + $0x20] sm:$0xff]
    %v146 = vld [vmem:[#allocation5 + $0x28] sm:$0xff]
    %v147 = vld [vmem:[#allocation5 + $0x30] sm:$0xff]
    %v148 = vld [vmem:[#allocation5 + $0x38] sm:$0xff]
    %v149 = vld [vmem:[#allocation5 + $0x40] sm:$0xff]
    %v150 = vld [vmem:[#allocation5 + $0x48] sm:$0xff]
    %v151 = vld [vmem:[#allocation5 + $0x50] sm:$0xff]
    %v152 = vld [vmem:[#allocation5 + $0x58] sm:$0xff]
    %v153 = vld [vmem:[#allocation5 + $0x60] sm:$0xff]
    %v154 = vld [vmem:[#allocation5 + $0x68] sm:$0xff]
    %v155 = vld [vmem:[#allocation5 + $0x70] sm:$0xff]
    %v156 = vld [vmem:[#allocation5 + $0x78] sm:$0xff]
    %v157 = vld [vmem:[#allocation5 + $0x80] sm:$0xff]
    %v158 = vld [vmem:[#allocation5 + $0x88] sm:$0xff]
    %v159 = vld [vmem:[#allocation5 + $0x90] sm:$0xff]
    %v160 = vld [vmem:[#allocation5 + $0x98] sm:$0xff]
    %v161 = vld [vmem:[#allocation5 + $0xa0] sm:$0xff]
    %v162 = vld [vmem:[#allocation5 + $0xa8] sm:$0xff]
    %v163 = vld [vmem:[#allocation5 + $0xb0] sm:$0xff]
    %v164 = vld [vmem:[#allocation5 + $0xb8] sm:$0xff]
    %v165 = vld [vmem:[#allocation5 + $0xc0] sm:$0xff]
    %v166 = vld [vmem:[#allocation5 + $0xc8] sm:$0xff]
    %v167 = vld [vmem:[#allocation5 + $0xd0] sm:$0xff]
    %v168 = vld [vmem:[#allocation5 + $0xd8] sm:$0xff]
    %v169 = vld [vmem:[#allocation5 + $0xe0] sm:$0xff]
    %v170 = vld [vmem:[#allocation5 + $0xe8] sm:$0xff]
    %v171 = vld [vmem:[#allocation5 + $0xf0] sm:$0xff]
    %v172 = vld [vmem:[#allocation5 + $0xf8] sm:$0xff]
    %v173 = vld [vmem:[#allocation5 + $0x100] sm:$0xff]
    %v174 = vld [vmem:[#allocation5 + $0x108] sm:$0xff]
    %v175 = vld [vmem:[#allocation5 + $0x110] sm:$0xff]
    %v176 = vld [vmem:[#allocation5 + $0x118] sm:$0xff]
    %v177 = vld [vmem:[#allocation5 + $0x120] sm:$0xff]
    %v178 = vld [vmem:[#allocation5 + $0x128] sm:$0xff]
    %v179 = vld [vmem:[#allocation5 + $0x130] sm:$0xff]
    %v180 = vld [vmem:[#allocation5 + $0x138] sm:$0xff]
    %v181 = vld [vmem:[#allocation5 + $0x140] sm:$0xff]
    %v182 = vld [vmem:[#allocation5 + $0x148] sm:$0xff]
    %v183 = vld [vmem:[#allocation5 + $0x150] sm:$0xff]
    %v184 = vld [vmem:[#allocation5 + $0x158] sm:$0xff]
    %v185 = vld [vmem:[#allocation5 + $0x160] sm:$0xff]
    %v186 = vld [vmem:[#allocation5 + $0x168] sm:$0xff]
    %v187 = vld [vmem:[#allocation5 + $0x170] sm:$0xff]
    %v188 = vld [vmem:[#allocation5 + $0x178] sm:$0xff]
    %v189 = vld [vmem:[#allocation5 + $0x180] sm:$0xff]
    %v190 = vld [vmem:[#allocation5 + $0x188] sm:$0xff]
    %v191 = vld [vmem:[#allocation5 + $0x190] sm:$0xff]
    %v192 = vld [vmem:[#allocation5 + $0x198] sm:$0xff]
    %v193 = vld [vmem:[#allocation5 + $0x1a0] sm:$0xff]
    %v194 = vld [vmem:[#allocation5 + $0x1a8] sm:$0xff]
    %v195 = vld [vmem:[#allocation5 + $0x1b0] sm:$0xff]
    %v196 = vld [vmem:[#allocation5 + $0x1b8] sm:$0xff]
    %v197 = vld [vmem:[#allocation5 + $0x1c0] sm:$0xff]
    %v198 = vld [vmem:[#allocation5 + $0x1c8] sm:$0xff]
    %v199 = vld [vmem:[#allocation5 + $0x1d0] sm:$0xff]
    %v200 = vld [vmem:[#allocation5 + $0x1d8] sm:$0xff]
    %v201 = vld [vmem:[#allocation5 + $0x1e0] sm:$0xff]
    %v202 = vld [vmem:[#allocation5 + $0x1e8] sm:$0xff]
    %v203 = vld [vmem:[#allocation5 + $0x1f0] sm:$0xff]
    %v204 = vld [vmem:[#allocation5 + $0x1f8] sm:$0xff]
    %v205 = vld [vmem:[#allocation5 + $0x200] sm:$0xff]
    %v206 = vld [vmem:[#allocation5 + $0x208] sm:$0xff]
    %v207 = vld [vmem:[#allocation5 + $0x210] sm:$0xff]
    %v208 = vld [vmem:[#allocation5 + $0x218] sm:$0xff]
    %v209 = vld [vmem:[#allocation5 + $0x220] sm:$0xff]
    %v210 = vld [vmem:[#allocation5 + $0x228] sm:$0xff]
    %v211 = vld [vmem:[#allocation5 + $0x230] sm:$0xff]
    %v212 = vld [vmem:[#allocation5 + $0x238] sm:$0xff]
    %v213 = vld [vmem:[#allocation5 + $0x240] sm:$0xff]
    %v214 = vld [vmem:[#allocation5 + $0x248] sm:$0xff]
    %v215 = vld [vmem:[#allocation5 + $0x250] sm:$0xff]
    %v216 = vld [vmem:[#allocation5 + $0x258] sm:$0xff]
    %v217 = vld [vmem:[#allocation5 + $0x260] sm:$0xff]
    %v218 = vld [vmem:[#allocation5 + $0x268] sm:$0xff]
    %v219 = vld [vmem:[#allocation5 + $0x270] sm:$0xff]
    %v220 = vld [vmem:[#allocation5 + $0x278] sm:$0xff]
    %v221 = vld [vmem:[#allocation5 + $0x280] sm:$0xff]
    %v222 = vld [vmem:[#allocation5 + $0x288] sm:$0xff]
    %v223 = vld [vmem:[#allocation5 + $0x290] sm:$0xff]
    %v224 = vld [vmem:[#allocation5 + $0x298] sm:$0xff]
    %v225 = vld [vmem:[#allocation5 + $0x2a0] sm:$0xff]
    %v226 = vld [vmem:[#allocation5 + $0x2a8] sm:$0xff]
    %v227 = vld [vmem:[#allocation5 + $0x2b0] sm:$0xff]
    %v228 = vld [vmem:[#allocation5 + $0x2b8] sm:$0xff]
    %v229 = vld [vmem:[#allocation5 + $0x2c0] sm:$0xff]
    %v230 = vld [vmem:[#allocation5 + $0x2c8] sm:$0xff]
    %v231 = vld [vmem:[#allocation5 + $0x2d0] sm:$0xff]
    %v232 = vld [vmem:[#allocation5 + $0x2d8] sm:$0xff]
    %v233 = vld [vmem:[#allocation5 + $0x2e0] sm:$0xff]
    %v234 = vld [vmem:[#allocation5 + $0x2e8] sm:$0xff]
    %v235 = vld [vmem:[#allocation5 + $0x2f0] sm:$0xff]
    %v236 = vld [vmem:[#allocation5 + $0x2f8] sm:$0xff]
    %v333 = vunpack.c.l.b16 %v141
    %v334 = vunpack.c.h.b16 %v141
    %v335 = vunpack.c.l.b16 %v142
    %v336 = vunpack.c.h.b16 %v142
    %v337 = vunpack.c.l.b16 %v143
    %v338 = vunpack.c.h.b16 %v143
    %v339 = vunpack.c.l.b16 %v144
    %v340 = vunpack.c.h.b16 %v144
    %v341 = vunpack.c.l.b16 %v145
    %v342 = vunpack.c.h.b16 %v145
    %v343 = vunpack.c.l.b16 %v146
    %v344 = vunpack.c.h.b16 %v146
    %v345 = vunpack.c.l.b16 %v147
    %v346 = vunpack.c.h.b16 %v147
    %v347 = vunpack.c.l.b16 %v148
    %v348 = vunpack.c.h.b16 %v148
    %v349 = vunpack.c.l.b16 %v149
    %v350 = vunpack.c.h.b16 %v149
    %v351 = vunpack.c.l.b16 %v150
    %v352 = vunpack.c.h.b16 %v150
    %v353 = vunpack.c.l.b16 %v151
    %v354 = vunpack.c.h.b16 %v151
    %v355 = vunpack.c.l.b16 %v152
    %v356 = vunpack.c.h.b16 %v152
    %v357 = vunpack.c.l.b16 %v153
    %v358 = vunpack.c.h.b16 %v153
    %v359 = vunpack.c.l.b16 %v154
    %v360 = vunpack.c.h.b16 %v154
    %v361 = vunpack.c.l.b16 %v155
    %v362 = vunpack.c.h.b16 %v155
    %v363 = vunpack.c.l.b16 %v156
    %v364 = vunpack.c.h.b16 %v156
    %v365 = vunpack.c.l.b16 %v157
    %v366 = vunpack.c.h.b16 %v157
    %v367 = vunpack.c.l.b16 %v158
    %v368 = vunpack.c.h.b16 %v158
    %v369 = vunpack.c.l.b16 %v159
    %v370 = vunpack.c.h.b16 %v159
    %v371 = vunpack.c.l.b16 %v160
    %v372 = vunpack.c.h.b16 %v160
    %v373 = vunpack.c.l.b16 %v161
    %v374 = vunpack.c.h.b16 %v161
    %v375 = vunpack.c.l.b16 %v162
    %v376 = vunpack.c.h.b16 %v162
    %v377 = vunpack.c.l.b16 %v163
    %v378 = vunpack.c.h.b16 %v163
    %v379 = vunpack.c.l.b16 %v164
    %v380 = vunpack.c.h.b16 %v164
    %v381 = vunpack.c.l.b16 %v165
    %v382 = vunpack.c.h.b16 %v165
    %v383 = vunpack.c.l.b16 %v166
    %v384 = vunpack.c.h.b16 %v166
    %v385 = vunpack.c.l.b16 %v167
    %v386 = vunpack.c.h.b16 %v167
    %v387 = vunpack.c.l.b16 %v168
    %v388 = vunpack.c.h.b16 %v168
    %v389 = vunpack.c.l.b16 %v169
    %v390 = vunpack.c.h.b16 %v169
    %v391 = vunpack.c.l.b16 %v170
    %v392 = vunpack.c.h.b16 %v170
    %v393 = vunpack.c.l.b16 %v171
    %v394 = vunpack.c.h.b16 %v171
    %v395 = vunpack.c.l.b16 %v172
    %v396 = vunpack.c.h.b16 %v172
    %v397 = vunpack.c.l.b16 %v173
    %v398 = vunpack.c.h.b16 %v173
    %v399 = vunpack.c.l.b16 %v174
    %v400 = vunpack.c.h.b16 %v174
    %v401 = vunpack.c.l.b16 %v175
    %v402 = vunpack.c.h.b16 %v175
    %v403 = vunpack.c.l.b16 %v176
    %v404 = vunpack.c.h.b16 %v176
    %v405 = vunpack.c.l.b16 %v177
    %v406 = vunpack.c.h.b16 %v177
    %v407 = vunpack.c.l.b16 %v178
    %v408 = vunpack.c.h.b16 %v178
    %v409 = vunpack.c.l.b16 %v179
    %v410 = vunpack.c.h.b16 %v179
    %v411 = vunpack.c.l.b16 %v180
    %v412 = vunpack.c.h.b16 %v180
    %v413 = vunpack.c.l.b16 %v181
    %v414 = vunpack.c.h.b16 %v181
    %v415 = vunpack.c.l.b16 %v182
    %v416 = vunpack.c.h.b16 %v182
    %v417 = vunpack.c.l.b16 %v183
    %v418 = vunpack.c.h.b16 %v183
    %v419 = vunpack.c.l.b16 %v184
    %v420 = vunpack.c.h.b16 %v184
    %v421 = vunpack.c.l.b16 %v185
    %v422 = vunpack.c.h.b16 %v185
    %v423 = vunpack.c.l.b16 %v186
    %v424 = vunpack.c.h.b16 %v186
    %v425 = vunpack.c.l.b16 %v187
    %v426 = vunpack.c.h.b16 %v187
    %v427 = vunpack.c.l.b16 %v188
    %v428 = vunpack.c.h.b16 %v188
    %v429 = vunpack.c.l.b16 %v189
    %v430 = vunpack.c.h.b16 %v189
    %v431 = vunpack.c.l.b16 %v190
    %v432 = vunpack.c.h.b16 %v190
    %v433 = vunpack.c.l.b16 %v191
    %v434 = vunpack.c.h.b16 %v191
    %v435 = vunpack.c.l.b16 %v192
    %v436 = vunpack.c.h.b16 %v192
    %v437 = vunpack.c.l.b16 %v193
    %v438 = vunpack.c.h.b16 %v193
    %v439 = vunpack.c.l.b16 %v194
    %v440 = vunpack.c.h.b16 %v194
    %v441 = vunpack.c.l.b16 %v195
    %v442 = vunpack.c.h.b16 %v195
    %v443 = vunpack.c.l.b16 %v196
    %v444 = vunpack.c.h.b16 %v196
    %v445 = vunpack.c.l.b16 %v197
    %v446 = vunpack.c.h.b16 %v197
    %v447 = vunpack.c.l.b16 %v198
    %v448 = vunpack.c.h.b16 %v198
    %v449 = vunpack.c.l.b16 %v199
    %v450 = vunpack.c.h.b16 %v199
    %v451 = vunpack.c.l.b16 %v200
    %v452 = vunpack.c.h.b16 %v200
    %v453 = vunpack.c.l.b16 %v201
    %v454 = vunpack.c.h.b16 %v201
    %v455 = vunpack.c.l.b16 %v202
    %v456 = vunpack.c.h.b16 %v202
    %v457 = vunpack.c.l.b16 %v203
    %v458 = vunpack.c.h.b16 %v203
    %v459 = vunpack.c.l.b16 %v204
    %v460 = vunpack.c.h.b16 %v204
    %v461 = vunpack.c.l.b16 %v205
    %v462 = vunpack.c.h.b16 %v205
    %v463 = vunpack.c.l.b16 %v206
    %v464 = vunpack.c.h.b16 %v206
    %v465 = vunpack.c.l.b16 %v207
    %v466 = vunpack.c.h.b16 %v207
    %v467 = vunpack.c.l.b16 %v208
    %v468 = vunpack.c.h.b16 %v208
    %v469 = vunpack.c.l.b16 %v209
    %v470 = vunpack.c.h.b16 %v209
    %v471 = vunpack.c.l.b16 %v210
    %v472 = vunpack.c.h.b16 %v210
    %v473 = vunpack.c.l.b16 %v211
    %v474 = vunpack.c.h.b16 %v211
    %v475 = vunpack.c.l.b16 %v212
    %v476 = vunpack.c.h.b16 %v212
    %v477 = vunpack.c.l.b16 %v213
    %v478 = vunpack.c.h.b16 %v213
    %v479 = vunpack.c.l.b16 %v214
    %v480 = vunpack.c.h.b16 %v214
    %v481 = vunpack.c.l.b16 %v215
    %v482 = vunpack.c.h.b16 %v215
    %v483 = vunpack.c.l.b16 %v216
    %v484 = vunpack.c.h.b16 %v216
    %v485 = vunpack.c.l.b16 %v217
    %v486 = vunpack.c.h.b16 %v217
    %v487 = vunpack.c.l.b16 %v218
    %v488 = vunpack.c.h.b16 %v218
    %v489 = vunpack.c.l.b16 %v219
    %v490 = vunpack.c.h.b16 %v219
    %v491 = vunpack.c.l.b16 %v220
    %v492 = vunpack.c.h.b16 %v220
    %v493 = vunpack.c.l.b16 %v221
    %v494 = vunpack.c.h.b16 %v221
    %v495 = vunpack.c.l.b16 %v222
    %v496 = vunpack.c.h.b16 %v222
    %v497 = vunpack.c.l.b16 %v223
    %v498 = vunpack.c.h.b16 %v223
    %v499 = vunpack.c.l.b16 %v224
    %v500 = vunpack.c.h.b16 %v224
    %v501 = vunpack.c.l.b16 %v225
    %v502 = vunpack.c.h.b16 %v225
    %v503 = vunpack.c.l.b16 %v226
    %v504 = vunpack.c.h.b16 %v226
    %v505 = vunpack.c.l.b16 %v227
    %v506 = vunpack.c.h.b16 %v227
    %v507 = vunpack.c.l.b16 %v228
    %v508 = vunpack.c.h.b16 %v228
    %v509 = vunpack.c.l.b16 %v229
    %v510 = vunpack.c.h.b16 %v229
    %v511 = vunpack.c.l.b16 %v230
    %v512 = vunpack.c.h.b16 %v230
    %v513 = vunpack.c.l.b16 %v231
    %v514 = vunpack.c.h.b16 %v231
    %v515 = vunpack.c.l.b16 %v232
    %v516 = vunpack.c.h.b16 %v232
    %v517 = vunpack.c.l.b16 %v233
    %v518 = vunpack.c.h.b16 %v233
    %v519 = vunpack.c.l.b16 %v234
    %v520 = vunpack.c.h.b16 %v234
    %v521 = vunpack.c.l.b16 %v235
    %v522 = vunpack.c.h.b16 %v235
    %v523 = vunpack.c.l.b16 %v236
    %v524 = vunpack.c.h.b16 %v236
    %v525 = vpack.c.b16 %v339, %v333
    %v526 = vpack.c.b16 %v340, %v334
    %v527 = vpack.c.b16 %v341, %v335
    %v528 = vpack.c.b16 %v342, %v336
    %v529 = vpack.c.b16 %v343, %v337
    %v530 = vpack.c.b16 %v344, %v338
    %v531 = vpack.c.b16 %v351, %v345
    %v532 = vpack.c.b16 %v352, %v346
    %v533 = vpack.c.b16 %v353, %v347
    %v534 = vpack.c.b16 %v354, %v348
    %v535 = vpack.c.b16 %v355, %v349
    %v536 = vpack.c.b16 %v356, %v350
    %v537 = vpack.c.b16 %v363, %v357
    %v538 = vpack.c.b16 %v364, %v358
    %v539 = vpack.c.b16 %v365, %v359
    %v540 = vpack.c.b16 %v366, %v360
    %v541 = vpack.c.b16 %v367, %v361
    %v542 = vpack.c.b16 %v368, %v362
    %v543 = vpack.c.b16 %v375, %v369
    %v544 = vpack.c.b16 %v376, %v370
    %v545 = vpack.c.b16 %v377, %v371
    %v546 = vpack.c.b16 %v378, %v372
    %v547 = vpack.c.b16 %v379, %v373
    %v548 = vpack.c.b16 %v380, %v374
    %v549 = vpack.c.b16 %v387, %v381
    %v550 = vpack.c.b16 %v388, %v382
    %v551 = vpack.c.b16 %v389, %v383
    %v552 = vpack.c.b16 %v390, %v384
    %v553 = vpack.c.b16 %v391, %v385
    %v554 = vpack.c.b16 %v392, %v386
    %v555 = vpack.c.b16 %v399, %v393
    %v556 = vpack.c.b16 %v400, %v394
    %v557 = vpack.c.b16 %v401, %v395
    %v558 = vpack.c.b16 %v402, %v396
    %v559 = vpack.c.b16 %v403, %v397
    %v560 = vpack.c.b16 %v404, %v398
    %v561 = vpack.c.b16 %v411, %v405
    %v562 = vpack.c.b16 %v412, %v406
    %v563 = vpack.c.b16 %v413, %v407
    %v564 = vpack.c.b16 %v414, %v408
    %v565 = vpack.c.b16 %v415, %v409
    %v566 = vpack.c.b16 %v416, %v410
    %v567 = vpack.c.b16 %v423, %v417
    %v568 = vpack.c.b16 %v424, %v418
    %v569 = vpack.c.b16 %v425, %v419
    %v570 = vpack.c.b16 %v426, %v420
    %v571 = vpack.c.b16 %v427, %v421
    %v572 = vpack.c.b16 %v428, %v422
    %v573 = vpack.c.b16 %v435, %v429
    %v574 = vpack.c.b16 %v436, %v430
    %v575 = vpack.c.b16 %v437, %v431
    %v576 = vpack.c.b16 %v438, %v432
    %v577 = vpack.c.b16 %v439, %v433
    %v578 = vpack.c.b16 %v440, %v434
    %v579 = vpack.c.b16 %v447, %v441
    %v580 = vpack.c.b16 %v448, %v442
    %v581 = vpack.c.b16 %v449, %v443
    %v582 = vpack.c.b16 %v450, %v444
    %v583 = vpack.c.b16 %v451, %v445
    %v584 = vpack.c.b16 %v452, %v446
    %v585 = vpack.c.b16 %v459, %v453
    %v586 = vpack.c.b16 %v460, %v454
    %v587 = vpack.c.b16 %v461, %v455
    %v588 = vpack.c.b16 %v462, %v456
    %v589 = vpack.c.b16 %v463, %v457
    %v590 = vpack.c.b16 %v464, %v458
    %v591 = vpack.c.b16 %v471, %v465
    %v592 = vpack.c.b16 %v472, %v466
    %v593 = vpack.c.b16 %v473, %v467
    %v594 = vpack.c.b16 %v474, %v468
    %v595 = vpack.c.b16 %v475, %v469
    %v596 = vpack.c.b16 %v476, %v470
    %v597 = vpack.c.b16 %v483, %v477
    %v598 = vpack.c.b16 %v484, %v478
    %v599 = vpack.c.b16 %v485, %v479
    %v600 = vpack.c.b16 %v486, %v480
    %v601 = vpack.c.b16 %v487, %v481
    %v602 = vpack.c.b16 %v488, %v482
    %v603 = vpack.c.b16 %v495, %v489
    %v604 = vpack.c.b16 %v496, %v490
    %v605 = vpack.c.b16 %v497, %v491
    %v606 = vpack.c.b16 %v498, %v492
    %v607 = vpack.c.b16 %v499, %v493
    %v608 = vpack.c.b16 %v500, %v494
    %v609 = vpack.c.b16 %v507, %v501
    %v610 = vpack.c.b16 %v508, %v502
    %v611 = vpack.c.b16 %v509, %v503
    %v612 = vpack.c.b16 %v510, %v504
    %v613 = vpack.c.b16 %v511, %v505
    %v614 = vpack.c.b16 %v512, %v506
    %v615 = vpack.c.b16 %v519, %v513
    %v616 = vpack.c.b16 %v520, %v514
    %v617 = vpack.c.b16 %v521, %v515
    %v618 = vpack.c.b16 %v522, %v516
    %v619 = vpack.c.b16 %v523, %v517
    %v620 = vpack.c.b16 %v524, %v518
    %717 = vmatprep.subr.bf16.mxu0 %v526
    %718 = vmatpush1.bf16.msra.mxu0 %v525
    %719 = vmatprep.subr.bf16.mxu0 %v532
    %720 = vmatpush1.bf16.msra.mxu0 %v531
    %721 = vmatprep.subr.bf16.mxu0 %v538
    %722 = vmatpush1.bf16.msra.mxu0 %v537
    %723 = vmatprep.subr.bf16.mxu0 %v544
    %724 = vmatpush1.bf16.msra.mxu0 %v543
    %725 = vmatprep.subr.bf16.mxu0 %v550
    %726 = vmatpush1.bf16.msra.mxu0 %v549
    %727 = vmatprep.subr.bf16.mxu0 %v556
    %728 = vmatpush1.bf16.msra.mxu0 %v555
    %729 = vmatprep.subr.bf16.mxu0 %v562
    %730 = vmatpush1.bf16.msra.mxu0 %v561
    %731 = vmatprep.subr.bf16.mxu0 %v568
    %732 = vmatpush1.bf16.msra.mxu0 %v567
    %733 = vmatprep.subr.bf16.mxu0 %v574
    %734 = vmatpush1.bf16.msra.mxu0 %v573
    %735 = vmatprep.subr.bf16.mxu0 %v580
    %736 = vmatpush1.bf16.msra.mxu0 %v579
    %737 = vmatprep.subr.bf16.mxu0 %v586
    %738 = vmatpush1.bf16.msra.mxu0 %v585
    %739 = vmatprep.subr.bf16.mxu0 %v592
    %740 = vmatpush1.bf16.msra.mxu0 %v591
    %741 = vmatprep.subr.bf16.mxu0 %v598
    %742 = vmatpush1.bf16.msra.mxu0 %v597
    %743 = vmatprep.subr.bf16.mxu0 %v604
    %744 = vmatpush1.bf16.msra.mxu0 %v603
    %745 = vmatprep.subr.bf16.mxu0 %v610
    %746 = vmatpush1.bf16.msra.mxu0 %v609
    %747 = vmatprep.subr.bf16.mxu0 %v616
    %748 = vmatpush1.bf16.msra.mxu0 %v615
    %749 = vmatprep.mubr.bf16.mxu0 %v140
    %750 = vmatmul.mubr.bf16.gmra.mrb[0].mxu0 %v139
    %v751 = vpop.f32.mrb[0].mxu0
    %v752 = vadd.f32 0.0, %v751
    %v753 = vpop.f32.mrb[0].mxu0
    %v754 = vadd.f32 0.0, %v753
    %v755 = vpop.f32.mrb[0].mxu0
    %v756 = vpop.f32.mrb[0].mxu0
    %757 = vdwg.mxu0
    %758 = vmatprep.subr.bf16.mxu0 %v528
    %759 = vmatpush1.bf16.msra.mxu0 %v527
    %760 = vmatprep.subr.bf16.mxu0 %v534
    %761 = vmatpush1.bf16.msra.mxu0 %v533
    %762 = vmatprep.subr.bf16.mxu0 %v540
    %763 = vmatpush1.bf16.msra.mxu0 %v539
    %764 = vmatprep.subr.bf16.mxu0 %v546
    %765 = vmatpush1.bf16.msra.mxu0 %v545
    %766 = vmatprep.subr.bf16.mxu0 %v552
    %767 = vmatpush1.bf16.msra.mxu0 %v551
    %768 = vmatprep.subr.bf16.mxu0 %v558
    %769 = vmatpush1.bf16.msra.mxu0 %v557
    %770 = vmatprep.subr.bf16.mxu0 %v564
    %771 = vmatpush1.bf16.msra.mxu0 %v563
    %772 = vmatprep.subr.bf16.mxu0 %v570
    %773 = vmatpush1.bf16.msra.mxu0 %v569
    %774 = vmatprep.subr.bf16.mxu0 %v576
    %775 = vmatpush1.bf16.msra.mxu0 %v575
    %776 = vmatprep.subr.bf16.mxu0 %v582
    %777 = vmatpush1.bf16.msra.mxu0 %v581
    %778 = vmatprep.subr.bf16.mxu0 %v588
    %779 = vmatpush1.bf16.msra.mxu0 %v587
    %780 = vmatprep.subr.bf16.mxu0 %v594
    %781 = vmatpush1.bf16.msra.mxu0 %v593
    %782 = vmatprep.subr.bf16.mxu0 %v600
    %783 = vmatpush1.bf16.msra.mxu0 %v599
    %784 = vmatprep.subr.bf16.mxu0 %v606
    %785 = vmatpush1.bf16.msra.mxu0 %v605
    %786 = vmatprep.subr.bf16.mxu0 %v612
    %787 = vmatpush1.bf16.msra.mxu0 %v611
    %788 = vmatprep.subr.bf16.mxu0 %v618
    %789 = vmatpush1.bf16.msra.mxu0 %v617
    %790 = vmatprep.mubr.bf16.mxu0 %v140
    %791 = vmatmul.mubr.bf16.gmra.mrb[0].mxu0 %v139
    %v792 = vpop.f32.mrb[0].mxu0
    %v793 = vadd.f32 0.0, %v792
    %v794 = vpop.f32.mrb[0].mxu0
    %v795 = vadd.f32 0.0, %v794
    %v796 = vpop.f32.mrb[0].mxu0
    %v797 = vpop.f32.mrb[0].mxu0
    %798 = vdwg.mxu0
    %799 = vmatprep.subr.bf16.mxu0 %v530
    %800 = vmatpush1.bf16.msra.mxu0 %v529
    %801 = vmatprep.subr.bf16.mxu0 %v536
    %802 = vmatpush1.bf16.msra.mxu0 %v535
    %803 = vmatprep.subr.bf16.mxu0 %v542
    %804 = vmatpush1.bf16.msra.mxu0 %v541
    %805 = vmatprep.subr.bf16.mxu0 %v548
    %806 = vmatpush1.bf16.msra.mxu0 %v547
    %807 = vmatprep.subr.bf16.mxu0 %v554
    %808 = vmatpush1.bf16.msra.mxu0 %v553
    %809 = vmatprep.subr.bf16.mxu0 %v560
    %810 = vmatpush1.bf16.msra.mxu0 %v559
    %811 = vmatprep.subr.bf16.mxu0 %v566
    %812 = vmatpush1.bf16.msra.mxu0 %v565
    %813 = vmatprep.subr.bf16.mxu0 %v572
    %814 = vmatpush1.bf16.msra.mxu0 %v571
    %815 = vmatprep.subr.bf16.mxu0 %v578
    %816 = vmatpush1.bf16.msra.mxu0 %v577
    %817 = vmatprep.subr.bf16.mxu0 %v584
    %818 = vmatpush1.bf16.msra.mxu0 %v583
    %819 = vmatprep.subr.bf16.mxu0 %v590
    %820 = vmatpush1.bf16.msra.mxu0 %v589
    %821 = vmatprep.subr.bf16.mxu0 %v596
    %822 = vmatpush1.bf16.msra.mxu0 %v595
    %823 = vmatprep.subr.bf16.mxu0 %v602
    %824 = vmatpush1.bf16.msra.mxu0 %v601
    %825 = vmatprep.subr.bf16.mxu0 %v608
    %826 = vmatpush1.bf16.msra.mxu0 %v607
    %827 = vmatprep.subr.bf16.mxu0 %v614
    %828 = vmatpush1.bf16.msra.mxu0 %v613
    %829 = vmatprep.subr.bf16.mxu0 %v620
    %830 = vmatpush1.bf16.msra.mxu0 %v619
    %831 = vmatprep.mubr.bf16.mxu0 %v140
    %832 = vmatmul.mubr.bf16.gmra.mrb[0].mxu0 %v139
    %v833 = vpop.f32.mrb[0].mxu0
    %v834 = vadd.f32 0.0, %v833
    %v835 = vpop.f32.mrb[0].mxu0
    %v836 = vadd.f32 0.0, %v835
    %v837 = vpop.f32.mrb[0].mxu0
    %v838 = vpop.f32.mrb[0].mxu0
    %839 = vdwg.mxu0
    %v840 = vld [vmem:[%s1] sm:$0xff]
    %v841 = vld [vmem:[%s1 + $0x8] sm:$0xff]
    %v842 = vld [vmem:[%s2] sm:$0xff]
    %v843 = vld [vmem:[%s2 + $0x8] sm:$0xff]
    %v844 = vlaneseq
    %v845 = vand.u32 %v844, 127
    %v846 = vadd.s32 %v845, 128
    %vm847 = vcmp.lt.s32.totalorder %v845, 0
    %v848 = vsub.s32 0, %v845
    %v849 = vsel %vm847, %v848, %v845
    %v850 = vshrl.u32 %v849, 7
    %v851 = vand.u32 %v849, 127
    %v852 = vsub.s32 0, %v851
    %v853 = vsel %vm847, %v852, %v851
    %vm854 = vcmp.lt.s32.totalorder %v846, 0
    %v855 = vsub.s32 0, %v846
    %v856 = vsel %vm854, %v855, %v846
    %v857 = vshrl.u32 %v856, 7
    %v858 = vand.u32 %v856, 127
    %v859 = vsub.s32 0, %v858
    %v860 = vsel %vm854, %v859, %v858
    %vm861 = vcmp.ne.s32.totalorder %v853, 0
    %vm862 = vcmp.ne.s32.totalorder %v860, 0
    %vm863 = vcmp.lt.s32.totalorder %v853, 0
    %vm864 = vcmp.lt.s32.totalorder %v860, 0
    %vm865 = vmand %vm863, %vm861
    %vm866 = vmand %vm864, %vm862
    %v867 = vadd.s32 %v853, 128
    %v868 = vadd.s32 %v860, 128
    %v869 = vsel %vm865, %v867, %v853
    %v870 = vsel %vm866, %v868, %v860
    %vm871 = vcmp.lt.s32.totalorder %v869, 64
    %vm872 = vcmp.lt.s32.totalorder %v870, 64
    %873 = vrot.lane.b32.xlu0 %v752, 64
    %v874 = vpop.permute.xlu0 %873
    %875 = vrot.lane.b32.xlu0 %v754, 64
    %v876 = vpop.permute.xlu0 %875
    %vm877 = vcmp.lt.s32.totalorder %v845, 64
    %v878 = vsel %vm877, %v874, %v876
    %v879 = vsel %vm877, %v876, %v874
    %v880 = vsel %vm871, %v878, %v879
    %v881 = vsel %vm872, %v879, %v878
    %v882 = vmul.f32 %v752, %v840
    %v883 = vmul.f32 %v754, %v841
    %v884 = vmul.f32 %v880, %v842
    %v885 = vmul.f32 %v881, %v843
    %v886 = vadd.f32 %v882, %v884
    %v887 = vadd.f32 %v883, %v885
    %888 = vrot.lane.b32.xlu0 %v793, 64
    %v889 = vpop.permute.xlu0 %888
    %890 = vrot.lane.b32.xlu0 %v795, 64
    %v891 = vpop.permute.xlu0 %890
    %v892 = vsel %vm877, %v889, %v891
    %v893 = vsel %vm877, %v891, %v889
    %v894 = vsel %vm871, %v892, %v893
    %v895 = vsel %vm872, %v893, %v892
    %v896 = vmul.f32 %v793, %v840
    %v897 = vmul.f32 %v795, %v841
    %v898 = vmul.f32 %v894, %v842
    %v899 = vmul.f32 %v895, %v843
    %v900 = vadd.f32 %v896, %v898
    %v901 = vadd.f32 %v897, %v899
    %902 = vst [vmem:[#allocation2] sm:$0xff] %v900
    %903 = vst [vmem:[#allocation2 + $0x8] sm:$0xff] %v901
    %904 = vst [vmem:[#allocation3] sm:$0xff] %v834
    %905 = vst [vmem:[#allocation3 + $0x8] sm:$0xff] %v836
    %v906 = vpack.c.bf16 %v886, %v886
    %v907 = vpack.c.bf16 %v887, %v887
    %v908 = vpack.c.bf16 %v900, %v900
    %v909 = vpack.c.bf16 %v901, %v901
    %910 = vmatprep.subr.bf16.mxu0 0
    %911 = vmatpush1.bf16.xpose.msra.mxu0 %v908
    %912 = vmatprep.subr.bf16.mxu0 0
    %913 = vmatpush1.bf16.xpose.msra.mxu0 0
    %914 = vmatprep.subr.bf16.mxu0 0
    %915 = vmatpush1.bf16.xpose.msra.mxu0 0
    %916 = vmatprep.subr.bf16.mxu0 0
    %917 = vmatpush1.bf16.xpose.msra.mxu0 0
    %918 = vmatprep.subr.bf16.mxu0 0
    %919 = vmatpush1.bf16.xpose.msra.mxu0 0
    %920 = vmatprep.subr.bf16.mxu0 0
    %921 = vmatpush1.bf16.xpose.msra.mxu0 0
    %922 = vmatprep.subr.bf16.mxu0 0
    %923 = vmatpush1.bf16.xpose.msra.mxu0 0
    %924 = vmatprep.subr.bf16.mxu0 0
    %925 = vmatpush1.bf16.xpose.msra.mxu0 0
    %926 = vmatprep.subr.bf16.mxu0 0
    %927 = vmatpush1.bf16.xpose.msra.mxu0 0
    %928 = vmatprep.subr.bf16.mxu0 0
    %929 = vmatpush1.bf16.xpose.msra.mxu0 0
    %930 = vmatprep.subr.bf16.mxu0 0
    %931 = vmatpush1.bf16.xpose.msra.mxu0 0
    %932 = vmatprep.subr.bf16.mxu0 0
    %933 = vmatpush1.bf16.xpose.msra.mxu0 0
    %934 = vmatprep.subr.bf16.mxu0 0
    %935 = vmatpush1.bf16.xpose.msra.mxu0 0
    %936 = vmatprep.subr.bf16.mxu0 0
    %937 = vmatpush1.bf16.xpose.msra.mxu0 0
    %938 = vmatprep.subr.bf16.mxu0 0
    %939 = vmatpush1.bf16.xpose.msra.mxu0 0
    %940 = vmatprep.subr.bf16.mxu0 0
    %941 = vmatpush1.bf16.xpose.msra.mxu0 0
    %942 = vmatprep.mubr.bf16.mxu0 0
    %943 = vmatmul.mubr.bf16.gmra.mrb[0].mxu0 %v906
    %v944 = vpop.f32.mrb[0].mxu0
    %v945 = vadd.f32 0.0, %v944
    %v946 = vpop.f32.mrb[0].mxu0
    %v947 = vpop.f32.mrb[0].mxu0
    %v948 = vpop.f32.mrb[0].mxu0
    %949 = vdwg.mxu0
    %950 = vmatprep.subr.bf16.mxu0 0
    %951 = vmatpush1.bf16.xpose.msra.mxu0 %v909
    %952 = vmatprep.subr.bf16.mxu0 0
    %953 = vmatpush1.bf16.xpose.msra.mxu0 0
    %954 = vmatprep.subr.bf16.mxu0 0
    %955 = vmatpush1.bf16.xpose.msra.mxu0 0
    %956 = vmatprep.subr.bf16.mxu0 0
    %957 = vmatpush1.bf16.xpose.msra.mxu0 0
    %958 = vmatprep.subr.bf16.mxu0 0
    %959 = vmatpush1.bf16.xpose.msra.mxu0 0
    %960 = vmatprep.subr.bf16.mxu0 0
    %961 = vmatpush1.bf16.xpose.msra.mxu0 0
    %962 = vmatprep.subr.bf16.mxu0 0
    %963 = vmatpush1.bf16.xpose.msra.mxu0 0
    %964 = vmatprep.subr.bf16.mxu0 0
    %965 = vmatpush1.bf16.xpose.msra.mxu0 0
    %966 = vmatprep.subr.bf16.mxu0 0
    %967 = vmatpush1.bf16.xpose.msra.mxu0 0
    %968 = vmatprep.subr.bf16.mxu0 0
    %969 = vmatpush1.bf16.xpose.msra.mxu0 0
    %970 = vmatprep.subr.bf16.mxu0 0
    %971 = vmatpush1.bf16.xpose.msra.mxu0 0
    %972 = vmatprep.subr.bf16.mxu0 0
    %973 = vmatpush1.bf16.xpose.msra.mxu0 0
    %974 = vmatprep.subr.bf16.mxu0 0
    %975 = vmatpush1.bf16.xpose.msra.mxu0 0
    %976 = vmatprep.subr.bf16.mxu0 0
    %977 = vmatpush1.bf16.xpose.msra.mxu0 0
    %978 = vmatprep.subr.bf16.mxu0 0
    %979 = vmatpush1.bf16.xpose.msra.mxu0 0
    %980 = vmatprep.subr.bf16.mxu0 0
    %981 = vmatpush1.bf16.xpose.msra.mxu0 0
    %982 = vmatprep.mubr.bf16.mxu0 0
    %983 = vmatmul.mubr.bf16.gmra.mrb[0].mxu0 %v907
    %v984 = vpop.f32.mrb[0].mxu0
    %v985 = vadd.f32 0.0, %v984
    %v986 = vpop.f32.mrb[0].mxu0
    %v987 = vpop.f32.mrb[0].mxu0
    %v988 = vpop.f32.mrb[0].mxu0
    %989 = vdwg.mxu0
    %v990 = vmul.f32 %v945, 0.088388346
    %v991 = vmul.f32 %v985, 0.088388346
    %v992 = vlaneseq
    %v993 = vshrl.u32 %v992, 7
    %vm994 = vcmp.le.s32.totalorder %v845, %v993
    %v995 = vsel %vm994, 1, 0
    %vm996 = vcmp.eq.s32.totalorder %v995, 1
    %v997 = vsel %vm996, %v990, -1e+30
    %v998 = vsel %vm996, %v991, -1e+30
    %vm999 = vcmask 64512
    %v1000 = vsel %vm999, %v997, -inf
    %1001 = vmax.xlane.f32.xlu0 %v1000
    %v1002 = vpop.xlane.xlu0 %1001
    %v1003 = vsel %vm999, %v998, -inf
    %1004 = vmax.xlane.f32.xlu0 %v1003
    %v1005 = vpop.xlane.xlu0 %1004
    %v1006 = vsub.f32 %v997, %v1002
    %v1007 = vsub.f32 %v998, %v1005
    %v1008 = vmul.f32 %v1006, 1.442695
    %v1009 = vpow.pop %v1008
    %v1010 = vmul.f32 %v1007, 1.442695
    %v1011 = vpow.pop %v1010
    %v1012 = vsel %vm999, %v1009, 0.0
    %1013 = vadd.xlane.f32.xlu0 %v1012
    %v1014 = vpop.xlane.xlu0 %1013
    %v1015 = vsel %vm999, %v1011, 0.0
    %1016 = vadd.xlane.f32.xlu0 %v1015
    %v1017 = vpop.xlane.xlu0 %1016
    %v1018 = vpack.c.bf16 %v1009, %v1009
    %v1019 = vpack.c.bf16 %v1011, %v1011
    %v1020 = vpack.c.bf16 %v834, %v834
    %v1021 = vpack.c.bf16 %v836, %v836
    %v1023 = vsel %vm999, %v1018, 0
    %vm1025 = vcmask 1043456
    %v1027 = vsel %vm1025, %v1020, 0
    %1029 = vmatprep.subr.bf16.mxu0 0
    %1030 = vmatpush1.bf16.msra.mxu0 %v1027
    %1031 = vmatprep.subr.bf16.mxu0 0
    %1032 = vmatpush1.bf16.msra.mxu0 0
    %1033 = vmatprep.subr.bf16.mxu0 0
    %1034 = vmatpush1.bf16.msra.mxu0 0
    %1035 = vmatprep.subr.bf16.mxu0 0
    %1036 = vmatpush1.bf16.msra.mxu0 0
    %1037 = vmatprep.subr.bf16.mxu0 0
    %1038 = vmatpush1.bf16.msra.mxu0 0
    %1039 = vmatprep.subr.bf16.mxu0 0
    %1040 = vmatpush1.bf16.msra.mxu0 0
    %1041 = vmatprep.subr.bf16.mxu0 0
    %1042 = vmatpush1.bf16.msra.mxu0 0
    %1043 = vmatprep.subr.bf16.mxu0 0
    %1044 = vmatpush1.bf16.msra.mxu0 0
    %1045 = vmatprep.subr.bf16.mxu0 0
    %1046 = vmatpush1.bf16.msra.mxu0 0
    %1047 = vmatprep.subr.bf16.mxu0 0
    %1048 = vmatpush1.bf16.msra.mxu0 0
    %1049 = vmatprep.subr.bf16.mxu0 0
    %1050 = vmatpush1.bf16.msra.mxu0 0
    %1051 = vmatprep.subr.bf16.mxu0 0
    %1052 = vmatpush1.bf16.msra.mxu0 0
    %1053 = vmatprep.subr.bf16.mxu0 0
    %1054 = vmatpush1.bf16.msra.mxu0 0
    %1055 = vmatprep.subr.bf16.mxu0 0
    %1056 = vmatpush1.bf16.msra.mxu0 0
    %1057 = vmatprep.subr.bf16.mxu0 0
    %1058 = vmatpush1.bf16.msra.mxu0 0
    %1059 = vmatprep.subr.bf16.mxu0 0
    %1060 = vmatpush1.bf16.msra.mxu0 0
    %1061 = vmatprep.mubr.bf16.mxu0 0
    %1062 = vmatmul.mubr.bf16.gmra.mrb[0].mxu0 %v1023
    %v1063 = vpop.f32.mrb[0].mxu0
    %v1064 = vadd.f32 0.0, %v1063
    %v1065 = vpop.f32.mrb[0].mxu0
    %v1066 = vpop.f32.mrb[0].mxu0
    %v1067 = vpop.f32.mrb[0].mxu0
    %1068 = vdwg.mxu0
    %v1070 = vsel %vm999, %v1019, 0
    %v1073 = vsel %vm1025, %v1021, 0
    %1075 = vmatprep.subr.bf16.mxu0 0
    %1076 = vmatpush1.bf16.msra.mxu0 %v1073
    %1077 = vmatprep.subr.bf16.mxu0 0
    %1078 = vmatpush1.bf16.msra.mxu0 0
    %1079 = vmatprep.subr.bf16.mxu0 0
    %1080 = vmatpush1.bf16.msra.mxu0 0
    %1081 = vmatprep.subr.bf16.mxu0 0
    %1082 = vmatpush1.bf16.msra.mxu0 0
    %1083 = vmatprep.subr.bf16.mxu0 0
    %1084 = vmatpush1.bf16.msra.mxu0 0
    %1085 = vmatprep.subr.bf16.mxu0 0
    %1086 = vmatpush1.bf16.msra.mxu0 0
    %1087 = vmatprep.subr.bf16.mxu0 0
    %1088 = vmatpush1.bf16.msra.mxu0 0
    %1089 = vmatprep.subr.bf16.mxu0 0
    %1090 = vmatpush1.bf16.msra.mxu0 0
    %1091 = vmatprep.subr.bf16.mxu0 0
    %1092 = vmatpush1.bf16.msra.mxu0 0
    %1093 = vmatprep.subr.bf16.mxu0 0
    %1094 = vmatpush1.bf16.msra.mxu0 0
    %1095 = vmatprep.subr.bf16.mxu0 0
    %1096 = vmatpush1.bf16.msra.mxu0 0
    %1097 = vmatprep.subr.bf16.mxu0 0
    %1098 = vmatpush1.bf16.msra.mxu0 0
    %1099 = vmatprep.subr.bf16.mxu0 0
    %1100 = vmatpush1.bf16.msra.mxu0 0
    %1101 = vmatprep.subr.bf16.mxu0 0
    %1102 = vmatpush1.bf16.msra.mxu0 0
    %1103 = vmatprep.subr.bf16.mxu0 0
    %1104 = vmatpush1.bf16.msra.mxu0 0
    %1105 = vmatprep.subr.bf16.mxu0 0
    %1106 = vmatpush1.bf16.msra.mxu0 0
    %1107 = vmatprep.mubr.bf16.mxu0 0
    %1108 = vmatmul.mubr.bf16.gmra.mrb[0].mxu0 %v1070
    %v1109 = vpop.f32.mrb[0].mxu0
    %v1110 = vadd.f32 0.0, %v1109
    %v1111 = vpop.f32.mrb[0].mxu0
    %v1112 = vpop.f32.mrb[0].mxu0
    %v1113 = vpop.f32.mrb[0].mxu0
    %1114 = vdwg.mxu0
    %v1115 = vrcp.pop %v1014
    %v1116 = vrcp.pop %v1017
    %v1117 = vmul.f32 %v1064, %v1115
    %v1118 = vmul.f32 %v1110, %v1116
    %v1119 = vpack.c.bf16 %v1117, %v1117
    %v1120 = vpack.c.bf16 %v1118, %v1118
    %v1121 = vld [vmem:[#allocation9] sm:$0xff]
    %v1122 = vld [vmem:[#allocation9 + $0x8] sm:$0xff]
    %v1123 = vld [vmem:[#allocation9 + $0x10] sm:$0xff]
    %v1124 = vld [vmem:[#allocation9 + $0x18] sm:$0xff]
    %v1125 = vld [vmem:[#allocation9 + $0x20] sm:$0xff]
    %v1126 = vld [vmem:[#allocation9 + $0x28] sm:$0xff]
    %v1127 = vld [vmem:[#allocation9 + $0x30] sm:$0xff]
    %v1128 = vld [vmem:[#allocation9 + $0x38] sm:$0xff]
    %v1129 = vld [vmem:[#allocation9 + $0x40] sm:$0xff]
    %v1130 = vld [vmem:[#allocation9 + $0x48] sm:$0xff]
    %v1131 = vld [vmem:[#allocation9 + $0x50] sm:$0xff]
    %v1132 = vld [vmem:[#allocation9 + $0x58] sm:$0xff]
    %v1133 = vld [vmem:[#allocation9 + $0x60] sm:$0xff]
    %v1134 = vld [vmem:[#allocation9 + $0x68] sm:$0xff]
    %v1135 = vld [vmem:[#allocation9 + $0x70] sm:$0xff]
    %v1136 = vld [vmem:[#allocation9 + $0x78] sm:$0xff]
    %v1137 = vld [vmem:[#allocation9 + $0x80] sm:$0xff]
    %v1138 = vld [vmem:[#allocation9 + $0x88] sm:$0xff]
    %v1139 = vld [vmem:[#allocation9 + $0x90] sm:$0xff]
    %v1140 = vld [vmem:[#allocation9 + $0x98] sm:$0xff]
    %v1141 = vld [vmem:[#allocation9 + $0xa0] sm:$0xff]
    %v1142 = vld [vmem:[#allocation9 + $0xa8] sm:$0xff]
    %v1143 = vld [vmem:[#allocation9 + $0xb0] sm:$0xff]
    %v1144 = vld [vmem:[#allocation9 + $0xb8] sm:$0xff]
    %v1145 = vld [vmem:[#allocation9 + $0xc0] sm:$0xff]
    %v1146 = vld [vmem:[#allocation9 + $0xc8] sm:$0xff]
    %v1147 = vld [vmem:[#allocation9 + $0xd0] sm:$0xff]
    %v1148 = vld [vmem:[#allocation9 + $0xd8] sm:$0xff]
    %v1149 = vld [vmem:[#allocation9 + $0xe0] sm:$0xff]
    %v1150 = vld [vmem:[#allocation9 + $0xe8] sm:$0xff]
    %v1151 = vld [vmem:[#allocation9 + $0xf0] sm:$0xff]
    %v1152 = vld [vmem:[#allocation9 + $0xf8] sm:$0xff]
    %v1185 = vunpack.c.l.b16 %v1121
    %v1186 = vunpack.c.h.b16 %v1121
    %v1187 = vunpack.c.l.b16 %v1122
    %v1188 = vunpack.c.h.b16 %v1122
    %v1189 = vunpack.c.l.b16 %v1123
    %v1190 = vunpack.c.h.b16 %v1123
    %v1191 = vunpack.c.l.b16 %v1124
    %v1192 = vunpack.c.h.b16 %v1124
    %v1193 = vunpack.c.l.b16 %v1125
    %v1194 = vunpack.c.h.b16 %v1125
    %v1195 = vunpack.c.l.b16 %v1126
    %v1196 = vunpack.c.h.b16 %v1126
    %v1197 = vunpack.c.l.b16 %v1127
    %v1198 = vunpack.c.h.b16 %v1127
    %v1199 = vunpack.c.l.b16 %v1128
    %v1200 = vunpack.c.h.b16 %v1128
    %v1201 = vunpack.c.l.b16 %v1129
    %v1202 = vunpack.c.h.b16 %v1129
    %v1203 = vunpack.c.l.b16 %v1130
    %v1204 = vunpack.c.h.b16 %v1130
    %v1205 = vunpack.c.l.b16 %v1131
    %v1206 = vunpack.c.h.b16 %v1131
    %v1207 = vunpack.c.l.b16 %v1132
    %v1208 = vunpack.c.h.b16 %v1132
    %v1209 = vunpack.c.l.b16 %v1133
    %v1210 = vunpack.c.h.b16 %v1133
    %v1211 = vunpack.c.l.b16 %v1134
    %v1212 = vunpack.c.h.b16 %v1134
    %v1213 = vunpack.c.l.b16 %v1135
    %v1214 = vunpack.c.h.b16 %v1135
    %v1215 = vunpack.c.l.b16 %v1136
    %v1216 = vunpack.c.h.b16 %v1136
    %v1217 = vunpack.c.l.b16 %v1137
    %v1218 = vunpack.c.h.b16 %v1137
    %v1219 = vunpack.c.l.b16 %v1138
    %v1220 = vunpack.c.h.b16 %v1138
    %v1221 = vunpack.c.l.b16 %v1139
    %v1222 = vunpack.c.h.b16 %v1139
    %v1223 = vunpack.c.l.b16 %v1140
    %v1224 = vunpack.c.h.b16 %v1140
    %v1225 = vunpack.c.l.b16 %v1141
    %v1226 = vunpack.c.h.b16 %v1141
    %v1227 = vunpack.c.l.b16 %v1142
    %v1228 = vunpack.c.h.b16 %v1142
    %v1229 = vunpack.c.l.b16 %v1143
    %v1230 = vunpack.c.h.b16 %v1143
    %v1231 = vunpack.c.l.b16 %v1144
    %v1232 = vunpack.c.h.b16 %v1144
    %v1233 = vunpack.c.l.b16 %v1145
    %v1234 = vunpack.c.h.b16 %v1145
    %v1235 = vunpack.c.l.b16 %v1146
    %v1236 = vunpack.c.h.b16 %v1146
    %v1237 = vunpack.c.l.b16 %v1147
    %v1238 = vunpack.c.h.b16 %v1147
    %v1239 = vunpack.c.l.b16 %v1148
    %v1240 = vunpack.c.h.b16 %v1148
    %v1241 = vunpack.c.l.b16 %v1149
    %v1242 = vunpack.c.h.b16 %v1149
    %v1243 = vunpack.c.l.b16 %v1150
    %v1244 = vunpack.c.h.b16 %v1150
    %v1245 = vunpack.c.l.b16 %v1151
    %v1246 = vunpack.c.h.b16 %v1151
    %v1247 = vunpack.c.l.b16 %v1152
    %v1248 = vunpack.c.h.b16 %v1152
    %v1249 = vpack.c.b16 %v1187, %v1185
    %v1250 = vpack.c.b16 %v1188, %v1186
    %v1251 = vpack.c.b16 %v1191, %v1189
    %v1252 = vpack.c.b16 %v1192, %v1190
    %v1253 = vpack.c.b16 %v1195, %v1193
    %v1254 = vpack.c.b16 %v1196, %v1194
    %v1255 = vpack.c.b16 %v1199, %v1197
    %v1256 = vpack.c.b16 %v1200, %v1198
    %v1257 = vpack.c.b16 %v1203, %v1201
    %v1258 = vpack.c.b16 %v1204, %v1202
    %v1259 = vpack.c.b16 %v1207, %v1205
    %v1260 = vpack.c.b16 %v1208, %v1206
    %v1261 = vpack.c.b16 %v1211, %v1209
    %v1262 = vpack.c.b16 %v1212, %v1210
    %v1263 = vpack.c.b16 %v1215, %v1213
    %v1264 = vpack.c.b16 %v1216, %v1214
    %v1265 = vpack.c.b16 %v1219, %v1217
    %v1266 = vpack.c.b16 %v1220, %v1218
    %v1267 = vpack.c.b16 %v1223, %v1221
    %v1268 = vpack.c.b16 %v1224, %v1222
    %v1269 = vpack.c.b16 %v1227, %v1225
    %v1270 = vpack.c.b16 %v1228, %v1226
    %v1271 = vpack.c.b16 %v1231, %v1229
    %v1272 = vpack.c.b16 %v1232, %v1230
    %v1273 = vpack.c.b16 %v1235, %v1233
    %v1274 = vpack.c.b16 %v1236, %v1234
    %v1275 = vpack.c.b16 %v1239, %v1237
    %v1276 = vpack.c.b16 %v1240, %v1238
    %v1277 = vpack.c.b16 %v1243, %v1241
    %v1278 = vpack.c.b16 %v1244, %v1242
    %v1279 = vpack.c.b16 %v1247, %v1245
    %v1280 = vpack.c.b16 %v1248, %v1246
    %1313 = vmatprep.subr.bf16.mxu0 %v1250
    %1314 = vmatpush1.bf16.msra.mxu0 %v1249
    %1315 = vmatprep.subr.bf16.mxu0 %v1252
    %1316 = vmatpush1.bf16.msra.mxu0 %v1251
    %1317 = vmatprep.subr.bf16.mxu0 %v1254
    %1318 = vmatpush1.bf16.msra.mxu0 %v1253
    %1319 = vmatprep.subr.bf16.mxu0 %v1256
    %1320 = vmatpush1.bf16.msra.mxu0 %v1255
    %1321 = vmatprep.subr.bf16.mxu0 %v1258
    %1322 = vmatpush1.bf16.msra.mxu0 %v1257
    %1323 = vmatprep.subr.bf16.mxu0 %v1260
    %1324 = vmatpush1.bf16.msra.mxu0 %v1259
    %1325 = vmatprep.subr.bf16.mxu0 %v1262
    %1326 = vmatpush1.bf16.msra.mxu0 %v1261
    %1327 = vmatprep.subr.bf16.mxu0 %v1264
    %1328 = vmatpush1.bf16.msra.mxu0 %v1263
    %1329 = vmatprep.subr.bf16.mxu0 %v1266
    %1330 = vmatpush1.bf16.msra.mxu0 %v1265
    %1331 = vmatprep.subr.bf16.mxu0 %v1268
    %1332 = vmatpush1.bf16.msra.mxu0 %v1267
    %1333 = vmatprep.subr.bf16.mxu0 %v1270
    %1334 = vmatpush1.bf16.msra.mxu0 %v1269
    %1335 = vmatprep.subr.bf16.mxu0 %v1272
    %1336 = vmatpush1.bf16.msra.mxu0 %v1271
    %1337 = vmatprep.subr.bf16.mxu0 %v1274
    %1338 = vmatpush1.bf16.msra.mxu0 %v1273
    %1339 = vmatprep.subr.bf16.mxu0 %v1276
    %1340 = vmatpush1.bf16.msra.mxu0 %v1275
    %1341 = vmatprep.subr.bf16.mxu0 %v1278
    %1342 = vmatpush1.bf16.msra.mxu0 %v1277
    %1343 = vmatprep.subr.bf16.mxu0 %v1280
    %1344 = vmatpush1.bf16.msra.mxu0 %v1279
    %1345 = vmatprep.mubr.bf16.mxu0 %v1120
    %1346 = vmatmul.mubr.bf16.gmra.mrb[0].mxu0 %v1119
    %v1347 = vpop.f32.mrb[0].mxu0
    %v1348 = vadd.f32 %v112, %v1347
    %v1349 = vpop.f32.mrb[0].mxu0
    %v1350 = vadd.f32 %v113, %v1349
    %v1351 = vpop.f32.mrb[0].mxu0
    %v1352 = vpop.f32.mrb[0].mxu0
    %1353 = vdwg.mxu0
    %v1354 = vmul.f32 %v1348, %v1348
    %v1355 = vmul.f32 %v1350, %v1350
    %v1356 = vadd.f32 %v1354, %v1355
    %1357 = vadd.xlane.f32.xlu0 %v1356
    %v1358 = vpop.xlane.xlu0 %1357
    %v1359 = vmul.f32 %v1358, %v119
    %v1360 = vadd.f32 %v1359, 1e-06
    %v1361 = vrsqrt.pop %v1360
    %v1362 = vmul.f32 %v1348, %v1361
    %v1363 = vmul.f32 %v1350, %v1361
    %v1364 = vld [vmem:[%s6] sm:$0x3]
    %v1366 = vlaneseq
    %v1367 = vshrl.u32 %v1366, 7
    %v1368 = vsub.s32 0, %v1367
    %v1369 = vrot.slane %v1364, %v1368
    %v1370 = vlaneseq
    %v1371 = vshrl.u32 %v1370, 7
    %v1372 = vsub.s32 1, %v1371
    %v1373 = vrot.slane %v1364, %v1372
    %v1376 = vmul.f32 %v1362, %v1369
    %v1377 = vmul.f32 %v1363, %v1373
    %v1378 = vpack.c.bf16 %v1376, %v1376
    %v1379 = vpack.c.bf16 %v1377, %v1377
    %v1380 = vld [vmem:[#allocation11] sm:$0xff]
    %v1381 = vld [vmem:[#allocation11 + $0x8] sm:$0xff]
    %v1382 = vld [vmem:[#allocation11 + $0x10] sm:$0xff]
    %v1383 = vld [vmem:[#allocation11 + $0x18] sm:$0xff]
    %v1384 = vld [vmem:[#allocation11 + $0x20] sm:$0xff]
    %v1385 = vld [vmem:[#allocation11 + $0x28] sm:$0xff]
    %v1386 = vld [vmem:[#allocation11 + $0x30] sm:$0xff]
    %v1387 = vld [vmem:[#allocation11 + $0x38] sm:$0xff]
    %v1388 = vld [vmem:[#allocation11 + $0x40] sm:$0xff]
    %v1389 = vld [vmem:[#allocation11 + $0x48] sm:$0xff]
    %v1390 = vld [vmem:[#allocation11 + $0x50] sm:$0xff]
    %v1391 = vld [vmem:[#allocation11 + $0x58] sm:$0xff]
    %v1392 = vld [vmem:[#allocation11 + $0x60] sm:$0xff]
    %v1393 = vld [vmem:[#allocation11 + $0x68] sm:$0xff]
    %v1394 = vld [vmem:[#allocation11 + $0x70] sm:$0xff]
    %v1395 = vld [vmem:[#allocation11 + $0x78] sm:$0xff]
    %v1396 = vld [vmem:[#allocation11 + $0x80] sm:$0xff]
    %v1397 = vld [vmem:[#allocation11 + $0x88] sm:$0xff]
    %v1398 = vld [vmem:[#allocation11 + $0x90] sm:$0xff]
    %v1399 = vld [vmem:[#allocation11 + $0x98] sm:$0xff]
    %v1400 = vld [vmem:[#allocation11 + $0xa0] sm:$0xff]
    %v1401 = vld [vmem:[#allocation11 + $0xa8] sm:$0xff]
    %v1402 = vld [vmem:[#allocation11 + $0xb0] sm:$0xff]
    %v1403 = vld [vmem:[#allocation11 + $0xb8] sm:$0xff]
    %v1404 = vld [vmem:[#allocation11 + $0xc0] sm:$0xff]
    %v1405 = vld [vmem:[#allocation11 + $0xc8] sm:$0xff]
    %v1406 = vld [vmem:[#allocation11 + $0xd0] sm:$0xff]
    %v1407 = vld [vmem:[#allocation11 + $0xd8] sm:$0xff]
    %v1408 = vld [vmem:[#allocation11 + $0xe0] sm:$0xff]
    %v1409 = vld [vmem:[#allocation11 + $0xe8] sm:$0xff]
    %v1410 = vld [vmem:[#allocation11 + $0xf0] sm:$0xff]
    %v1411 = vld [vmem:[#allocation11 + $0xf8] sm:$0xff]
    %v1412 = vld [vmem:[#allocation11 + $0x100] sm:$0xff]
    %v1413 = vld [vmem:[#allocation11 + $0x108] sm:$0xff]
    %v1414 = vld [vmem:[#allocation11 + $0x110] sm:$0xff]
    %v1415 = vld [vmem:[#allocation11 + $0x118] sm:$0xff]
    %v1416 = vld [vmem:[#allocation11 + $0x120] sm:$0xff]
    %v1417 = vld [vmem:[#allocation11 + $0x128] sm:$0xff]
    %v1418 = vld [vmem:[#allocation11 + $0x130] sm:$0xff]
    %v1419 = vld [vmem:[#allocation11 + $0x138] sm:$0xff]
    %v1420 = vld [vmem:[#allocation11 + $0x140] sm:$0xff]
    %v1421 = vld [vmem:[#allocation11 + $0x148] sm:$0xff]
    %v1422 = vld [vmem:[#allocation11 + $0x150] sm:$0xff]
    %v1423 = vld [vmem:[#allocation11 + $0x158] sm:$0xff]
    %v1424 = vld [vmem:[#allocation11 + $0x160] sm:$0xff]
    %v1425 = vld [vmem:[#allocation11 + $0x168] sm:$0xff]
    %v1426 = vld [vmem:[#allocation11 + $0x170] sm:$0xff]
    %v1427 = vld [vmem:[#allocation11 + $0x178] sm:$0xff]
    %v1428 = vld [vmem:[#allocation11 + $0x180] sm:$0xff]
    %v1429 = vld [vmem:[#allocation11 + $0x188] sm:$0xff]
    %v1430 = vld [vmem:[#allocation11 + $0x190] sm:$0xff]
    %v1431 = vld [vmem:[#allocation11 + $0x198] sm:$0xff]
    %v1432 = vld [vmem:[#allocation11 + $0x1a0] sm:$0xff]
    %v1433 = vld [vmem:[#allocation11 + $0x1a8] sm:$0xff]
    %v1434 = vld [vmem:[#allocation11 + $0x1b0] sm:$0xff]
    %v1435 = vld [vmem:[#allocation11 + $0x1b8] sm:$0xff]
    %v1436 = vld [vmem:[#allocation11 + $0x1c0] sm:$0xff]
    %v1437 = vld [vmem:[#allocation11 + $0x1c8] sm:$0xff]
    %v1438 = vld [vmem:[#allocation11 + $0x1d0] sm:$0xff]
    %v1439 = vld [vmem:[#allocation11 + $0x1d8] sm:$0xff]
    %v1440 = vld [vmem:[#allocation11 + $0x1e0] sm:$0xff]
    %v1441 = vld [vmem:[#allocation11 + $0x1e8] sm:$0xff]
    %v1442 = vld [vmem:[#allocation11 + $0x1f0] sm:$0xff]
    %v1443 = vld [vmem:[#allocation11 + $0x1f8] sm:$0xff]
    %v1444 = vld [vmem:[#allocation11 + $0x200] sm:$0xff]
    %v1445 = vld [vmem:[#allocation11 + $0x208] sm:$0xff]
    %v1446 = vld [vmem:[#allocation11 + $0x210] sm:$0xff]
    %v1447 = vld [vmem:[#allocation11 + $0x218] sm:$0xff]
    %v1448 = vld [vmem:[#allocation11 + $0x220] sm:$0xff]
    %v1449 = vld [vmem:[#allocation11 + $0x228] sm:$0xff]
    %v1450 = vld [vmem:[#allocation11 + $0x230] sm:$0xff]
    %v1451 = vld [vmem:[#allocation11 + $0x238] sm:$0xff]
    %v1452 = vld [vmem:[#allocation11 + $0x240] sm:$0xff]
    %v1453 = vld [vmem:[#allocation11 + $0x248] sm:$0xff]
    %v1454 = vld [vmem:[#allocation11 + $0x250] sm:$0xff]
    %v1455 = vld [vmem:[#allocation11 + $0x258] sm:$0xff]
    %v1456 = vld [vmem:[#allocation11 + $0x260] sm:$0xff]
    %v1457 = vld [vmem:[#allocation11 + $0x268] sm:$0xff]
    %v1458 = vld [vmem:[#allocation11 + $0x270] sm:$0xff]
    %v1459 = vld [vmem:[#allocation11 + $0x278] sm:$0xff]
    %v1460 = vld [vmem:[#allocation11 + $0x280] sm:$0xff]
    %v1461 = vld [vmem:[#allocation11 + $0x288] sm:$0xff]
    %v1462 = vld [vmem:[#allocation11 + $0x290] sm:$0xff]
    %v1463 = vld [vmem:[#allocation11 + $0x298] sm:$0xff]
    %v1464 = vld [vmem:[#allocation11 + $0x2a0] sm:$0xff]
    %v1465 = vld [vmem:[#allocation11 + $0x2a8] sm:$0xff]
    %v1466 = vld [vmem:[#allocation11 + $0x2b0] sm:$0xff]
    %v1467 = vld [vmem:[#allocation11 + $0x2b8] sm:$0xff]
    %v1468 = vld [vmem:[#allocation11 + $0x2c0] sm:$0xff]
    %v1469 = vld [vmem:[#allocation11 + $0x2c8] sm:$0xff]
    %v1470 = vld [vmem:[#allocation11 + $0x2d0] sm:$0xff]
    %v1471 = vld [vmem:[#allocation11 + $0x2d8] sm:$0xff]
    %v1472 = vld [vmem:[#allocation11 + $0x2e0] sm:$0xff]
    %v1473 = vld [vmem:[#allocation11 + $0x2e8] sm:$0xff]
    %v1474 = vld [vmem:[#allocation11 + $0x2f0] sm:$0xff]
    %v1475 = vld [vmem:[#allocation11 + $0x2f8] sm:$0xff]
    %v1476 = vld [vmem:[#allocation11 + $0x300] sm:$0xff]
    %v1477 = vld [vmem:[#allocation11 + $0x308] sm:$0xff]
    %v1478 = vld [vmem:[#allocation11 + $0x310] sm:$0xff]
    %v1479 = vld [vmem:[#allocation11 + $0x318] sm:$0xff]
    %v1480 = vld [vmem:[#allocation11 + $0x320] sm:$0xff]
    %v1481 = vld [vmem:[#allocation11 + $0x328] sm:$0xff]
    %v1482 = vld [vmem:[#allocation11 + $0x330] sm:$0xff]
    %v1483 = vld [vmem:[#allocation11 + $0x338] sm:$0xff]
    %v1484 = vld [vmem:[#allocation11 + $0x340] sm:$0xff]
    %v1485 = vld [vmem:[#allocation11 + $0x348] sm:$0xff]
    %v1486 = vld [vmem:[#allocation11 + $0x350] sm:$0xff]
    %v1487 = vld [vmem:[#allocation11 + $0x358] sm:$0xff]
    %v1488 = vld [vmem:[#allocation11 + $0x360] sm:$0xff]
    %v1489 = vld [vmem:[#allocation11 + $0x368] sm:$0xff]
    %v1490 = vld [vmem:[#allocation11 + $0x370] sm:$0xff]
    %v1491 = vld [vmem:[#allocation11 + $0x378] sm:$0xff]
    %v1492 = vld [vmem:[#allocation11 + $0x380] sm:$0xff]
    %v1493 = vld [vmem:[#allocation11 + $0x388] sm:$0xff]
    %v1494 = vld [vmem:[#allocation11 + $0x390] sm:$0xff]
    %v1495 = vld [vmem:[#allocation11 + $0x398] sm:$0xff]
    %v1496 = vld [vmem:[#allocation11 + $0x3a0] sm:$0xff]
    %v1497 = vld [vmem:[#allocation11 + $0x3a8] sm:$0xff]
    %v1498 = vld [vmem:[#allocation11 + $0x3b0] sm:$0xff]
    %v1499 = vld [vmem:[#allocation11 + $0x3b8] sm:$0xff]
    %v1500 = vld [vmem:[#allocation11 + $0x3c0] sm:$0xff]
    %v1501 = vld [vmem:[#allocation11 + $0x3c8] sm:$0xff]
    %v1502 = vld [vmem:[#allocation11 + $0x3d0] sm:$0xff]
    %v1503 = vld [vmem:[#allocation11 + $0x3d8] sm:$0xff]
    %v1504 = vld [vmem:[#allocation11 + $0x3e0] sm:$0xff]
    %v1505 = vld [vmem:[#allocation11 + $0x3e8] sm:$0xff]
    %v1506 = vld [vmem:[#allocation11 + $0x3f0] sm:$0xff]
    %v1507 = vld [vmem:[#allocation11 + $0x3f8] sm:$0xff]
    %v1636 = vunpack.c.l.b16 %v1380
    %v1637 = vunpack.c.h.b16 %v1380
    %v1638 = vunpack.c.l.b16 %v1381
    %v1639 = vunpack.c.h.b16 %v1381
    %v1640 = vunpack.c.l.b16 %v1382
    %v1641 = vunpack.c.h.b16 %v1382
    %v1642 = vunpack.c.l.b16 %v1383
    %v1643 = vunpack.c.h.b16 %v1383
    %v1644 = vunpack.c.l.b16 %v1384
    %v1645 = vunpack.c.h.b16 %v1384
    %v1646 = vunpack.c.l.b16 %v1385
    %v1647 = vunpack.c.h.b16 %v1385
    %v1648 = vunpack.c.l.b16 %v1386
    %v1649 = vunpack.c.h.b16 %v1386
    %v1650 = vunpack.c.l.b16 %v1387
    %v1651 = vunpack.c.h.b16 %v1387
    %v1652 = vunpack.c.l.b16 %v1388
    %v1653 = vunpack.c.h.b16 %v1388
    %v1654 = vunpack.c.l.b16 %v1389
    %v1655 = vunpack.c.h.b16 %v1389
    %v1656 = vunpack.c.l.b16 %v1390
    %v1657 = vunpack.c.h.b16 %v1390
    %v1658 = vunpack.c.l.b16 %v1391
    %v1659 = vunpack.c.h.b16 %v1391
    %v1660 = vunpack.c.l.b16 %v1392
    %v1661 = vunpack.c.h.b16 %v1392
    %v1662 = vunpack.c.l.b16 %v1393
    %v1663 = vunpack.c.h.b16 %v1393
    %v1664 = vunpack.c.l.b16 %v1394
    %v1665 = vunpack.c.h.b16 %v1394
    %v1666 = vunpack.c.l.b16 %v1395
    %v1667 = vunpack.c.h.b16 %v1395
    %v1668 = vunpack.c.l.b16 %v1396
    %v1669 = vunpack.c.h.b16 %v1396
    %v1670 = vunpack.c.l.b16 %v1397
    %v1671 = vunpack.c.h.b16 %v1397
    %v1672 = vunpack.c.l.b16 %v1398
    %v1673 = vunpack.c.h.b16 %v1398
    %v1674 = vunpack.c.l.b16 %v1399
    %v1675 = vunpack.c.h.b16 %v1399
    %v1676 = vunpack.c.l.b16 %v1400
    %v1677 = vunpack.c.h.b16 %v1400
    %v1678 = vunpack.c.l.b16 %v1401
    %v1679 = vunpack.c.h.b16 %v1401
    %v1680 = vunpack.c.l.b16 %v1402
    %v1681 = vunpack.c.h.b16 %v1402
    %v1682 = vunpack.c.l.b16 %v1403
    %v1683 = vunpack.c.h.b16 %v1403
    %v1684 = vunpack.c.l.b16 %v1404
    %v1685 = vunpack.c.h.b16 %v1404
    %v1686 = vunpack.c.l.b16 %v1405
    %v1687 = vunpack.c.h.b16 %v1405
    %v1688 = vunpack.c.l.b16 %v1406
    %v1689 = vunpack.c.h.b16 %v1406
    %v1690 = vunpack.c.l.b16 %v1407
    %v1691 = vunpack.c.h.b16 %v1407
    %v1692 = vunpack.c.l.b16 %v1408
    %v1693 = vunpack.c.h.b16 %v1408
    %v1694 = vunpack.c.l.b16 %v1409
    %v1695 = vunpack.c.h.b16 %v1409
    %v1696 = vunpack.c.l.b16 %v1410
    %v1697 = vunpack.c.h.b16 %v1410
    %v1698 = vunpack.c.l.b16 %v1411
    %v1699 = vunpack.c.h.b16 %v1411
    %v1700 = vunpack.c.l.b16 %v1412
    %v1701 = vunpack.c.h.b16 %v1412
    %v1702 = vunpack.c.l.b16 %v1413
    %v1703 = vunpack.c.h.b16 %v1413
    %v1704 = vunpack.c.l.b16 %v1414
    %v1705 = vunpack.c.h.b16 %v1414
    %v1706 = vunpack.c.l.b16 %v1415
    %v1707 = vunpack.c.h.b16 %v1415
    %v1708 = vunpack.c.l.b16 %v1416
    %v1709 = vunpack.c.h.b16 %v1416
    %v1710 = vunpack.c.l.b16 %v1417
    %v1711 = vunpack.c.h.b16 %v1417
    %v1712 = vunpack.c.l.b16 %v1418
    %v1713 = vunpack.c.h.b16 %v1418
    %v1714 = vunpack.c.l.b16 %v1419
    %v1715 = vunpack.c.h.b16 %v1419
    %v1716 = vunpack.c.l.b16 %v1420
    %v1717 = vunpack.c.h.b16 %v1420
    %v1718 = vunpack.c.l.b16 %v1421
    %v1719 = vunpack.c.h.b16 %v1421
    %v1720 = vunpack.c.l.b16 %v1422
    %v1721 = vunpack.c.h.b16 %v1422
    %v1722 = vunpack.c.l.b16 %v1423
    %v1723 = vunpack.c.h.b16 %v1423
    %v1724 = vunpack.c.l.b16 %v1424
    %v1725 = vunpack.c.h.b16 %v1424
    %v1726 = vunpack.c.l.b16 %v1425
    %v1727 = vunpack.c.h.b16 %v1425
    %v1728 = vunpack.c.l.b16 %v1426
    %v1729 = vunpack.c.h.b16 %v1426
    %v1730 = vunpack.c.l.b16 %v1427
    %v1731 = vunpack.c.h.b16 %v1427
    %v1732 = vunpack.c.l.b16 %v1428
    %v1733 = vunpack.c.h.b16 %v1428
    %v1734 = vunpack.c.l.b16 %v1429
    %v1735 = vunpack.c.h.b16 %v1429
    %v1736 = vunpack.c.l.b16 %v1430
    %v1737 = vunpack.c.h.b16 %v1430
    %v1738 = vunpack.c.l.b16 %v1431
    %v1739 = vunpack.c.h.b16 %v1431
    %v1740 = vunpack.c.l.b16 %v1432
    %v1741 = vunpack.c.h.b16 %v1432
    %v1742 = vunpack.c.l.b16 %v1433
    %v1743 = vunpack.c.h.b16 %v1433
    %v1744 = vunpack.c.l.b16 %v1434
    %v1745 = vunpack.c.h.b16 %v1434
    %v1746 = vunpack.c.l.b16 %v1435
    %v1747 = vunpack.c.h.b16 %v1435
    %v1748 = vunpack.c.l.b16 %v1436
    %v1749 = vunpack.c.h.b16 %v1436
    %v1750 = vunpack.c.l.b16 %v1437
    %v1751 = vunpack.c.h.b16 %v1437
    %v1752 = vunpack.c.l.b16 %v1438
    %v1753 = vunpack.c.h.b16 %v1438
    %v1754 = vunpack.c.l.b16 %v1439
    %v1755 = vunpack.c.h.b16 %v1439
    %v1756 = vunpack.c.l.b16 %v1440
    %v1757 = vunpack.c.h.b16 %v1440
    %v1758 = vunpack.c.l.b16 %v1441
    %v1759 = vunpack.c.h.b16 %v1441
    %v1760 = vunpack.c.l.b16 %v1442
    %v1761 = vunpack.c.h.b16 %v1442
    %v1762 = vunpack.c.l.b16 %v1443
    %v1763 = vunpack.c.h.b16 %v1443
    %v1764 = vunpack.c.l.b16 %v1444
    %v1765 = vunpack.c.h.b16 %v1444
    %v1766 = vunpack.c.l.b16 %v1445
    %v1767 = vunpack.c.h.b16 %v1445
    %v1768 = vunpack.c.l.b16 %v1446
    %v1769 = vunpack.c.h.b16 %v1446
    %v1770 = vunpack.c.l.b16 %v1447
    %v1771 = vunpack.c.h.b16 %v1447
    %v1772 = vunpack.c.l.b16 %v1448
    %v1773 = vunpack.c.h.b16 %v1448
    %v1774 = vunpack.c.l.b16 %v1449
    %v1775 = vunpack.c.h.b16 %v1449
    %v1776 = vunpack.c.l.b16 %v1450
    %v1777 = vunpack.c.h.b16 %v1450
    %v1778 = vunpack.c.l.b16 %v1451
    %v1779 = vunpack.c.h.b16 %v1451
    %v1780 = vunpack.c.l.b16 %v1452
    %v1781 = vunpack.c.h.b16 %v1452
    %v1782 = vunpack.c.l.b16 %v1453
    %v1783 = vunpack.c.h.b16 %v1453
    %v1784 = vunpack.c.l.b16 %v1454
    %v1785 = vunpack.c.h.b16 %v1454
    %v1786 = vunpack.c.l.b16 %v1455
    %v1787 = vunpack.c.h.b16 %v1455
    %v1788 = vunpack.c.l.b16 %v1456
    %v1789 = vunpack.c.h.b16 %v1456
    %v1790 = vunpack.c.l.b16 %v1457
    %v1791 = vunpack.c.h.b16 %v1457
    %v1792 = vunpack.c.l.b16 %v1458
    %v1793 = vunpack.c.h.b16 %v1458
    %v1794 = vunpack.c.l.b16 %v1459
    %v1795 = vunpack.c.h.b16 %v1459
    %v1796 = vunpack.c.l.b16 %v1460
    %v1797 = vunpack.c.h.b16 %v1460
    %v1798 = vunpack.c.l.b16 %v1461
    %v1799 = vunpack.c.h.b16 %v1461
    %v1800 = vunpack.c.l.b16 %v1462
    %v1801 = vunpack.c.h.b16 %v1462
    %v1802 = vunpack.c.l.b16 %v1463
    %v1803 = vunpack.c.h.b16 %v1463
    %v1804 = vunpack.c.l.b16 %v1464
    %v1805 = vunpack.c.h.b16 %v1464
    %v1806 = vunpack.c.l.b16 %v1465
    %v1807 = vunpack.c.h.b16 %v1465
    %v1808 = vunpack.c.l.b16 %v1466
    %v1809 = vunpack.c.h.b16 %v1466
    %v1810 = vunpack.c.l.b16 %v1467
    %v1811 = vunpack.c.h.b16 %v1467
    %v1812 = vunpack.c.l.b16 %v1468
    %v1813 = vunpack.c.h.b16 %v1468
    %v1814 = vunpack.c.l.b16 %v1469
    %v1815 = vunpack.c.h.b16 %v1469
    %v1816 = vunpack.c.l.b16 %v1470
    %v1817 = vunpack.c.h.b16 %v1470
    %v1818 = vunpack.c.l.b16 %v1471
    %v1819 = vunpack.c.h.b16 %v1471
    %v1820 = vunpack.c.l.b16 %v1472
    %v1821 = vunpack.c.h.b16 %v1472
    %v1822 = vunpack.c.l.b16 %v1473
    %v1823 = vunpack.c.h.b16 %v1473
    %v1824 = vunpack.c.l.b16 %v1474
    %v1825 = vunpack.c.h.b16 %v1474
    %v1826 = vunpack.c.l.b16 %v1475
    %v1827 = vunpack.c.h.b16 %v1475
    %v1828 = vunpack.c.l.b16 %v1476
    %v1829 = vunpack.c.h.b16 %v1476
    %v1830 = vunpack.c.l.b16 %v1477
    %v1831 = vunpack.c.h.b16 %v1477
    %v1832 = vunpack.c.l.b16 %v1478
    %v1833 = vunpack.c.h.b16 %v1478
    %v1834 = vunpack.c.l.b16 %v1479
    %v1835 = vunpack.c.h.b16 %v1479
    %v1836 = vunpack.c.l.b16 %v1480
    %v1837 = vunpack.c.h.b16 %v1480
    %v1838 = vunpack.c.l.b16 %v1481
    %v1839 = vunpack.c.h.b16 %v1481
    %v1840 = vunpack.c.l.b16 %v1482
    %v1841 = vunpack.c.h.b16 %v1482
    %v1842 = vunpack.c.l.b16 %v1483
    %v1843 = vunpack.c.h.b16 %v1483
    %v1844 = vunpack.c.l.b16 %v1484
    %v1845 = vunpack.c.h.b16 %v1484
    %v1846 = vunpack.c.l.b16 %v1485
    %v1847 = vunpack.c.h.b16 %v1485
    %v1848 = vunpack.c.l.b16 %v1486
    %v1849 = vunpack.c.h.b16 %v1486
    %v1850 = vunpack.c.l.b16 %v1487
    %v1851 = vunpack.c.h.b16 %v1487
    %v1852 = vunpack.c.l.b16 %v1488
    %v1853 = vunpack.c.h.b16 %v1488
    %v1854 = vunpack.c.l.b16 %v1489
    %v1855 = vunpack.c.h.b16 %v1489
    %v1856 = vunpack.c.l.b16 %v1490
    %v1857 = vunpack.c.h.b16 %v1490
    %v1858 = vunpack.c.l.b16 %v1491
    %v1859 = vunpack.c.h.b16 %v1491
    %v1860 = vunpack.c.l.b16 %v1492
    %v1861 = vunpack.c.h.b16 %v1492
    %v1862 = vunpack.c.l.b16 %v1493
    %v1863 = vunpack.c.h.b16 %v1493
    %v1864 = vunpack.c.l.b16 %v1494
    %v1865 = vunpack.c.h.b16 %v1494
    %v1866 = vunpack.c.l.b16 %v1495
    %v1867 = vunpack.c.h.b16 %v1495
    %v1868 = vunpack.c.l.b16 %v1496
    %v1869 = vunpack.c.h.b16 %v1496
    %v1870 = vunpack.c.l.b16 %v1497
    %v1871 = vunpack.c.h.b16 %v1497
    %v1872 = vunpack.c.l.b16 %v1498
    %v1873 = vunpack.c.h.b16 %v1498
    %v1874 = vunpack.c.l.b16 %v1499
    %v1875 = vunpack.c.h.b16 %v1499
    %v1876 = vunpack.c.l.b16 %v1500
    %v1877 = vunpack.c.h.b16 %v1500
    %v1878 = vunpack.c.l.b16 %v1501
    %v1879 = vunpack.c.h.b16 %v1501
    %v1880 = vunpack.c.l.b16 %v1502
    %v1881 = vunpack.c.h.b16 %v1502
    %v1882 = vunpack.c.l.b16 %v1503
    %v1883 = vunpack.c.h.b16 %v1503
    %v1884 = vunpack.c.l.b16 %v1504
    %v1885 = vunpack.c.h.b16 %v1504
    %v1886 = vunpack.c.l.b16 %v1505
    %v1887 = vunpack.c.h.b16 %v1505
    %v1888 = vunpack.c.l.b16 %v1506
    %v1889 = vunpack.c.h.b16 %v1506
    %v1890 = vunpack.c.l.b16 %v1507
    %v1891 = vunpack.c.h.b16 %v1507
    %v1892 = vpack.c.b16 %v1644, %v1636
    %v1893 = vpack.c.b16 %v1645, %v1637
    %v1894 = vpack.c.b16 %v1646, %v1638
    %v1895 = vpack.c.b16 %v1647, %v1639
    %v1896 = vpack.c.b16 %v1648, %v1640
    %v1897 = vpack.c.b16 %v1649, %v1641
    %v1898 = vpack.c.b16 %v1650, %v1642
    %v1899 = vpack.c.b16 %v1651, %v1643
    %v1900 = vpack.c.b16 %v1660, %v1652
    %v1901 = vpack.c.b16 %v1661, %v1653
    %v1902 = vpack.c.b16 %v1662, %v1654
    %v1903 = vpack.c.b16 %v1663, %v1655
    %v1904 = vpack.c.b16 %v1664, %v1656
    %v1905 = vpack.c.b16 %v1665, %v1657
    %v1906 = vpack.c.b16 %v1666, %v1658
    %v1907 = vpack.c.b16 %v1667, %v1659
    %v1908 = vpack.c.b16 %v1676, %v1668
    %v1909 = vpack.c.b16 %v1677, %v1669
    %v1910 = vpack.c.b16 %v1678, %v1670
    %v1911 = vpack.c.b16 %v1679, %v1671
    %v1912 = vpack.c.b16 %v1680, %v1672
    %v1913 = vpack.c.b16 %v1681, %v1673
    %v1914 = vpack.c.b16 %v1682, %v1674
    %v1915 = vpack.c.b16 %v1683, %v1675
    %v1916 = vpack.c.b16 %v1692, %v1684
    %v1917 = vpack.c.b16 %v1693, %v1685
    %v1918 = vpack.c.b16 %v1694, %v1686
    %v1919 = vpack.c.b16 %v1695, %v1687
    %v1920 = vpack.c.b16 %v1696, %v1688
    %v1921 = vpack.c.b16 %v1697, %v1689
    %v1922 = vpack.c.b16 %v1698, %v1690
    %v1923 = vpack.c.b16 %v1699, %v1691
    %v1924 = vpack.c.b16 %v1708, %v1700
    %v1925 = vpack.c.b16 %v1709, %v1701
    %v1926 = vpack.c.b16 %v1710, %v1702
    %v1927 = vpack.c.b16 %v1711, %v1703
    %v1928 = vpack.c.b16 %v1712, %v1704
    %v1929 = vpack.c.b16 %v1713, %v1705
    %v1930 = vpack.c.b16 %v1714, %v1706
    %v1931 = vpack.c.b16 %v1715, %v1707
    %v1932 = vpack.c.b16 %v1724, %v1716
    %v1933 = vpack.c.b16 %v1725, %v1717
    %v1934 = vpack.c.b16 %v1726, %v1718
    %v1935 = vpack.c.b16 %v1727, %v1719
    %v1936 = vpack.c.b16 %v1728, %v1720
    %v1937 = vpack.c.b16 %v1729, %v1721
    %v1938 = vpack.c.b16 %v1730, %v1722
    %v1939 = vpack.c.b16 %v1731, %v1723
    %v1940 = vpack.c.b16 %v1740, %v1732
    %v1941 = vpack.c.b16 %v1741, %v1733
    %v1942 = vpack.c.b16 %v1742, %v1734
    %v1943 = vpack.c.b16 %v1743, %v1735
    %v1944 = vpack.c.b16 %v1744, %v1736
    %v1945 = vpack.c.b16 %v1745, %v1737
    %v1946 = vpack.c.b16 %v1746, %v1738
    %v1947 = vpack.c.b16 %v1747, %v1739
    %v1948 = vpack.c.b16 %v1756, %v1748
    %v1949 = vpack.c.b16 %v1757, %v1749
    %v1950 = vpack.c.b16 %v1758, %v1750
    %v1951 = vpack.c.b16 %v1759, %v1751
    %v1952 = vpack.c.b16 %v1760, %v1752
    %v1953 = vpack.c.b16 %v1761, %v1753
    %v1954 = vpack.c.b16 %v1762, %v1754
    %v1955 = vpack.c.b16 %v1763, %v1755
    %v1956 = vpack.c.b16 %v1772, %v1764
    %v1957 = vpack.c.b16 %v1773, %v1765
    %v1958 = vpack.c.b16 %v1774, %v1766
    %v1959 = vpack.c.b16 %v1775, %v1767
    %v1960 = vpack.c.b16 %v1776, %v1768
    %v1961 = vpack.c.b16 %v1777, %v1769
    %v1962 = vpack.c.b16 %v1778, %v1770
    %v1963 = vpack.c.b16 %v1779, %v1771
    %v1964 = vpack.c.b16 %v1788, %v1780
    %v1965 = vpack.c.b16 %v1789, %v1781
    %v1966 = vpack.c.b16 %v1790, %v1782
    %v1967 = vpack.c.b16 %v1791, %v1783
    %v1968 = vpack.c.b16 %v1792, %v1784
    %v1969 = vpack.c.b16 %v1793, %v1785
    %v1970 = vpack.c.b16 %v1794, %v1786
    %v1971 = vpack.c.b16 %v1795, %v1787
    %v1972 = vpack.c.b16 %v1804, %v1796
    %v1973 = vpack.c.b16 %v1805, %v1797
    %v1974 = vpack.c.b16 %v1806, %v1798
    %v1975 = vpack.c.b16 %v1807, %v1799
    %v1976 = vpack.c.b16 %v1808, %v1800
    %v1977 = vpack.c.b16 %v1809, %v1801
    %v1978 = vpack.c.b16 %v1810, %v1802
    %v1979 = vpack.c.b16 %v1811, %v1803
    %v1980 = vpack.c.b16 %v1820, %v1812
    %v1981 = vpack.c.b16 %v1821, %v1813
    %v1982 = vpack.c.b16 %v1822, %v1814
    %v1983 = vpack.c.b16 %v1823, %v1815
    %v1984 = vpack.c.b16 %v1824, %v1816
    %v1985 = vpack.c.b16 %v1825, %v1817
    %v1986 = vpack.c.b16 %v1826, %v1818
    %v1987 = vpack.c.b16 %v1827, %v1819
    %v1988 = vpack.c.b16 %v1836, %v1828
    %v1989 = vpack.c.b16 %v1837, %v1829
    %v1990 = vpack.c.b16 %v1838, %v1830
    %v1991 = vpack.c.b16 %v1839, %v1831
    %v1992 = vpack.c.b16 %v1840, %v1832
    %v1993 = vpack.c.b16 %v1841, %v1833
    %v1994 = vpack.c.b16 %v1842, %v1834
    %v1995 = vpack.c.b16 %v1843, %v1835
    %v1996 = vpack.c.b16 %v1852, %v1844
    %v1997 = vpack.c.b16 %v1853, %v1845
    %v1998 = vpack.c.b16 %v1854, %v1846
    %v1999 = vpack.c.b16 %v1855, %v1847
    %v2000 = vpack.c.b16 %v1856, %v1848
    %v2001 = vpack.c.b16 %v1857, %v1849
    %v2002 = vpack.c.b16 %v1858, %v1850
    %v2003 = vpack.c.b16 %v1859, %v1851
    %v2004 = vpack.c.b16 %v1868, %v1860
    %v2005 = vpack.c.b16 %v1869, %v1861
    %v2006 = vpack.c.b16 %v1870, %v1862
    %v2007 = vpack.c.b16 %v1871, %v1863
    %v2008 = vpack.c.b16 %v1872, %v1864
    %v2009 = vpack.c.b16 %v1873, %v1865
    %v2010 = vpack.c.b16 %v1874, %v1866
    %v2011 = vpack.c.b16 %v1875, %v1867
    %v2012 = vpack.c.b16 %v1884, %v1876
    %v2013 = vpack.c.b16 %v1885, %v1877
    %v2014 = vpack.c.b16 %v1886, %v1878
    %v2015 = vpack.c.b16 %v1887, %v1879
    %v2016 = vpack.c.b16 %v1888, %v1880
    %v2017 = vpack.c.b16 %v1889, %v1881
    %v2018 = vpack.c.b16 %v1890, %v1882
    %v2019 = vpack.c.b16 %v1891, %v1883
    %2148 = vmatprep.subr.bf16.mxu0 %v1893
    %2149 = vmatpush1.bf16.msra.mxu0 %v1892
    %2150 = vmatprep.subr.bf16.mxu0 %v1901
    %2151 = vmatpush1.bf16.msra.mxu0 %v1900
    %2152 = vmatprep.subr.bf16.mxu0 %v1909
    %2153 = vmatpush1.bf16.msra.mxu0 %v1908
    %2154 = vmatprep.subr.bf16.mxu0 %v1917
    %2155 = vmatpush1.bf16.msra.mxu0 %v1916
    %2156 = vmatprep.subr.bf16.mxu0 %v1925
    %2157 = vmatpush1.bf16.msra.mxu0 %v1924
    %2158 = vmatprep.subr.bf16.mxu0 %v1933
    %2159 = vmatpush1.bf16.msra.mxu0 %v1932
    %2160 = vmatprep.subr.bf16.mxu0 %v1941
    %2161 = vmatpush1.bf16.msra.mxu0 %v1940
    %2162 = vmatprep.subr.bf16.mxu0 %v1949
    %2163 = vmatpush1.bf16.msra.mxu0 %v1948
    %2164 = vmatprep.subr.bf16.mxu0 %v1957
    %2165 = vmatpush1.bf16.msra.mxu0 %v1956
    %2166 = vmatprep.subr.bf16.mxu0 %v1965
    %2167 = vmatpush1.bf16.msra.mxu0 %v1964
    %2168 = vmatprep.subr.bf16.mxu0 %v1973
    %2169 = vmatpush1.bf16.msra.mxu0 %v1972
    %2170 = vmatprep.subr.bf16.mxu0 %v1981
    %2171 = vmatpush1.bf16.msra.mxu0 %v1980
    %2172 = vmatprep.subr.bf16.mxu0 %v1989
    %2173 = vmatpush1.bf16.msra.mxu0 %v1988
    %2174 = vmatprep.subr.bf16.mxu0 %v1997
    %2175 = vmatpush1.bf16.msra.mxu0 %v1996
    %2176 = vmatprep.subr.bf16.mxu0 %v2005
    %2177 = vmatpush1.bf16.msra.mxu0 %v2004
    %2178 = vmatprep.subr.bf16.mxu0 %v2013
    %2179 = vmatpush1.bf16.msra.mxu0 %v2012
    %2180 = vmatprep.mubr.bf16.mxu0 %v1379
    %2181 = vmatmul.mubr.bf16.gmra.mrb[0].mxu0 %v1378
    %v2182 = vpop.f32.mrb[0].mxu0
    %v2183 = vadd.f32 0.0, %v2182
    %v2184 = vpop.f32.mrb[0].mxu0
    %v2185 = vadd.f32 0.0, %v2184
    %v2186 = vpop.f32.mrb[0].mxu0
    %v2187 = vpop.f32.mrb[0].mxu0
    %2188 = vdwg.mxu0
    %2189 = vmatprep.subr.bf16.mxu0 %v1895
    %2190 = vmatpush1.bf16.msra.mxu0 %v1894
    %2191 = vmatprep.subr.bf16.mxu0 %v1903
    %2192 = vmatpush1.bf16.msra.mxu0 %v1902
    %2193 = vmatprep.subr.bf16.mxu0 %v1911
    %2194 = vmatpush1.bf16.msra.mxu0 %v1910
    %2195 = vmatprep.subr.bf16.mxu0 %v1919
    %2196 = vmatpush1.bf16.msra.mxu0 %v1918
    %2197 = vmatprep.subr.bf16.mxu0 %v1927
    %2198 = vmatpush1.bf16.msra.mxu0 %v1926
    %2199 = vmatprep.subr.bf16.mxu0 %v1935
    %2200 = vmatpush1.bf16.msra.mxu0 %v1934
    %2201 = vmatprep.subr.bf16.mxu0 %v1943
    %2202 = vmatpush1.bf16.msra.mxu0 %v1942
    %2203 = vmatprep.subr.bf16.mxu0 %v1951
    %2204 = vmatpush1.bf16.msra.mxu0 %v1950
    %2205 = vmatprep.subr.bf16.mxu0 %v1959
    %2206 = vmatpush1.bf16.msra.mxu0 %v1958
    %2207 = vmatprep.subr.bf16.mxu0 %v1967
    %2208 = vmatpush1.bf16.msra.mxu0 %v1966
    %2209 = vmatprep.subr.bf16.mxu0 %v1975
    %2210 = vmatpush1.bf16.msra.mxu0 %v1974
    %2211 = vmatprep.subr.bf16.mxu0 %v1983
    %2212 = vmatpush1.bf16.msra.mxu0 %v1982
    %2213 = vmatprep.subr.bf16.mxu0 %v1991
    %2214 = vmatpush1.bf16.msra.mxu0 %v1990
    %2215 = vmatprep.subr.bf16.mxu0 %v1999
    %2216 = vmatpush1.bf16.msra.mxu0 %v1998
    %2217 = vmatprep.subr.bf16.mxu0 %v2007
    %2218 = vmatpush1.bf16.msra.mxu0 %v2006
    %2219 = vmatprep.subr.bf16.mxu0 %v2015
    %2220 = vmatpush1.bf16.msra.mxu0 %v2014
    %2221 = vmatprep.mubr.bf16.mxu0 %v1379
    %2222 = vmatmul.mubr.bf16.gmra.mrb[0].mxu0 %v1378
    %v2223 = vpop.f32.mrb[0].mxu0
    %v2224 = vadd.f32 0.0, %v2223
    %v2225 = vpop.f32.mrb[0].mxu0
    %v2226 = vadd.f32 0.0, %v2225
    %v2227 = vpop.f32.mrb[0].mxu0
    %v2228 = vpop.f32.mrb[0].mxu0
    %2229 = vdwg.mxu0
    %2230 = vmatprep.subr.bf16.mxu0 %v1897
    %2231 = vmatpush1.bf16.msra.mxu0 %v1896
    %2232 = vmatprep.subr.bf16.mxu0 %v1905
    %2233 = vmatpush1.bf16.msra.mxu0 %v1904
    %2234 = vmatprep.subr.bf16.mxu0 %v1913
    %2235 = vmatpush1.bf16.msra.mxu0 %v1912
    %2236 = vmatprep.subr.bf16.mxu0 %v1921
    %2237 = vmatpush1.bf16.msra.mxu0 %v1920
    %2238 = vmatprep.subr.bf16.mxu0 %v1929
    %2239 = vmatpush1.bf16.msra.mxu0 %v1928
    %2240 = vmatprep.subr.bf16.mxu0 %v1937
    %2241 = vmatpush1.bf16.msra.mxu0 %v1936
    %2242 = vmatprep.subr.bf16.mxu0 %v1945
    %2243 = vmatpush1.bf16.msra.mxu0 %v1944
    %2244 = vmatprep.subr.bf16.mxu0 %v1953
    %2245 = vmatpush1.bf16.msra.mxu0 %v1952
    %2246 = vmatprep.subr.bf16.mxu0 %v1961
    %2247 = vmatpush1.bf16.msra.mxu0 %v1960
    %2248 = vmatprep.subr.bf16.mxu0 %v1969
    %2249 = vmatpush1.bf16.msra.mxu0 %v1968
    %2250 = vmatprep.subr.bf16.mxu0 %v1977
    %2251 = vmatpush1.bf16.msra.mxu0 %v1976
    %2252 = vmatprep.subr.bf16.mxu0 %v1985
    %2253 = vmatpush1.bf16.msra.mxu0 %v1984
    %2254 = vmatprep.subr.bf16.mxu0 %v1993
    %2255 = vmatpush1.bf16.msra.mxu0 %v1992
    %2256 = vmatprep.subr.bf16.mxu0 %v2001
    %2257 = vmatpush1.bf16.msra.mxu0 %v2000
    %2258 = vmatprep.subr.bf16.mxu0 %v2009
    %2259 = vmatpush1.bf16.msra.mxu0 %v2008
    %2260 = vmatprep.subr.bf16.mxu0 %v2017
    %2261 = vmatpush1.bf16.msra.mxu0 %v2016
    %2262 = vmatprep.mubr.bf16.mxu0 %v1379
    %2263 = vmatmul.mubr.bf16.gmra.mrb[0].mxu0 %v1378
    %v2264 = vpop.f32.mrb[0].mxu0
    %v2265 = vadd.f32 0.0, %v2264
    %v2266 = vpop.f32.mrb[0].mxu0
    %v2267 = vadd.f32 0.0, %v2266
    %v2268 = vpop.f32.mrb[0].mxu0
    %v2269 = vpop.f32.mrb[0].mxu0
    %2270 = vdwg.mxu0
    %2271 = vmatprep.subr.bf16.mxu0 %v1899
    %2272 = vmatpush1.bf16.msra.mxu0 %v1898
    %2273 = vmatprep.subr.bf16.mxu0 %v1907
    %2274 = vmatpush1.bf16.msra.mxu0 %v1906
    %2275 = vmatprep.subr.bf16.mxu0 %v1915
    %2276 = vmatpush1.bf16.msra.mxu0 %v1914
    %2277 = vmatprep.subr.bf16.mxu0 %v1923
    %2278 = vmatpush1.bf16.msra.mxu0 %v1922
    %2279 = vmatprep.subr.bf16.mxu0 %v1931
    %2280 = vmatpush1.bf16.msra.mxu0 %v1930
    %2281 = vmatprep.subr.bf16.mxu0 %v1939
    %2282 = vmatpush1.bf16.msra.mxu0 %v1938
    %2283 = vmatprep.subr.bf16.mxu0 %v1947
    %2284 = vmatpush1.bf16.msra.mxu0 %v1946
    %2285 = vmatprep.subr.bf16.mxu0 %v1955
    %2286 = vmatpush1.bf16.msra.mxu0 %v1954
    %2287 = vmatprep.subr.bf16.mxu0 %v1963
    %2288 = vmatpush1.bf16.msra.mxu0 %v1962
    %2289 = vmatprep.subr.bf16.mxu0 %v1971
    %2290 = vmatpush1.bf16.msra.mxu0 %v1970
    %2291 = vmatprep.subr.bf16.mxu0 %v1979
    %2292 = vmatpush1.bf16.msra.mxu0 %v1978
    %2293 = vmatprep.subr.bf16.mxu0 %v1987
    %2294 = vmatpush1.bf16.msra.mxu0 %v1986
    %2295 = vmatprep.subr.bf16.mxu0 %v1995
    %2296 = vmatpush1.bf16.msra.mxu0 %v1994
    %2297 = vmatprep.subr.bf16.mxu0 %v2003
    %2298 = vmatpush1.bf16.msra.mxu0 %v2002
    %2299 = vmatprep.subr.bf16.mxu0 %v2011
    %2300 = vmatpush1.bf16.msra.mxu0 %v2010
    %2301 = vmatprep.subr.bf16.mxu0 %v2019
    %2302 = vmatpush1.bf16.msra.mxu0 %v2018
    %2303 = vmatprep.mubr.bf16.mxu0 %v1379
    %2304 = vmatmul.mubr.bf16.gmra.mrb[0].mxu0 %v1378
    %v2305 = vpop.f32.mrb[0].mxu0
    %v2306 = vadd.f32 0.0, %v2305
    %v2307 = vpop.f32.mrb[0].mxu0
    %v2308 = vadd.f32 0.0, %v2307
    %v2309 = vpop.f32.mrb[0].mxu0
    %v2310 = vpop.f32.mrb[0].mxu0
    %2311 = vdwg.mxu0
    %v2312 = vxor.u32 %v2183, 2147483648
    %v2313 = vxor.u32 %v2185, 2147483648
    %v2314 = vxor.u32 %v2224, 2147483648
    %v2315 = vxor.u32 %v2226, 2147483648
    %v2316 = vmul.f32 %v2312, 1.442695
    %v2317 = vpow.pop %v2316
    %v2318 = vmul.f32 %v2313, 1.442695
    %v2319 = vpow.pop %v2318
    %v2320 = vmul.f32 %v2314, 1.442695
    %v2321 = vpow.pop %v2320
    %v2322 = vmul.f32 %v2315, 1.442695
    %v2323 = vpow.pop %v2322
    %v2324 = vadd.f32 %v2317, 1.0
    %v2325 = vadd.f32 %v2319, 1.0
    %v2326 = vadd.f32 %v2321, 1.0
    %v2327 = vadd.f32 %v2323, 1.0
    %v2328 = vrcp.pop %v2324
    %v2329 = vmul.f32 1.0, %v2328
    %v2330 = vrcp.pop %v2325
    %v2331 = vmul.f32 1.0, %v2330
    %v2332 = vrcp.pop %v2326
    %v2333 = vmul.f32 1.0, %v2332
    %v2334 = vrcp.pop %v2327
    %v2335 = vmul.f32 1.0, %v2334
    %v2336 = vmul.f32 %v2183, %v2329
    %v2337 = vmul.f32 %v2185, %v2331
    %v2338 = vmul.f32 %v2224, %v2333
    %v2339 = vmul.f32 %v2226, %v2335
    %v2340 = vmul.f32 %v2336, %v2265
    %v2341 = vmul.f32 %v2337, %v2267
    %v2342 = vmul.f32 %v2338, %v2306
    %v2343 = vmul.f32 %v2339, %v2308
    %v2344 = vpack.c.bf16 %v2340, %v2340
    %v2345 = vpack.c.bf16 %v2341, %v2341
    %v2346 = vpack.c.bf16 %v2342, %v2342
    %v2347 = vpack.c.bf16 %v2343, %v2343
    %v2348 = vld [vmem:[#allocation12] sm:$0xff]
    %v2349 = vld [vmem:[#allocation12 + $0x8] sm:$0xff]
    %v2350 = vld [vmem:[#allocation12 + $0x10] sm:$0xff]
    %v2351 = vld [vmem:[#allocation12 + $0x18] sm:$0xff]
    %v2352 = vld [vmem:[#allocation12 + $0x20] sm:$0xff]
    %v2353 = vld [vmem:[#allocation12 + $0x28] sm:$0xff]
    %v2354 = vld [vmem:[#allocation12 + $0x30] sm:$0xff]
    %v2355 = vld [vmem:[#allocation12 + $0x38] sm:$0xff]
    %v2356 = vld [vmem:[#allocation12 + $0x40] sm:$0xff]
    %v2357 = vld [vmem:[#allocation12 + $0x48] sm:$0xff]
    %v2358 = vld [vmem:[#allocation12 + $0x50] sm:$0xff]
    %v2359 = vld [vmem:[#allocation12 + $0x58] sm:$0xff]
    %v2360 = vld [vmem:[#allocation12 + $0x60] sm:$0xff]
    %v2361 = vld [vmem:[#allocation12 + $0x68] sm:$0xff]
    %v2362 = vld [vmem:[#allocation12 + $0x70] sm:$0xff]
    %v2363 = vld [vmem:[#allocation12 + $0x78] sm:$0xff]
    %v2364 = vld [vmem:[#allocation12 + $0x80] sm:$0xff]
    %v2365 = vld [vmem:[#allocation12 + $0x88] sm:$0xff]
    %v2366 = vld [vmem:[#allocation12 + $0x90] sm:$0xff]
    %v2367 = vld [vmem:[#allocation12 + $0x98] sm:$0xff]
    %v2368 = vld [vmem:[#allocation12 + $0xa0] sm:$0xff]
    %v2369 = vld [vmem:[#allocation12 + $0xa8] sm:$0xff]
    %v2370 = vld [vmem:[#allocation12 + $0xb0] sm:$0xff]
    %v2371 = vld [vmem:[#allocation12 + $0xb8] sm:$0xff]
    %v2372 = vld [vmem:[#allocation12 + $0xc0] sm:$0xff]
    %v2373 = vld [vmem:[#allocation12 + $0xc8] sm:$0xff]
    %v2374 = vld [vmem:[#allocation12 + $0xd0] sm:$0xff]
    %v2375 = vld [vmem:[#allocation12 + $0xd8] sm:$0xff]
    %v2376 = vld [vmem:[#allocation12 + $0xe0] sm:$0xff]
    %v2377 = vld [vmem:[#allocation12 + $0xe8] sm:$0xff]
    %v2378 = vld [vmem:[#allocation12 + $0xf0] sm:$0xff]
    %v2379 = vld [vmem:[#allocation12 + $0xf8] sm:$0xff]
    %v2380 = vld [vmem:[#allocation12 + $0x100] sm:$0xff]
    %v2381 = vld [vmem:[#allocation12 + $0x108] sm:$0xff]
    %v2382 = vld [vmem:[#allocation12 + $0x110] sm:$0xff]
    %v2383 = vld [vmem:[#allocation12 + $0x118] sm:$0xff]
    %v2384 = vld [vmem:[#allocation12 + $0x120] sm:$0xff]
    %v2385 = vld [vmem:[#allocation12 + $0x128] sm:$0xff]
    %v2386 = vld [vmem:[#allocation12 + $0x130] sm:$0xff]
    %v2387 = vld [vmem:[#allocation12 + $0x138] sm:$0xff]
    %v2388 = vld [vmem:[#allocation12 + $0x140] sm:$0xff]
    %v2389 = vld [vmem:[#allocation12 + $0x148] sm:$0xff]
    %v2390 = vld [vmem:[#allocation12 + $0x150] sm:$0xff]
    %v2391 = vld [vmem:[#allocation12 + $0x158] sm:$0xff]
    %v2392 = vld [vmem:[#allocation12 + $0x160] sm:$0xff]
    %v2393 = vld [vmem:[#allocation12 + $0x168] sm:$0xff]
    %v2394 = vld [vmem:[#allocation12 + $0x170] sm:$0xff]
    %v2395 = vld [vmem:[#allocation12 + $0x178] sm:$0xff]
    %v2396 = vld [vmem:[#allocation12 + $0x180] sm:$0xff]
    %v2397 = vld [vmem:[#allocation12 + $0x188] sm:$0xff]
    %v2398 = vld [vmem:[#allocation12 + $0x190] sm:$0xff]
    %v2399 = vld [vmem:[#allocation12 + $0x198] sm:$0xff]
    %v2400 = vld [vmem:[#allocation12 + $0x1a0] sm:$0xff]
    %v2401 = vld [vmem:[#allocation12 + $0x1a8] sm:$0xff]
    %v2402 = vld [vmem:[#allocation12 + $0x1b0] sm:$0xff]
    %v2403 = vld [vmem:[#allocation12 + $0x1b8] sm:$0xff]
    %v2404 = vld [vmem:[#allocation12 + $0x1c0] sm:$0xff]
    %v2405 = vld [vmem:[#allocation12 + $0x1c8] sm:$0xff]
    %v2406 = vld [vmem:[#allocation12 + $0x1d0] sm:$0xff]
    %v2407 = vld [vmem:[#allocation12 + $0x1d8] sm:$0xff]
    %v2408 = vld [vmem:[#allocation12 + $0x1e0] sm:$0xff]
    %v2409 = vld [vmem:[#allocation12 + $0x1e8] sm:$0xff]
    %v2410 = vld [vmem:[#allocation12 + $0x1f0] sm:$0xff]
    %v2411 = vld [vmem:[#allocation12 + $0x1f8] sm:$0xff]
    %v2476 = vunpack.c.l.b16 %v2348
    %v2477 = vunpack.c.h.b16 %v2348
    %v2478 = vunpack.c.l.b16 %v2349
    %v2479 = vunpack.c.h.b16 %v2349
    %v2480 = vunpack.c.l.b16 %v2350
    %v2481 = vunpack.c.h.b16 %v2350
    %v2482 = vunpack.c.l.b16 %v2351
    %v2483 = vunpack.c.h.b16 %v2351
    %v2484 = vunpack.c.l.b16 %v2352
    %v2485 = vunpack.c.h.b16 %v2352
    %v2486 = vunpack.c.l.b16 %v2353
    %v2487 = vunpack.c.h.b16 %v2353
    %v2488 = vunpack.c.l.b16 %v2354
    %v2489 = vunpack.c.h.b16 %v2354
    %v2490 = vunpack.c.l.b16 %v2355
    %v2491 = vunpack.c.h.b16 %v2355
    %v2492 = vunpack.c.l.b16 %v2356
    %v2493 = vunpack.c.h.b16 %v2356
    %v2494 = vunpack.c.l.b16 %v2357
    %v2495 = vunpack.c.h.b16 %v2357
    %v2496 = vunpack.c.l.b16 %v2358
    %v2497 = vunpack.c.h.b16 %v2358
    %v2498 = vunpack.c.l.b16 %v2359
    %v2499 = vunpack.c.h.b16 %v2359
    %v2500 = vunpack.c.l.b16 %v2360
    %v2501 = vunpack.c.h.b16 %v2360
    %v2502 = vunpack.c.l.b16 %v2361
    %v2503 = vunpack.c.h.b16 %v2361
    %v2504 = vunpack.c.l.b16 %v2362
    %v2505 = vunpack.c.h.b16 %v2362
    %v2506 = vunpack.c.l.b16 %v2363
    %v2507 = vunpack.c.h.b16 %v2363
    %v2508 = vunpack.c.l.b16 %v2364
    %v2509 = vunpack.c.h.b16 %v2364
    %v2510 = vunpack.c.l.b16 %v2365
    %v2511 = vunpack.c.h.b16 %v2365
    %v2512 = vunpack.c.l.b16 %v2366
    %v2513 = vunpack.c.h.b16 %v2366
    %v2514 = vunpack.c.l.b16 %v2367
    %v2515 = vunpack.c.h.b16 %v2367
    %v2516 = vunpack.c.l.b16 %v2368
    %v2517 = vunpack.c.h.b16 %v2368
    %v2518 = vunpack.c.l.b16 %v2369
    %v2519 = vunpack.c.h.b16 %v2369
    %v2520 = vunpack.c.l.b16 %v2370
    %v2521 = vunpack.c.h.b16 %v2370
    %v2522 = vunpack.c.l.b16 %v2371
    %v2523 = vunpack.c.h.b16 %v2371
    %v2524 = vunpack.c.l.b16 %v2372
    %v2525 = vunpack.c.h.b16 %v2372
    %v2526 = vunpack.c.l.b16 %v2373
    %v2527 = vunpack.c.h.b16 %v2373
    %v2528 = vunpack.c.l.b16 %v2374
    %v2529 = vunpack.c.h.b16 %v2374
    %v2530 = vunpack.c.l.b16 %v2375
    %v2531 = vunpack.c.h.b16 %v2375
    %v2532 = vunpack.c.l.b16 %v2376
    %v2533 = vunpack.c.h.b16 %v2376
    %v2534 = vunpack.c.l.b16 %v2377
    %v2535 = vunpack.c.h.b16 %v2377
    %v2536 = vunpack.c.l.b16 %v2378
    %v2537 = vunpack.c.h.b16 %v2378
    %v2538 = vunpack.c.l.b16 %v2379
    %v2539 = vunpack.c.h.b16 %v2379
    %v2540 = vunpack.c.l.b16 %v2380
    %v2541 = vunpack.c.h.b16 %v2380
    %v2542 = vunpack.c.l.b16 %v2381
    %v2543 = vunpack.c.h.b16 %v2381
    %v2544 = vunpack.c.l.b16 %v2382
    %v2545 = vunpack.c.h.b16 %v2382
    %v2546 = vunpack.c.l.b16 %v2383
    %v2547 = vunpack.c.h.b16 %v2383
    %v2548 = vunpack.c.l.b16 %v2384
    %v2549 = vunpack.c.h.b16 %v2384
    %v2550 = vunpack.c.l.b16 %v2385
    %v2551 = vunpack.c.h.b16 %v2385
    %v2552 = vunpack.c.l.b16 %v2386
    %v2553 = vunpack.c.h.b16 %v2386
    %v2554 = vunpack.c.l.b16 %v2387
    %v2555 = vunpack.c.h.b16 %v2387
    %v2556 = vunpack.c.l.b16 %v2388
    %v2557 = vunpack.c.h.b16 %v2388
    %v2558 = vunpack.c.l.b16 %v2389
    %v2559 = vunpack.c.h.b16 %v2389
    %v2560 = vunpack.c.l.b16 %v2390
    %v2561 = vunpack.c.h.b16 %v2390
    %v2562 = vunpack.c.l.b16 %v2391
    %v2563 = vunpack.c.h.b16 %v2391
    %v2564 = vunpack.c.l.b16 %v2392
    %v2565 = vunpack.c.h.b16 %v2392
    %v2566 = vunpack.c.l.b16 %v2393
    %v2567 = vunpack.c.h.b16 %v2393
    %v2568 = vunpack.c.l.b16 %v2394
    %v2569 = vunpack.c.h.b16 %v2394
    %v2570 = vunpack.c.l.b16 %v2395
    %v2571 = vunpack.c.h.b16 %v2395
    %v2572 = vunpack.c.l.b16 %v2396
    %v2573 = vunpack.c.h.b16 %v2396
    %v2574 = vunpack.c.l.b16 %v2397
    %v2575 = vunpack.c.h.b16 %v2397
    %v2576 = vunpack.c.l.b16 %v2398
    %v2577 = vunpack.c.h.b16 %v2398
    %v2578 = vunpack.c.l.b16 %v2399
    %v2579 = vunpack.c.h.b16 %v2399
    %v2580 = vunpack.c.l.b16 %v2400
    %v2581 = vunpack.c.h.b16 %v2400
    %v2582 = vunpack.c.l.b16 %v2401
    %v2583 = vunpack.c.h.b16 %v2401
    %v2584 = vunpack.c.l.b16 %v2402
    %v2585 = vunpack.c.h.b16 %v2402
    %v2586 = vunpack.c.l.b16 %v2403
    %v2587 = vunpack.c.h.b16 %v2403
    %v2588 = vunpack.c.l.b16 %v2404
    %v2589 = vunpack.c.h.b16 %v2404
    %v2590 = vunpack.c.l.b16 %v2405
    %v2591 = vunpack.c.h.b16 %v2405
    %v2592 = vunpack.c.l.b16 %v2406
    %v2593 = vunpack.c.h.b16 %v2406
    %v2594 = vunpack.c.l.b16 %v2407
    %v2595 = vunpack.c.h.b16 %v2407
    %v2596 = vunpack.c.l.b16 %v2408
    %v2597 = vunpack.c.h.b16 %v2408
    %v2598 = vunpack.c.l.b16 %v2409
    %v2599 = vunpack.c.h.b16 %v2409
    %v2600 = vunpack.c.l.b16 %v2410
    %v2601 = vunpack.c.h.b16 %v2410
    %v2602 = vunpack.c.l.b16 %v2411
    %v2603 = vunpack.c.h.b16 %v2411
    %v2604 = vpack.c.b16 %v2478, %v2476
    %v2605 = vpack.c.b16 %v2479, %v2477
    %v2606 = vpack.c.b16 %v2482, %v2480
    %v2607 = vpack.c.b16 %v2483, %v2481
    %v2608 = vpack.c.b16 %v2486, %v2484
    %v2609 = vpack.c.b16 %v2487, %v2485
    %v2610 = vpack.c.b16 %v2490, %v2488
    %v2611 = vpack.c.b16 %v2491, %v2489
    %v2612 = vpack.c.b16 %v2494, %v2492
    %v2613 = vpack.c.b16 %v2495, %v2493
    %v2614 = vpack.c.b16 %v2498, %v2496
    %v2615 = vpack.c.b16 %v2499, %v2497
    %v2616 = vpack.c.b16 %v2502, %v2500
    %v2617 = vpack.c.b16 %v2503, %v2501
    %v2618 = vpack.c.b16 %v2506, %v2504
    %v2619 = vpack.c.b16 %v2507, %v2505
    %v2620 = vpack.c.b16 %v2510, %v2508
    %v2621 = vpack.c.b16 %v2511, %v2509
    %v2622 = vpack.c.b16 %v2514, %v2512
    %v2623 = vpack.c.b16 %v2515, %v2513
    %v2624 = vpack.c.b16 %v2518, %v2516
    %v2625 = vpack.c.b16 %v2519, %v2517
    %v2626 = vpack.c.b16 %v2522, %v2520
    %v2627 = vpack.c.b16 %v2523, %v2521
    %v2628 = vpack.c.b16 %v2526, %v2524
    %v2629 = vpack.c.b16 %v2527, %v2525
    %v2630 = vpack.c.b16 %v2530, %v2528
    %v2631 = vpack.c.b16 %v2531, %v2529
    %v2632 = vpack.c.b16 %v2534, %v2532
    %v2633 = vpack.c.b16 %v2535, %v2533
    %v2634 = vpack.c.b16 %v2538, %v2536
    %v2635 = vpack.c.b16 %v2539, %v2537
    %v2636 = vpack.c.b16 %v2542, %v2540
    %v2637 = vpack.c.b16 %v2543, %v2541
    %v2638 = vpack.c.b16 %v2546, %v2544
    %v2639 = vpack.c.b16 %v2547, %v2545
    %v2640 = vpack.c.b16 %v2550, %v2548
    %v2641 = vpack.c.b16 %v2551, %v2549
    %v2642 = vpack.c.b16 %v2554, %v2552
    %v2643 = vpack.c.b16 %v2555, %v2553
    %v2644 = vpack.c.b16 %v2558, %v2556
    %v2645 = vpack.c.b16 %v2559, %v2557
    %v2646 = vpack.c.b16 %v2562, %v2560
    %v2647 = vpack.c.b16 %v2563, %v2561
    %v2648 = vpack.c.b16 %v2566, %v2564
    %v2649 = vpack.c.b16 %v2567, %v2565
    %v2650 = vpack.c.b16 %v2570, %v2568
    %v2651 = vpack.c.b16 %v2571, %v2569
    %v2652 = vpack.c.b16 %v2574, %v2572
    %v2653 = vpack.c.b16 %v2575, %v2573
    %v2654 = vpack.c.b16 %v2578, %v2576
    %v2655 = vpack.c.b16 %v2579, %v2577
    %v2656 = vpack.c.b16 %v2582, %v2580
    %v2657 = vpack.c.b16 %v2583, %v2581
    %v2658 = vpack.c.b16 %v2586, %v2584
    %v2659 = vpack.c.b16 %v2587, %v2585
    %v2660 = vpack.c.b16 %v2590, %v2588
    %v2661 = vpack.c.b16 %v2591, %v2589
    %v2662 = vpack.c.b16 %v2594, %v2592
    %v2663 = vpack.c.b16 %v2595, %v2593
    %v2664 = vpack.c.b16 %v2598, %v2596
    %v2665 = vpack.c.b16 %v2599, %v2597
    %v2666 = vpack.c.b16 %v2602, %v2600
    %v2667 = vpack.c.b16 %v2603, %v2601
    %2732 = vmatprep.subr.bf16.mxu0 %v2605
    %2733 = vmatpush1.bf16.msra.mxu0 %v2604
    %2734 = vmatprep.subr.bf16.mxu0 %v2607
    %2735 = vmatpush1.bf16.msra.mxu0 %v2606
    %2736 = vmatprep.subr.bf16.mxu0 %v2609
    %2737 = vmatpush1.bf16.msra.mxu0 %v2608
    %2738 = vmatprep.subr.bf16.mxu0 %v2611
    %2739 = vmatpush1.bf16.msra.mxu0 %v2610
    %2740 = vmatprep.subr.bf16.mxu0 %v2613
    %2741 = vmatpush1.bf16.msra.mxu0 %v2612
    %2742 = vmatprep.subr.bf16.mxu0 %v2615
    %2743 = vmatpush1.bf16.msra.mxu0 %v2614
    %2744 = vmatprep.subr.bf16.mxu0 %v2617
    %2745 = vmatpush1.bf16.msra.mxu0 %v2616
    %2746 = vmatprep.subr.bf16.mxu0 %v2619
    %2747 = vmatpush1.bf16.msra.mxu0 %v2618
    %2748 = vmatprep.subr.bf16.mxu0 %v2621
    %2749 = vmatpush1.bf16.msra.mxu0 %v2620
    %2750 = vmatprep.subr.bf16.mxu0 %v2623
    %2751 = vmatpush1.bf16.msra.mxu0 %v2622
    %2752 = vmatprep.subr.bf16.mxu0 %v2625
    %2753 = vmatpush1.bf16.msra.mxu0 %v2624
    %2754 = vmatprep.subr.bf16.mxu0 %v2627
    %2755 = vmatpush1.bf16.msra.mxu0 %v2626
    %2756 = vmatprep.subr.bf16.mxu0 %v2629
    %2757 = vmatpush1.bf16.msra.mxu0 %v2628
    %2758 = vmatprep.subr.bf16.mxu0 %v2631
    %2759 = vmatpush1.bf16.msra.mxu0 %v2630
    %2760 = vmatprep.subr.bf16.mxu0 %v2633
    %2761 = vmatpush1.bf16.msra.mxu0 %v2632
    %2762 = vmatprep.subr.bf16.mxu0 %v2635
    %2763 = vmatpush1.bf16.msra.mxu0 %v2634
    %2764 = vmatprep.mubr.bf16.mxu0 %v2345
    %2765 = vmatmul.mubr.bf16.gmra.mrb[0].mxu0 %v2344
    %v2766 = vpop.f32.mrb[0].mxu0
    %v2767 = vadd.f32 0.0, %v2766
    %v2768 = vpop.f32.mrb[0].mxu0
    %v2769 = vadd.f32 0.0, %v2768
    %v2770 = vpop.f32.mrb[0].mxu0
    %v2771 = vpop.f32.mrb[0].mxu0
    %2772 = vdwg.mxu0
    %2773 = vmatprep.subr.bf16.mxu0 %v2637
    %2774 = vmatpush1.bf16.msra.mxu0 %v2636
    %2775 = vmatprep.subr.bf16.mxu0 %v2639
    %2776 = vmatpush1.bf16.msra.mxu0 %v2638
    %2777 = vmatprep.subr.bf16.mxu0 %v2641
    %2778 = vmatpush1.bf16.msra.mxu0 %v2640
    %2779 = vmatprep.subr.bf16.mxu0 %v2643
    %2780 = vmatpush1.bf16.msra.mxu0 %v2642
    %2781 = vmatprep.subr.bf16.mxu0 %v2645
    %2782 = vmatpush1.bf16.msra.mxu0 %v2644
    %2783 = vmatprep.subr.bf16.mxu0 %v2647
    %2784 = vmatpush1.bf16.msra.mxu0 %v2646
    %2785 = vmatprep.subr.bf16.mxu0 %v2649
    %2786 = vmatpush1.bf16.msra.mxu0 %v2648
    %2787 = vmatprep.subr.bf16.mxu0 %v2651
    %2788 = vmatpush1.bf16.msra.mxu0 %v2650
    %2789 = vmatprep.subr.bf16.mxu0 %v2653
    %2790 = vmatpush1.bf16.msra.mxu0 %v2652
    %2791 = vmatprep.subr.bf16.mxu0 %v2655
    %2792 = vmatpush1.bf16.msra.mxu0 %v2654
    %2793 = vmatprep.subr.bf16.mxu0 %v2657
    %2794 = vmatpush1.bf16.msra.mxu0 %v2656
    %2795 = vmatprep.subr.bf16.mxu0 %v2659
    %2796 = vmatpush1.bf16.msra.mxu0 %v2658
    %2797 = vmatprep.subr.bf16.mxu0 %v2661
    %2798 = vmatpush1.bf16.msra.mxu0 %v2660
    %2799 = vmatprep.subr.bf16.mxu0 %v2663
    %2800 = vmatpush1.bf16.msra.mxu0 %v2662
    %2801 = vmatprep.subr.bf16.mxu0 %v2665
    %2802 = vmatpush1.bf16.msra.mxu0 %v2664
    %2803 = vmatprep.subr.bf16.mxu0 %v2667
    %2804 = vmatpush1.bf16.msra.mxu0 %v2666
    %2805 = vmatprep.mubr.bf16.mxu0 %v2347
    %2806 = vmatmul.mubr.bf16.gmra.mrb[0].mxu0 %v2346
    %v2807 = vpop.f32.mrb[0].mxu0
    %v2808 = vadd.f32 %v2767, %v2807
    %v2809 = vpop.f32.mrb[0].mxu0
    %v2810 = vadd.f32 %v2769, %v2809
    %v2811 = vpop.f32.mrb[0].mxu0
    %v2812 = vpop.f32.mrb[0].mxu0
    %2813 = vdwg.mxu0
    %2814 = vst [vmem:[#allocation15] sm:$0xff] %v2808
    %2815 = vst [vmem:[#allocation15 + $0x8] sm:$0xff] %v2810
    %2816 = vst [vmem:[#allocation16] sm:$0xff] %v1348
    %2817 = vst [vmem:[#allocation16 + $0x8] sm:$0xff] %v1350
    %s2818 = sld [smem:[#allocation14]]
    %s2819 = sshrl.u32 %s2818, 3
    %s2820 = sand.u32 %s2818, 7
    %s2821 = smul.u32 %s2819, 16
    %s2822 = sadd.s32 %s2820, %s2821
    %s2823 = smul.addr %s2822, 16
    %s2824 = scalar_lea.hbm %s14, %s2823
    %s2826 = sshll.u32 [#allocation2], 4
    %s2827 = int_to_ptr.vmem [resolvable:$true] %s2826
    %2829 = dma.vmem_to_hbm [thread:$0]  %s2827, 32, %s2824, [#allocation4], 128, 128, 1
    %s2830 = smul.addr %s2822, 16
    %s2831 = scalar_lea.hbm %s15, %s2830
    %s2832 = scalar_lea.sflag [#allocation4], 8
    %s2834 = sshll.u32 [#allocation3], 4
    %s2835 = int_to_ptr.vmem [resolvable:$true] %s2834
    %2837 = dma.vmem_to_hbm [thread:$0]  %s2835, 32, %s2831, %s2832, 128, 128, 1
    %s2838 = sld [smem:[#allocation14 + $0x1]]
    %s2839 = scalar_lea.vmem [#allocation2], 1
    %s2840 = sshrl.u32 %s2838, 3
    %s2841 = sand.u32 %s2838, 7
    %s2842 = smul.u32 %s2840, 16
    %s2843 = sadd.s32 %s2841, %s2842
    %s2844 = smul.addr %s2843, 16
    %s2845 = scalar_lea.hbm %s14, %s2844
    %s2846 = scalar_lea.sflag [#allocation4], 1
    %s2848 = sshll.u32 %s2839, 4
    %s2849 = int_to_ptr.vmem [resolvable:$true] %s2848
    %2851 = dma.vmem_to_hbm [thread:$0]  %s2849, 32, %s2845, %s2846, 128, 128, 1
    %s2852 = scalar_lea.vmem [#allocation3], 1
    %s2853 = smul.addr %s2843, 16
    %s2854 = scalar_lea.hbm %s15, %s2853
    %s2855 = scalar_lea.sflag [#allocation4], 9
    %s2857 = sshll.u32 %s2852, 4
    %s2858 = int_to_ptr.vmem [resolvable:$true] %s2857
    %2860 = dma.vmem_to_hbm [thread:$0]  %s2858, 32, %s2854, %s2855, 128, 128, 1
    %s2861 = sld [smem:[#allocation14 + $0x2]]
    %s2862 = scalar_lea.vmem [#allocation2], 2
    %s2863 = sshrl.u32 %s2861, 3
    %s2864 = sand.u32 %s2861, 7
    %s2865 = smul.u32 %s2863, 16
    %s2866 = sadd.s32 %s2864, %s2865
    %s2867 = smul.addr %s2866, 16
    %s2868 = scalar_lea.hbm %s14, %s2867
    %s2869 = scalar_lea.sflag [#allocation4], 2
    %s2871 = sshll.u32 %s2862, 4
    %s2872 = int_to_ptr.vmem [resolvable:$true] %s2871
    %2874 = dma.vmem_to_hbm [thread:$0]  %s2872, 32, %s2868, %s2869, 128, 128, 1
    %s2875 = scalar_lea.vmem [#allocation3], 2
    %s2876 = smul.addr %s2866, 16
    %s2877 = scalar_lea.hbm %s15, %s2876
    %s2878 = scalar_lea.sflag [#allocation4], 10
    %s2880 = sshll.u32 %s2875, 4
    %s2881 = int_to_ptr.vmem [resolvable:$true] %s2880
    %2883 = dma.vmem_to_hbm [thread:$0]  %s2881, 32, %s2877, %s2878, 128, 128, 1
    %s2884 = sld [smem:[#allocation14 + $0x3]]
    %s2885 = scalar_lea.vmem [#allocation2], 3
    %s2886 = sshrl.u32 %s2884, 3
    %s2887 = sand.u32 %s2884, 7
    %s2888 = smul.u32 %s2886, 16
    %s2889 = sadd.s32 %s2887, %s2888
    %s2890 = smul.addr %s2889, 16
    %s2891 = scalar_lea.hbm %s14, %s2890
    %s2892 = scalar_lea.sflag [#allocation4], 3
    %s2894 = sshll.u32 %s2885, 4
    %s2895 = int_to_ptr.vmem [resolvable:$true] %s2894
    %2897 = dma.vmem_to_hbm [thread:$0]  %s2895, 32, %s2891, %s2892, 128, 128, 1
    %s2898 = scalar_lea.vmem [#allocation3], 3
    %s2899 = smul.addr %s2889, 16
    %s2900 = scalar_lea.hbm %s15, %s2899
    %s2901 = scalar_lea.sflag [#allocation4], 11
    %s2903 = sshll.u32 %s2898, 4
    %s2904 = int_to_ptr.vmem [resolvable:$true] %s2903
    %2906 = dma.vmem_to_hbm [thread:$0]  %s2904, 32, %s2900, %s2901, 128, 128, 1
    %s2907 = sld [smem:[#allocation14 + $0x4]]
    %s2908 = scalar_lea.vmem [#allocation2], 4
    %s2909 = sshrl.u32 %s2907, 3
    %s2910 = sand.u32 %s2907, 7
    %s2911 = smul.u32 %s2909, 16
    %s2912 = sadd.s32 %s2910, %s2911
    %s2913 = smul.addr %s2912, 16
    %s2914 = scalar_lea.hbm %s14, %s2913
    %s2915 = scalar_lea.sflag [#allocation4], 4
    %s2917 = sshll.u32 %s2908, 4
    %s2918 = int_to_ptr.vmem [resolvable:$true] %s2917
    %2920 = dma.vmem_to_hbm [thread:$0]  %s2918, 32, %s2914, %s2915, 128, 128, 1
    %s2921 = scalar_lea.vmem [#allocation3], 4
    %s2922 = smul.addr %s2912, 16
    %s2923 = scalar_lea.hbm %s15, %s2922
    %s2924 = scalar_lea.sflag [#allocation4], 12
    %s2926 = sshll.u32 %s2921, 4
    %s2927 = int_to_ptr.vmem [resolvable:$true] %s2926
    %2929 = dma.vmem_to_hbm [thread:$0]  %s2927, 32, %s2923, %s2924, 128, 128, 1
    %s2930 = sld [smem:[#allocation14 + $0x5]]
    %s2931 = scalar_lea.vmem [#allocation2], 5
    %s2932 = sshrl.u32 %s2930, 3
    %s2933 = sand.u32 %s2930, 7
    %s2934 = smul.u32 %s2932, 16
    %s2935 = sadd.s32 %s2933, %s2934
    %s2936 = smul.addr %s2935, 16
    %s2937 = scalar_lea.hbm %s14, %s2936
    %s2938 = scalar_lea.sflag [#allocation4], 5
    %s2940 = sshll.u32 %s2931, 4
    %s2941 = int_to_ptr.vmem [resolvable:$true] %s2940
    %2943 = dma.vmem_to_hbm [thread:$0]  %s2941, 32, %s2937, %s2938, 128, 128, 1
    %s2944 = scalar_lea.vmem [#allocation3], 5
    %s2945 = smul.addr %s2935, 16
    %s2946 = scalar_lea.hbm %s15, %s2945
    %s2947 = scalar_lea.sflag [#allocation4], 13
    %s2949 = sshll.u32 %s2944, 4
    %s2950 = int_to_ptr.vmem [resolvable:$true] %s2949
    %2952 = dma.vmem_to_hbm [thread:$0]  %s2950, 32, %s2946, %s2947, 128, 128, 1
    %s2953 = sld [smem:[#allocation14 + $0x6]]
    %s2954 = scalar_lea.vmem [#allocation2], 6
    %s2955 = sshrl.u32 %s2953, 3
    %s2956 = sand.u32 %s2953, 7
    %s2957 = smul.u32 %s2955, 16
    %s2958 = sadd.s32 %s2956, %s2957
    %s2959 = smul.addr %s2958, 16
    %s2960 = scalar_lea.hbm %s14, %s2959
    %s2961 = scalar_lea.sflag [#allocation4], 6
    %s2963 = sshll.u32 %s2954, 4
    %s2964 = int_to_ptr.vmem [resolvable:$true] %s2963
    %2966 = dma.vmem_to_hbm [thread:$0]  %s2964, 32, %s2960, %s2961, 128, 128, 1
    %s2967 = scalar_lea.vmem [#allocation3], 6
    %s2968 = smul.addr %s2958, 16
    %s2969 = scalar_lea.hbm %s15, %s2968
    %s2970 = scalar_lea.sflag [#allocation4], 14
    %s2972 = sshll.u32 %s2967, 4
    %s2973 = int_to_ptr.vmem [resolvable:$true] %s2972
    %2975 = dma.vmem_to_hbm [thread:$0]  %s2973, 32, %s2969, %s2970, 128, 128, 1
    %s2976 = sld [smem:[#allocation14 + $0x7]]
    %s2977 = scalar_lea.vmem [#allocation2], 7
    %s2978 = sshrl.u32 %s2976, 3
    %s2979 = sand.u32 %s2976, 7
    %s2980 = smul.u32 %s2978, 16
    %s2981 = sadd.s32 %s2979, %s2980
    %s2982 = smul.addr %s2981, 16
    %s2983 = scalar_lea.hbm %s14, %s2982
    %s2984 = scalar_lea.sflag [#allocation4], 7
    %s2986 = sshll.u32 %s2977, 4
    %s2987 = int_to_ptr.vmem [resolvable:$true] %s2986
    %2989 = dma.vmem_to_hbm [thread:$0]  %s2987, 32, %s2983, %s2984, 128, 128, 1
    %s2990 = scalar_lea.vmem [#allocation3], 7
    %s2991 = smul.addr %s2981, 16
    %s2992 = scalar_lea.hbm %s15, %s2991
    %s2993 = scalar_lea.sflag [#allocation4], 15
    %s2995 = sshll.u32 %s2990, 4
    %s2996 = int_to_ptr.vmem [resolvable:$true] %s2995
    %2998 = dma.vmem_to_hbm [thread:$0]  %s2996, 32, %s2992, %s2993, 128, 128, 1
    %3000 = dma.done [#allocation4], 32
    %3002 = dma.done %s2832, 32
    %3004 = dma.done %s2846, 32
    %3006 = dma.done %s2855, 32
    %3008 = dma.done %s2869, 32
    %3010 = dma.done %s2878, 32
    %3012 = dma.done %s2892, 32
    %3014 = dma.done %s2901, 32
    %3016 = dma.done %s2915, 32
    %3018 = dma.done %s2924, 32
    %3020 = dma.done %s2938, 32
    %3022 = dma.done %s2947, 32
    %3024 = dma.done %s2961, 32
    %3026 = dma.done %s2970, 32
    %3028 = dma.done %s2984, 32
    %3030 = dma.done %s2993, 32
    // Predicated region
    $region62: #{flash_llama_layer.1} parent=1 // pred_check
      _
    $region63: #{flash_llama_layer.1} parent=1 // pred_check_branch
      %3032 = sbr.rel (0) target = $region65
    $region64: #{flash_llama_layer.1} parent=1 // pred_region
      %s3034 = ssub.s32 256, 256
      %3035 = vsyncadd [#allocation7], %s3034
      %s3037 = sshll.u32 [#allocation15], 4
      %s3038 = int_to_ptr.vmem [resolvable:$true] %s3037
      %3040 = dma.vmem_to_hbm [thread:$0]  %s3038, 256, %s12, [#allocation7]
    $region65: #{flash_llama_layer.1} parent=1 // pred_fallthru
      _
    // Predicated region
    $region66: #{flash_llama_layer.1} parent=1 // pred_check
      _
    $region67: #{flash_llama_layer.1} parent=1 // pred_check_branch
      %3042 = sbr.rel (0) target = $region69
    $region68: #{flash_llama_layer.1} parent=1 // pred_region
      %s3044 = ssub.s32 256, 256
      %3045 = vsyncadd [#allocation17], %s3044
      %s3047 = sshll.u32 [#allocation16], 4
      %s3048 = int_to_ptr.vmem [resolvable:$true] %s3047
      %3050 = dma.vmem_to_hbm [thread:$0]  %s3048, 256, %s13, [#allocation17]
    $region69: #{flash_llama_layer.1} parent=1 // pred_fallthru
      _
    // Predicated region
    $region70: #{flash_llama_layer.1} parent=1 // pred_check
      _
    $region71: #{flash_llama_layer.1} parent=1 // pred_check_branch
      %3052 = sbr.rel (0) target = $region73
    $region72: #{flash_llama_layer.1} parent=1 // pred_region
      %3053 = dma.done [#allocation7], 256
    $region73: #{flash_llama_layer.1} parent=1 // pred_fallthru
      _
    // Predicated region
    $region74: #{flash_llama_layer.1} parent=1 // pred_check
      _
    $region75: #{flash_llama_layer.1} parent=1 // pred_check_branch
      %3055 = sbr.rel (0) target = $region77
    $region76: #{flash_llama_layer.1} parent=1 // pred_region
      %3056 = dma.done [#allocation17], 256
    $region77: #{flash_llama_layer.1} parent=1 // pred_fallthru
      _
    %3057 = vsyncpa [#allocation6], 1
    %3058 = vsyncpa [#allocation10], 1
    %3059 = vsyncpa [#allocation13], 1
    %3060 = vsyncpa [#allocation7], 1
    %3061 = vsyncpa [#allocation17], 1
    %3062 = vsyncpa [#allocation8], 1
  %3063 = vsyncmov [#allocation4]
  %s3064 = vpop.sfrf %3063
  %p3065 = scmp.eq.s32.totalorder %s3064, 0
  %p3066 = pneg %p3065
  %3068 = shalt.err (%p3066)
  %s3069 = scalar_lea.sflag [#allocation4], 1
  %3070 = vsyncmov %s3069
  %s3071 = vpop.sfrf %3070
  %p3072 = scmp.eq.s32.totalorder %s3071, 0
  %p3073 = pneg %p3072
  %3075 = shalt.err (%p3073)
  %s3076 = scalar_lea.sflag [#allocation4], 2
  %3077 = vsyncmov %s3076
  %s3078 = vpop.sfrf %3077
  %p3079 = scmp.eq.s32.totalorder %s3078, 0
  %p3080 = pneg %p3079
  %3082 = shalt.err (%p3080)
  %s3083 = scalar_lea.sflag [#allocation4], 3
  %3084 = vsyncmov %s3083
  %s3085 = vpop.sfrf %3084
  %p3086 = scmp.eq.s32.totalorder %s3085, 0
  %p3087 = pneg %p3086
  %3089 = shalt.err (%p3087)
  %s3090 = scalar_lea.sflag [#allocation4], 4
  %3091 = vsyncmov %s3090
  %s3092 = vpop.sfrf %3091
  %p3093 = scmp.eq.s32.totalorder %s3092, 0
  %p3094 = pneg %p3093
  %3096 = shalt.err (%p3094)
  %s3097 = scalar_lea.sflag [#allocation4], 5
  %3098 = vsyncmov %s3097
  %s3099 = vpop.sfrf %3098
  %p3100 = scmp.eq.s32.totalorder %s3099, 0
  %p3101 = pneg %p3100
  %3103 = shalt.err (%p3101)
  %s3104 = scalar_lea.sflag [#allocation4], 6
  %3105 = vsyncmov %s3104
  %s3106 = vpop.sfrf %3105
  %p3107 = scmp.eq.s32.totalorder %s3106, 0
  %p3108 = pneg %p3107
  %3110 = shalt.err (%p3108)
  %s3111 = scalar_lea.sflag [#allocation4], 7
  %3112 = vsyncmov %s3111
  %s3113 = vpop.sfrf %3112
  %p3114 = scmp.eq.s32.totalorder %s3113, 0
  %p3115 = pneg %p3114
  %3117 = shalt.err (%p3115)
  %s3118 = scalar_lea.sflag [#allocation4], 8
  %3119 = vsyncmov %s3118
  %s3120 = vpop.sfrf %3119
  %p3121 = scmp.eq.s32.totalorder %s3120, 0
  %p3122 = pneg %p3121
  %3124 = shalt.err (%p3122)
  %s3125 = scalar_lea.sflag [#allocation4], 9
  %3126 = vsyncmov %s3125
  %s3127 = vpop.sfrf %3126
  %p3128 = scmp.eq.s32.totalorder %s3127, 0
  %p3129 = pneg %p3128
  %3131 = shalt.err (%p3129)
  %s3132 = scalar_lea.sflag [#allocation4], 10
  %3133 = vsyncmov %s3132
  %s3134 = vpop.sfrf %3133
  %p3135 = scmp.eq.s32.totalorder %s3134, 0
  %p3136 = pneg %p3135
  %3138 = shalt.err (%p3136)
  %s3139 = scalar_lea.sflag [#allocation4], 11
  %3140 = vsyncmov %s3139
  %s3141 = vpop.sfrf %3140
  %p3142 = scmp.eq.s32.totalorder %s3141, 0
  %p3143 = pneg %p3142
  %3145 = shalt.err (%p3143)
  %s3146 = scalar_lea.sflag [#allocation4], 12
  %3147 = vsyncmov %s3146
  %s3148 = vpop.sfrf %3147
  %p3149 = scmp.eq.s32.totalorder %s3148, 0
  %p3150 = pneg %p3149
  %3152 = shalt.err (%p3150)
  %s3153 = scalar_lea.sflag [#allocation4], 13
  %3154 = vsyncmov %s3153
  %s3155 = vpop.sfrf %3154
  %p3156 = scmp.eq.s32.totalorder %s3155, 0
  %p3157 = pneg %p3156
  %3159 = shalt.err (%p3157)
  %s3160 = scalar_lea.sflag [#allocation4], 14
  %3161 = vsyncmov %s3160
  %s3162 = vpop.sfrf %3161
  %p3163 = scmp.eq.s32.totalorder %s3162, 0
  %p3164 = pneg %p3163
  %3166 = shalt.err (%p3164)
  %s3167 = scalar_lea.sflag [#allocation4], 15
  %3168 = vsyncmov %s3167
  %s3169 = vpop.sfrf %3168
  %p3170 = scmp.eq.s32.totalorder %s3169, 0
  %p3171 = pneg %p3170
  %3173 = shalt.err (%p3171)

</llo_original>
